<compile_context>
chip_gen: v7x
topology: tpu7x:2x2x1
jax: 0.10.0
libtpu: 0.0.40
codegen_flags: <defaults>
</compile_context>

<pallas_src>
import functools

import jax
import jax.numpy as jnp
from jax import lax
from jax.experimental import pallas as pl
from jax.experimental.pallas import tpu as pltpu


def _round_up(x, m):
    return ((x + m - 1) // m) * m


def _tpu_flavor():
    """Generation-aware knobs: bf16 EUP availability, tile target, VMEM limit."""
    kind = ""
    try:
        kind = jax.devices()[0].device_kind.lower()
    except Exception:
        pass
    vmem_cap = None
    try:
        vmem_cap = int(pltpu.get_tpu_info().vmem_capacity_bytes)
    except Exception:
        pass
    # bf16 VPU/EUP on v6e / v7x class chips; stay f32 on v5e and older.
    bf16_eup = ("v6" in kind) or ("v7" in kind) or ("7x" in kind)
    if vmem_cap is None:
        tile_target, vmem_limit = 256, 64 * 1024 * 1024
    elif vmem_cap <= 64 * 1024 * 1024:          # v7x-class: 64 MiB per TC
        tile_target = 128
        vmem_limit = max(vmem_cap - 16 * 1024 * 1024, 32 * 1024 * 1024)
    else:                                        # v5e / v6e: 128 MiB
        tile_target, vmem_limit = 512, 100 * 1024 * 1024
    return bf16_eup, tile_target, vmem_limit


def _sa_layer(x_s, xq_s, xv_s, acc_s, cs_s,
              wq_ref, wv_ref, bv_ref, wt_ref, sh_ref,
              *, tq, n_real, ones_col, bf16_exp):
    """One offset-attention block (SA_Layer), query-block tiled, in-place on x_s."""
    n = x_s.shape[0]
    nblk = n // tq
    mask = n_real < n

    x_bf = x_s[...].astype(jnp.bfloat16)
    # q_conv and k_conv share a tied weight in the PyTorch module -> x_k == x_q.
    xq_s[...] = lax.dot_general(
        x_bf, wq_ref[...], (((1,), (0,)), ((), ())),
        preferred_element_type=jnp.float32).astype(jnp.bfloat16)
    xv = lax.dot_general(
        x_bf, wv_ref[...], (((1,), (0,)), ((), ())),
        preferred_element_type=jnp.float32) + bv_ref[...]
    if ones_col is not None:
        # Ones in a spare zero-padded channel: the acc matmul then also
        # produces the per-key column sum for free (no 1-wide matmul).
        ccol = lax.broadcasted_iota(jnp.int32, xv.shape, 1)
        xv = jnp.where(ccol == ones_col, 1.0, xv)
    xv_s[...] = xv.astype(jnp.bfloat16)
    acc_s[...] = jnp.zeros_like(acc_s)
    if ones_col is None:
        cs_s[...] = jnp.zeros_like(cs_s)

    @pl.loop(0, nblk)
    def _(i):
        q0 = pl.multiple_of(i * tq, tq)
        xq_blk = xq_s[pl.ds(q0, tq), :]                        # [Tq, Cq] bf16
        energy = lax.dot_general(                              # q @ k^T
            xq_blk, xq_s[...], (((1,), (1,)), ((), ())),
            preferred_element_type=jnp.float32)                # [Tq, N] f32
        if mask:                                               # padded keys out
            kcol = lax.broadcasted_iota(jnp.int32, energy.shape, 1)
            energy = jnp.where(kcol < n_real, energy, -1e30)
        e = energy - jnp.max(energy, axis=-1, keepdims=True)
        if bf16_exp:                                           # bf16 EUP (v6e/v7x)
            p = jnp.exp(e.astype(jnp.bfloat16))                # [Tq, N] bf16
            row_sum = jnp.sum(p.astype(jnp.float32), axis=-1, keepdims=True)
        else:                                                  # f32 EUP (v5e)
            p_f = jnp.exp(e)
            row_sum = jnp.sum(p_f, axis=-1, keepdims=True)
            p = p_f.astype(jnp.bfloat16)
        inv_row = 1.0 / row_sum                                # [Tq, 1] exact
        if mask:                                               # padded queries out
            qrow = lax.broadcasted_iota(jnp.int32, inv_row.shape, 0) + q0
            inv_row = jnp.where(qrow < n_real, inv_row, 0.0)
        # Row-softmax normalization applied to the C-wide value block instead
        # of the N-wide probability block (same math, ~N/C fewer VPU ops).
        xv_blk = xv_s[pl.ds(q0, tq), :]                        # [Tq, C] bf16
        xv_scaled = (xv_blk * inv_row).astype(jnp.bfloat16)    # [Tq, C]
        # acc[key, c] += sum_q p[q, key] * inv_row[q] * xv[q, c]
        acc_s[...] += lax.dot_general(
            p, xv_scaled, (((0,), (0,)), ((), ())),
            preferred_element_type=jnp.float32)                # [N, C]
        if ones_col is None:                                   # no spare channel
            cs_s[...] += lax.dot_general(
                p, inv_row.astype(jnp.bfloat16), (((0,), (0,)), ((), ())),
                preferred_element_type=jnp.float32)            # [N, 1]

    acc = acc_s[...]
    colsum = acc[:, ones_col:ones_col + 1] if ones_col is not None else cs_s[...]
    x_r = acc * (1.0 / (1e-9 + colsum))                        # per-key normalization
    x_cur = x_s[...]
    # trans_conv + BN(eval, folded) + ReLU, then residual add.
    t = lax.dot_general(
        (x_cur - x_r).astype(jnp.bfloat16), wt_ref[...],
        (((1,), (0,)), ((), ())),
        preferred_element_type=jnp.float32) + sh_ref[...]
    x_s[...] = x_cur + jnp.maximum(t, 0.0)


def _fp_transformer_kernel(
    xyz1_ref, xyz2_ref, p1_ref, p2_ref,
    w1_ref, w2_ref, bnsh_ref,
    wq1_ref, wv1_ref, bv1_ref, wt1_ref, sh1_ref,
    wq2_ref, wv2_ref, bv2_ref, wt2_ref, sh2_ref,
    out_ref,
    x_s, xq_s, xv_s, acc_s, *maybe_cs,
    tn, tq, n_real, cout, ones_col, bf16_exp,
):
    cs_s = maybe_cs[0] if maybe_cs else None
    n = x_s.shape[0]
    s = p2_ref.shape[1]
    nblk = n // tn

    # ---- Phase A: 3-NN inverse-distance interpolation + 1x1 conv + BN + ReLU,
    #      tiled over N so only [Tn, S] temporaries are live at once. ----
    ones8 = jnp.ones((8, 1), jnp.float32)
    xyz2_all = xyz2_ref[...]                                   # [8, S]
    x2sq = jnp.sum(xyz2_all * xyz2_all, axis=0, keepdims=True)  # [1, S]
    p2_bf = p2_ref[...].astype(jnp.bfloat16)                   # [D2, S]

    @pl.loop(0, nblk)
    def _(i):
        r0 = pl.multiple_of(i * tn, tn)
        if nblk == 1:                                          # static branch
            xyz1_blk = xyz1_ref[...]                           # [8, Tn]
            p1_blk = p1_ref[...]                               # [D1, Tn]
        else:                                                  # lane-aligned slices
            xyz1_blk = xyz1_ref[:, pl.ds(r0, tn)]
            p1_blk = p1_ref[:, pl.ds(r0, tn)]
        # Same squared-distance expansion as the PyTorch reference
        # (|x1|^2 + |x2|^2 - 2 x1.x2); channels-first operands with dim-0
        # contraction -> no transposes or relayouts.
        cross = lax.dot_general(xyz1_blk, xyz2_all,
                                (((0,), (0,)), ((), ())),
                                preferred_element_type=jnp.float32)   # [Tn, S]
        x1sq = lax.dot_general(xyz1_blk * xyz1_blk, ones8,
                               (((0,), (0,)), ((), ())),
                               preferred_element_type=jnp.float32)    # [Tn, 1]
        d = x1sq + x2sq - 2.0 * cross
        # 3 nearest neighbours: fuse the gather into one normalized weighted
        # one-hot matrix and a single bf16 matmul against points2.
        col = lax.broadcasted_iota(jnp.int32, (tn, s), 1)
        remaining = d
        whot = jnp.zeros((tn, s), jnp.float32)
        wsum = jnp.zeros((tn, 1), jnp.float32)
        for _ in range(3):
            dmin = jnp.min(remaining, axis=-1, keepdims=True)
            idx = jnp.min(jnp.where(remaining <= dmin, col, s), axis=-1,
                          keepdims=True)                        # first argmin
            onehot = col == idx
            w = 1.0 / (dmin + 1e-8)                             # exact, as in torch
            whot = whot + jnp.where(onehot, w, 0.0)
            wsum = wsum + w
            remaining = jnp.where(onehot, jnp.inf, remaining)
        whot_n = (whot * (1.0 / wsum)).astype(jnp.bfloat16)     # weights in [0, 1]
        interp = lax.dot_general(                               # fused gather
            whot_n, p2_bf, (((1,), (1,)), ((), ())),
            preferred_element_type=jnp.float32)                 # [Tn, D2]
        # conv over concat([points1, interp]) as two matmuls (no concat), with
        # the BatchNorm scale folded into the weights.
        x_blk = (lax.dot_general(p1_blk.astype(jnp.bfloat16), w1_ref[...],
                                 (((0,), (0,)), ((), ())),
                                 preferred_element_type=jnp.float32)
                 + lax.dot_general(interp.astype(jnp.bfloat16), w2_ref[...],
                                   (((1,), (0,)), ((), ())),
                                   preferred_element_type=jnp.float32)
                 + bnsh_ref[...])
        x_s[pl.ds(r0, tn), :] = jnp.maximum(x_blk, 0.0)

    # ---- Phase B/C: two offset-attention transformer blocks. ----
    # TODO(synk): on v7x the two TensorCores could split this query-block loop
    # (acc/colsum are additive); only batch-level parallelism is exposed here.
    sa = functools.partial(_sa_layer, x_s, xq_s, xv_s, acc_s, cs_s,
                           tq=tq, n_real=n_real, ones_col=ones_col,
                           bf16_exp=bf16_exp)
    sa(wq1_ref, wv1_ref, bv1_ref, wt1_ref, sh1_ref)
    sa(wq2_ref, wv2_ref, bv2_ref, wt2_ref, sh2_ref)

    # Channels-first output straight from VMEM (drops the wrapper-side HBM
    # transpose); the XLU transpose is cheap and the store is lane-dense in N.
    x_t = jnp.transpose(x_s[...], (1, 0))                      # [Cpad, N]
    out_ref[...] = x_t[:cout, :]


# ------------------------- parameters & wrapper ------------------------------

def _folded_bn(keys, c):
    kg, kb, km, kv = keys
    gamma = 1.0 + 0.1 * jax.random.normal(kg, (c,), jnp.float32)
    beta = 0.1 * jax.random.normal(kb, (c,), jnp.float32)
    rmean = 0.1 * jax.random.normal(km, (c,), jnp.float32)
    rvar = 1.0 + 0.5 * jax.random.uniform(kv, (c,), jnp.float32)
    scale = gamma / jnp.sqrt(rvar + 1e-5)
    shift = beta - rmean * scale
    return scale.reshape(1, c), shift.reshape(1, c)


def _sa_params(key, c):
    r = 4
    ks = jax.random.split(key, 9)
    wq_t = jax.random.normal(ks[0], (c, c // r), jnp.float32) / jnp.sqrt(c)  # tied q/k
    wv_t = jax.random.normal(ks[1], (c, c), jnp.float32) / jnp.sqrt(c)
    bv = (0.1 * jax.random.normal(ks[2], (c,), jnp.float32)).reshape(1, c)
    wt_t = jax.random.normal(ks[3], (c, c), jnp.float32) / jnp.sqrt(c)
    bt = (0.1 * jax.random.normal(ks[4], (c,), jnp.float32)).reshape(1, c)
    scale, shift = _folded_bn(ks[5:9], c)
    return (wq_t, wv_t, bv, wt_t, bt, scale, shift)


def init_params(key, in_channel, out_channel):
    ks = jax.random.split(key, 7)
    conv_wt = (jax.random.normal(ks[0], (in_channel, out_channel), jnp.float32)
               / jnp.sqrt(in_channel))                                       # x @ W
    bn_scale, bn_shift = _folded_bn(ks[1:5], out_channel)
    sa1 = _sa_params(ks[5], out_channel)
    sa2 = _sa_params(ks[6], out_channel)
    return {"conv_wt": conv_wt, "bn_scale": bn_scale, "bn_shift": bn_shift,
            "sa1": sa1, "sa2": sa2}


def _prepare_weights(params, d1):
    """Fold biases/BN affines into weights, zero-pad the channel dim to a
    lane-dense multiple of 128 (padded channels stay exactly zero end-to-end),
    cast MXU operands to bf16 and split the conv weight (no in-kernel concat)."""
    conv_wt = params["conv_wt"]
    cout = conv_wt.shape[1]
    cpad = _round_up(cout, 128)
    pc = cpad - cout

    def pad_cols(a):
        return jnp.pad(a, [(0, 0)] * (a.ndim - 1) + [(0, pc)])

    def pad_rows(a):
        return jnp.pad(a, [(0, pc), (0, 0)])

    conv_eff = conv_wt * params["bn_scale"]                   # fold BN scale
    w1 = pad_cols(conv_eff[:d1]).astype(jnp.bfloat16)         # [D1, Cpad]
    w2 = pad_cols(conv_eff[d1:]).astype(jnp.bfloat16)         # [D2, Cpad]
    bnsh = pad_cols(params["bn_shift"]).astype(jnp.float32)   # [1, Cpad]

    def prep_sa(sa):
        wq_t, wv_t, bv, wt_t, bt, scale, shift = sa
        wq = pad_rows(wq_t).astype(jnp.bfloat16)                        # [Cpad, Cq]
        wv = pad_cols(pad_rows(wv_t)).astype(jnp.bfloat16)              # [Cpad, Cpad]
        bvp = pad_cols(bv).astype(jnp.float32)                          # [1, Cpad]
        wt_eff = pad_cols(pad_rows(wt_t * scale)).astype(jnp.bfloat16)  # fold BN scale
        sh_eff = pad_cols(bt * scale + shift).astype(jnp.float32)       # fold bias+shift
        return (wq, wv, bvp, wt_eff, sh_eff)

    weights = (w1, w2, bnsh) + prep_sa(params["sa1"]) + prep_sa(params["sa2"])
    return weights, cout, cpad


def pointnet_fp_with_transformer(xyz1, xyz2, points1, points2, params):
    """PyTorch layouts: xyz1 [B,3,N], xyz2 [B,3,S], points1 [B,D1,N],
    points2 [B,D2,S].  Returns [B, out_channel, N]."""
    B, c3, N = xyz1.shape
    S = xyz2.shape[-1]
    assert c3 == 3
    assert S >= 3, "kernel implements the 3-NN interpolation branch (S >= 3)"

    bf16_exp, tile_target, vmem_limit = _tpu_flavor()
    tile = tile_target if N >= tile_target else _round_up(max(N, 8), 8)
    n_pad = _round_up(N, tile)

    # Channels-first, coords sublane-padded 3->8, N zero-padded (padded points
    # are masked out of the attention inside the kernel).
    xyz1_cf = jnp.pad(xyz1.astype(jnp.float32),
                      ((0, 0), (0, 5), (0, n_pad - N)))           # [B, 8, Npad]
    xyz2_cf = jnp.pad(xyz2.astype(jnp.float32),
                      ((0, 0), (0, 5), (0, 0)))                   # [B, 8, S]
    p1_cf = points1.astype(jnp.float32)                           # [B, D1, Npad]
    if n_pad != N:
        p1_cf = jnp.pad(p1_cf, ((0, 0), (0, 0), (0, n_pad - N)))
    p2_cf = points2.astype(jnp.float32)                           # [B, D2, S]
    D1, D2 = p1_cf.shape[1], p2_cf.shape[1]

    weights, cout, cpad = _prepare_weights(params, D1)
    cq = params["sa1"][0].shape[1]
    ones_col = cout if cout < cpad else None      # spare padded channel for colsum

    kernel = functools.partial(
        _fp_transformer_kernel, tn=tile, tq=tile, n_real=N, cout=cout,
        ones_col=ones_col, bf16_exp=bf16_exp)

    def per_batch(shape):
        return pl.BlockSpec((None,) + shape, lambda b: (b,) + (0,) * len(shape))

    def full2d(a):
        return pl.BlockSpec(a.shape, lambda b: (0, 0))

    in_specs = [per_batch((8, n_pad)), per_batch((8, S)),
                per_batch((D1, n_pad)), per_batch((D2, S))]
    in_specs += [full2d(w) for w in weights]

    scratch = [pltpu.VMEM((n_pad, cpad), jnp.float32),    # features x
               pltpu.VMEM((n_pad, cq), jnp.bfloat16),     # x_q (== x_k)
               pltpu.VMEM((n_pad, cpad), jnp.bfloat16),   # x_v (+ ones column)
               pltpu.VMEM((n_pad, cpad), jnp.float32)]    # attention accumulator
    if ones_col is None:
        scratch.append(pltpu.VMEM((n_pad, 1), jnp.float32))   # separate colsum

    out = pl.pallas_call(
        kernel,
        out_shape=jax.ShapeDtypeStruct((B, cout, n_pad), jnp.float32),
        grid=(B,),
        in_specs=in_specs,
        out_specs=per_batch((cout, n_pad)),
        scratch_shapes=scratch,
        compiler_params=pltpu.CompilerParams(
            dimension_semantics=("parallel",),
            vmem_limit_bytes=vmem_limit),
    )(xyz1_cf, xyz2_cf, p1_cf, p2_cf, *weights)

    return out[:, :, :N] if n_pad != N else out


if __name__ == "__main__":
    key = jax.random.PRNGKey(0)
    B, N, S = 2, 16, 8
    D1, D2 = 8, 8
    in_channel = D1 + D2      # cat([points1, interpolated]) channel count
    out_channel = 32          # divisible by R=4

    k1, k2, k3, k4, kp = jax.random.split(key, 5)
    xyz1 = jax.random.normal(k1, (B, 3, N), jnp.float32)
    xyz2 = jax.random.normal(k2, (B, 3, S), jnp.float32)
    points1 = jax.random.normal(k3, (B, D1, N), jnp.float32)
    points2 = jax.random.normal(k4, (B, D2, S), jnp.float32)

    params = init_params(kp, in_channel, out_channel)

    out = pointnet_fp_with_transformer(xyz1, xyz2, points1, points2, params)
    out = jax.block_until_ready(out)
    assert out.shape == (B, out_channel, N)
    assert bool(jnp.all(jnp.isfinite(out)))
    print("KERNEL_OK")
</pallas_src>

<mosaic_0001>
module attributes {stable_mosaic.version = 11 : i64} {
  func.func @_fp_transformer_kernel(%arg0: i32, %arg1: memref<1x8x16xf32, #tpu.memory_space<vmem>>, %arg2: memref<1x8x8xf32, #tpu.memory_space<vmem>>, %arg3: memref<1x8x16xf32, #tpu.memory_space<vmem>>, %arg4: memref<1x8x8xf32, #tpu.memory_space<vmem>>, %arg5: memref<8x128xbf16, #tpu.memory_space<vmem>>, %arg6: memref<8x128xbf16, #tpu.memory_space<vmem>>, %arg7: memref<1x128xf32, #tpu.memory_space<vmem>>, %arg8: memref<128x8xbf16, #tpu.memory_space<vmem>>, %arg9: memref<128x128xbf16, #tpu.memory_space<vmem>>, %arg10: memref<1x128xf32, #tpu.memory_space<vmem>>, %arg11: memref<128x128xbf16, #tpu.memory_space<vmem>>, %arg12: memref<1x128xf32, #tpu.memory_space<vmem>>, %arg13: memref<128x8xbf16, #tpu.memory_space<vmem>>, %arg14: memref<128x128xbf16, #tpu.memory_space<vmem>>, %arg15: memref<1x128xf32, #tpu.memory_space<vmem>>, %arg16: memref<128x128xbf16, #tpu.memory_space<vmem>>, %arg17: memref<1x128xf32, #tpu.memory_space<vmem>>, %arg18: memref<1x32x16xf32, #tpu.memory_space<vmem>>, %arg19: memref<16x128xf32, #tpu.memory_space<vmem>>, %arg20: memref<16x8xbf16, #tpu.memory_space<vmem>>, %arg21: memref<16x128xbf16, #tpu.memory_space<vmem>>, %arg22: memref<16x128xf32, #tpu.memory_space<vmem>>) attributes {dimension_semantics = [#tpu.dimension_semantics<parallel>], iteration_bounds = array<i64: 2>, scalar_prefetch = 0 : i64, scratch_operands = 4 : i64, tpu.core_type = #tpu.core_type<tc>, window_params = [{transform_indices = @transform_0, window_bounds = array<i64: 1, 8, 16>}, {transform_indices = @transform_1, window_bounds = array<i64: 1, 8, 8>}, {transform_indices = @transform_2, window_bounds = array<i64: 1, 8, 16>}, {transform_indices = @transform_3, window_bounds = array<i64: 1, 8, 8>}, {pipeline_mode = #tpu.pipeline_mode<synchronous>, transform_indices = @transform_4, window_bounds = array<i64: 8, 128>}, {pipeline_mode = #tpu.pipeline_mode<synchronous>, transform_indices = @transform_5, window_bounds = array<i64: 8, 128>}, {pipeline_mode = #tpu.pipeline_mode<synchronous>, transform_indices = @transform_6, window_bounds = array<i64: 1, 128>}, {pipeline_mode = #tpu.pipeline_mode<synchronous>, transform_indices = @transform_7, window_bounds = array<i64: 128, 8>}, {pipeline_mode = #tpu.pipeline_mode<synchronous>, transform_indices = @transform_8, window_bounds = array<i64: 128, 128>}, {pipeline_mode = #tpu.pipeline_mode<synchronous>, transform_indices = @transform_9, window_bounds = array<i64: 1, 128>}, {pipeline_mode = #tpu.pipeline_mode<synchronous>, transform_indices = @transform_10, window_bounds = array<i64: 128, 128>}, {pipeline_mode = #tpu.pipeline_mode<synchronous>, transform_indices = @transform_11, window_bounds = array<i64: 1, 128>}, {pipeline_mode = #tpu.pipeline_mode<synchronous>, transform_indices = @transform_12, window_bounds = array<i64: 128, 8>}, {pipeline_mode = #tpu.pipeline_mode<synchronous>, transform_indices = @transform_13, window_bounds = array<i64: 128, 128>}, {pipeline_mode = #tpu.pipeline_mode<synchronous>, transform_indices = @transform_14, window_bounds = array<i64: 1, 128>}, {pipeline_mode = #tpu.pipeline_mode<synchronous>, transform_indices = @transform_15, window_bounds = array<i64: 128, 128>}, {pipeline_mode = #tpu.pipeline_mode<synchronous>, transform_indices = @transform_16, window_bounds = array<i64: 1, 128>}, {transform_indices = @transform_17, window_bounds = array<i64: 1, 32, 16>}]} {
    %cst = arith.constant 1.000000e+00 : f32
    %0 = vector.broadcast %cst : f32 to vector<8x1xf32>
    %c0 = arith.constant 0 : index
    %c0_0 = arith.constant 0 : index
    %c0_1 = arith.constant 0 : index
    %1 = vector.load %arg2[%c0, %c0_0, %c0_1] : memref<1x8x8xf32, #tpu.memory_space<vmem>>, vector<1x8x8xf32>
    %2 = vector.shape_cast %1 : vector<1x8x8xf32> to vector<8x8xf32>
    %3 = arith.mulf %2, %2 : vector<8x8xf32>
    %cst_2 = arith.constant dense<0.000000e+00> : vector<8xf32>
    %4 = vector.multi_reduction <add>, %3, %cst_2 [0] : vector<8x8xf32> to vector<8xf32>
    %5 = vector.shape_cast %4 : vector<8xf32> to vector<1x8xf32>
    %c0_3 = arith.constant 0 : index
    %c0_4 = arith.constant 0 : index
    %c0_5 = arith.constant 0 : index
    %6 = vector.load %arg4[%c0_3, %c0_4, %c0_5] : memref<1x8x8xf32, #tpu.memory_space<vmem>>, vector<1x8x8xf32>
    %7 = vector.shape_cast %6 : vector<1x8x8xf32> to vector<8x8xf32>
    %8 = arith.truncf %7 : vector<8x8xf32> to vector<8x8xbf16>
    %c0_i32 = arith.constant 0 : i32
    %c1_i32 = arith.constant 1 : i32
    %9 = arith.muli %c0_i32, %c1_i32 : i32
    %c0_i32_6 = arith.constant 0 : i32
    %10 = arith.addi %c0_i32_6, %9 : i32
    %c16_i32 = arith.constant 16 : i32
    %11 = arith.muli %10, %c16_i32 : i32
    %12 = tpu.assume_multiple %11, 16 : i32
    %c0_7 = arith.constant 0 : index
    %c0_8 = arith.constant 0 : index
    %c0_9 = arith.constant 0 : index
    %13 = vector.load %arg1[%c0_7, %c0_8, %c0_9] : memref<1x8x16xf32, #tpu.memory_space<vmem>>, vector<1x8x16xf32>
    %14 = vector.shape_cast %13 : vector<1x8x16xf32> to vector<8x16xf32>
    %c0_10 = arith.constant 0 : index
    %c0_11 = arith.constant 0 : index
    %c0_12 = arith.constant 0 : index
    %15 = vector.load %arg3[%c0_10, %c0_11, %c0_12] : memref<1x8x16xf32, #tpu.memory_space<vmem>>, vector<1x8x16xf32>
    %16 = vector.shape_cast %15 : vector<1x8x16xf32> to vector<8x16xf32>
    %cst_13 = arith.constant dense<0.000000e+00> : vector<16x8xf32>
    %17 = tpu.matmul %14, %2, %cst_13 {dimension_numbers = #tpu.dot_dimension_numbers<[0], [0], [1], [1], [0, 1, 1, 1], [], []>} : vector<8x16xf32>, vector<8x8xf32>, vector<16x8xf32> -> vector<16x8xf32>
    %18 = arith.mulf %14, %14 : vector<8x16xf32>
    %cst_14 = arith.constant dense<0.000000e+00> : vector<16x1xf32>
    %19 = tpu.matmul %18, %0, %cst_14 {dimension_numbers = #tpu.dot_dimension_numbers<[0], [0], [1], [1], [0, 1, 1, 1], [], []>} : vector<8x16xf32>, vector<8x1xf32>, vector<16x1xf32> -> vector<16x1xf32>
    %20 = vector.broadcast %19 : vector<16x1xf32> to vector<16x8xf32>
    %21 = vector.broadcast %5 : vector<1x8xf32> to vector<16x8xf32>
    %22 = arith.addf %20, %21 : vector<16x8xf32>
    %cst_15 = arith.constant 2.000000e+00 : f32
    %23 = vector.broadcast %cst_15 : f32 to vector<16x8xf32>
    %24 = arith.mulf %23, %17 : vector<16x8xf32>
    %25 = arith.subf %22, %24 : vector<16x8xf32>
    %26 = tpu.iota {dimensions = array<i32: 1>} : vector<16x8xi32>
    %cst_16 = arith.constant 0.000000e+00 : f32
    %27 = vector.broadcast %cst_16 : f32 to vector<16x8xf32>
    %cst_17 = arith.constant 0.000000e+00 : f32
    %28 = vector.broadcast %cst_17 : f32 to vector<16x1xf32>
    %cst_18 = arith.constant dense<0x7F800000> : vector<16xf32>
    %29 = vector.multi_reduction <minimumf>, %25, %cst_18 [1] : vector<16x8xf32> to vector<16xf32>
    %30 = vector.shape_cast %29 : vector<16xf32> to vector<16x1xf32>
    %31 = vector.broadcast %30 : vector<16x1xf32> to vector<16x8xf32>
    %32 = arith.cmpf ole, %25, %31 : vector<16x8xf32>
    %c8_i32 = arith.constant 8 : i32
    %33 = vector.broadcast %c8_i32 : i32 to vector<16x8xi32>
    %34 = arith.select %32, %26, %33 : vector<16x8xi1>, vector<16x8xi32>
    %cst_19 = arith.constant dense<2147483647> : vector<16xi32>
    %35 = vector.multi_reduction <minsi>, %34, %cst_19 [1] : vector<16x8xi32> to vector<16xi32>
    %36 = vector.shape_cast %35 : vector<16xi32> to vector<16x1xi32>
    %37 = vector.broadcast %36 : vector<16x1xi32> to vector<16x8xi32>
    %38 = arith.cmpi eq, %26, %37 : vector<16x8xi32>
    %cst_20 = arith.constant 9.99999993E-9 : f32
    %39 = vector.broadcast %cst_20 : f32 to vector<16x1xf32>
    %40 = arith.addf %30, %39 : vector<16x1xf32>
    %cst_21 = arith.constant 1.000000e+00 : f32
    %41 = vector.broadcast %cst_21 : f32 to vector<16x1xf32>
    %42 = arith.divf %41, %40 : vector<16x1xf32>
    %cst_22 = arith.constant 0.000000e+00 : f32
    %43 = vector.shape_cast %42 : vector<16x1xf32> to vector<16x1xf32>
    %44 = vector.broadcast %43 : vector<16x1xf32> to vector<16x8xf32>
    %45 = vector.broadcast %cst_22 : f32 to vector<16x8xf32>
    %46 = arith.select %38, %44, %45 : vector<16x8xi1>, vector<16x8xf32>
    %47 = arith.addf %27, %46 : vector<16x8xf32>
    %48 = arith.addf %28, %42 : vector<16x1xf32>
    %cst_23 = arith.constant 0x7F800000 : f32
    %49 = vector.broadcast %cst_23 : f32 to vector<16x8xf32>
    %50 = arith.select %38, %49, %25 : vector<16x8xi1>, vector<16x8xf32>
    %cst_24 = arith.constant dense<0x7F800000> : vector<16xf32>
    %51 = vector.multi_reduction <minimumf>, %50, %cst_24 [1] : vector<16x8xf32> to vector<16xf32>
    %52 = vector.shape_cast %51 : vector<16xf32> to vector<16x1xf32>
    %53 = vector.broadcast %52 : vector<16x1xf32> to vector<16x8xf32>
    %54 = arith.cmpf ole, %50, %53 : vector<16x8xf32>
    %c8_i32_25 = arith.constant 8 : i32
    %55 = vector.broadcast %c8_i32_25 : i32 to vector<16x8xi32>
    %56 = arith.select %54, %26, %55 : vector<16x8xi1>, vector<16x8xi32>
    %cst_26 = arith.constant dense<2147483647> : vector<16xi32>
    %57 = vector.multi_reduction <minsi>, %56, %cst_26 [1] : vector<16x8xi32> to vector<16xi32>
    %58 = vector.shape_cast %57 : vector<16xi32> to vector<16x1xi32>
    %59 = vector.broadcast %58 : vector<16x1xi32> to vector<16x8xi32>
    %60 = arith.cmpi eq, %26, %59 : vector<16x8xi32>
    %cst_27 = arith.constant 9.99999993E-9 : f32
    %61 = vector.broadcast %cst_27 : f32 to vector<16x1xf32>
    %62 = arith.addf %52, %61 : vector<16x1xf32>
    %cst_28 = arith.constant 1.000000e+00 : f32
    %63 = vector.broadcast %cst_28 : f32 to vector<16x1xf32>
    %64 = arith.divf %63, %62 : vector<16x1xf32>
    %cst_29 = arith.constant 0.000000e+00 : f32
    %65 = vector.shape_cast %64 : vector<16x1xf32> to vector<16x1xf32>
    %66 = vector.broadcast %65 : vector<16x1xf32> to vector<16x8xf32>
    %67 = vector.broadcast %cst_29 : f32 to vector<16x8xf32>
    %68 = arith.select %60, %66, %67 : vector<16x8xi1>, vector<16x8xf32>
    %69 = arith.addf %47, %68 : vector<16x8xf32>
    %70 = arith.addf %48, %64 : vector<16x1xf32>
    %cst_30 = arith.constant 0x7F800000 : f32
    %71 = vector.broadcast %cst_30 : f32 to vector<16x8xf32>
    %72 = arith.select %60, %71, %50 : vector<16x8xi1>, vector<16x8xf32>
    %cst_31 = arith.constant dense<0x7F800000> : vector<16xf32>
    %73 = vector.multi_reduction <minimumf>, %72, %cst_31 [1] : vector<16x8xf32> to vector<16xf32>
    %74 = vector.shape_cast %73 : vector<16xf32> to vector<16x1xf32>
    %75 = vector.broadcast %74 : vector<16x1xf32> to vector<16x8xf32>
    %76 = arith.cmpf ole, %72, %75 : vector<16x8xf32>
    %c8_i32_32 = arith.constant 8 : i32
    %77 = vector.broadcast %c8_i32_32 : i32 to vector<16x8xi32>
    %78 = arith.select %76, %26, %77 : vector<16x8xi1>, vector<16x8xi32>
    %cst_33 = arith.constant dense<2147483647> : vector<16xi32>
    %79 = vector.multi_reduction <minsi>, %78, %cst_33 [1] : vector<16x8xi32> to vector<16xi32>
    %80 = vector.shape_cast %79 : vector<16xi32> to vector<16x1xi32>
    %81 = vector.broadcast %80 : vector<16x1xi32> to vector<16x8xi32>
    %82 = arith.cmpi eq, %26, %81 : vector<16x8xi32>
    %cst_34 = arith.constant 9.99999993E-9 : f32
    %83 = vector.broadcast %cst_34 : f32 to vector<16x1xf32>
    %84 = arith.addf %74, %83 : vector<16x1xf32>
    %cst_35 = arith.constant 1.000000e+00 : f32
    %85 = vector.broadcast %cst_35 : f32 to vector<16x1xf32>
    %86 = arith.divf %85, %84 : vector<16x1xf32>
    %cst_36 = arith.constant 0.000000e+00 : f32
    %87 = vector.shape_cast %86 : vector<16x1xf32> to vector<16x1xf32>
    %88 = vector.broadcast %87 : vector<16x1xf32> to vector<16x8xf32>
    %89 = vector.broadcast %cst_36 : f32 to vector<16x8xf32>
    %90 = arith.select %82, %88, %89 : vector<16x8xi1>, vector<16x8xf32>
    %91 = arith.addf %69, %90 : vector<16x8xf32>
    %92 = arith.addf %70, %86 : vector<16x1xf32>
    %cst_37 = arith.constant 1.000000e+00 : f32
    %93 = vector.broadcast %cst_37 : f32 to vector<16x1xf32>
    %94 = arith.divf %93, %92 : vector<16x1xf32>
    %95 = vector.broadcast %94 : vector<16x1xf32> to vector<16x8xf32>
    %96 = arith.mulf %91, %95 : vector<16x8xf32>
    %97 = arith.truncf %96 : vector<16x8xf32> to vector<16x8xbf16>
    %cst_38 = arith.constant dense<0.000000e+00> : vector<16x8xf32>
    %98 = tpu.matmul %97, %8, %cst_38 {dimension_numbers = #tpu.dot_dimension_numbers<[1], [1], [0], [0], [0, 0, 1, 0], [], []>} : vector<16x8xbf16>, vector<8x8xbf16>, vector<16x8xf32> -> vector<16x8xf32>
    %99 = arith.truncf %16 : vector<8x16xf32> to vector<8x16xbf16>
    %c0_39 = arith.constant 0 : index
    %c0_40 = arith.constant 0 : index
    %100 = vector.load %arg5[%c0_39, %c0_40] : memref<8x128xbf16, #tpu.memory_space<vmem>>, vector<8x128xbf16>
    %cst_41 = arith.constant dense<0.000000e+00> : vector<16x128xf32>
    %101 = tpu.matmul %99, %100, %cst_41 {dimension_numbers = #tpu.dot_dimension_numbers<[0], [0], [1], [1], [0, 1, 1, 1], [], []>} : vector<8x16xbf16>, vector<8x128xbf16>, vector<16x128xf32> -> vector<16x128xf32>
    %102 = arith.truncf %98 : vector<16x8xf32> to vector<16x8xbf16>
    %c0_42 = arith.constant 0 : index
    %c0_43 = arith.constant 0 : index
    %103 = vector.load %arg6[%c0_42, %c0_43] : memref<8x128xbf16, #tpu.memory_space<vmem>>, vector<8x128xbf16>
    %cst_44 = arith.constant dense<0.000000e+00> : vector<16x128xf32>
    %104 = tpu.matmul %102, %103, %cst_44 {dimension_numbers = #tpu.dot_dimension_numbers<[1], [0], [0], [1], [0, 0, 1, 1], [], []>} : vector<16x8xbf16>, vector<8x128xbf16>, vector<16x128xf32> -> vector<16x128xf32>
    %105 = arith.addf %101, %104 : vector<16x128xf32>
    %c0_45 = arith.constant 0 : index
    %c0_46 = arith.constant 0 : index
    %106 = vector.load %arg7[%c0_45, %c0_46] : memref<1x128xf32, #tpu.memory_space<vmem>>, vector<1x128xf32>
    %107 = vector.broadcast %106 : vector<1x128xf32> to vector<16x128xf32>
    %108 = arith.addf %105, %107 : vector<16x128xf32>
    %cst_47 = arith.constant 0.000000e+00 : f32
    %109 = vector.broadcast %cst_47 : f32 to vector<16x128xf32>
    %110 = arith.maximumf %108, %109 : vector<16x128xf32>
    %111 = arith.index_cast %12 : i32 to index
    %c0_48 = arith.constant 0 : index
    %112 = vector.load %arg19[%111, %c0_48] : memref<16x128xf32, #tpu.memory_space<vmem>>, vector<16x128xf32>
    tpu.vector_store %arg19[%111, %c0_48], %110 {strides = array<i32>} : memref<16x128xf32, #tpu.memory_space<vmem>>, vector<16x128xf32>,
    %c1_i32_49 = arith.constant 1 : i32
    %c0_50 = arith.constant 0 : index
    %c0_51 = arith.constant 0 : index
    %113 = vector.load %arg19[%c0_50, %c0_51] : memref<16x128xf32, #tpu.memory_space<vmem>>, vector<16x128xf32>
    %114 = arith.truncf %113 : vector<16x128xf32> to vector<16x128xbf16>
    %c0_52 = arith.constant 0 : index
    %c0_53 = arith.constant 0 : index
    %115 = vector.load %arg8[%c0_52, %c0_53] : memref<128x8xbf16, #tpu.memory_space<vmem>>, vector<128x8xbf16>
    %cst_54 = arith.constant dense<0.000000e+00> : vector<16x8xf32>
    %116 = tpu.matmul %114, %115, %cst_54 {dimension_numbers = #tpu.dot_dimension_numbers<[1], [0], [0], [1], [0, 0, 1, 1], [], []>} : vector<16x128xbf16>, vector<128x8xbf16>, vector<16x8xf32> -> vector<16x8xf32>
    %117 = arith.truncf %116 : vector<16x8xf32> to vector<16x8xbf16>
    %c0_55 = arith.constant 0 : index
    %c0_56 = arith.constant 0 : index
    %118 = vector.load %arg20[%c0_55, %c0_56] : memref<16x8xbf16, #tpu.memory_space<vmem>>, vector<16x8xbf16>
    tpu.vector_store %arg20[%c0_55, %c0_56], %117 {strides = array<i32>} : memref<16x8xbf16, #tpu.memory_space<vmem>>, vector<16x8xbf16>,
    %c0_57 = arith.constant 0 : index
    %c0_58 = arith.constant 0 : index
    %119 = vector.load %arg9[%c0_57, %c0_58] : memref<128x128xbf16, #tpu.memory_space<vmem>>, vector<128x128xbf16>
    %cst_59 = arith.constant dense<0.000000e+00> : vector<16x128xf32>
    %120 = tpu.matmul %114, %119, %cst_59 {dimension_numbers = #tpu.dot_dimension_numbers<[1], [0], [0], [1], [0, 0, 1, 1], [], []>} : vector<16x128xbf16>, vector<128x128xbf16>, vector<16x128xf32> -> vector<16x128xf32>
    %c0_60 = arith.constant 0 : index
    %c0_61 = arith.constant 0 : index
    %121 = vector.load %arg10[%c0_60, %c0_61] : memref<1x128xf32, #tpu.memory_space<vmem>>, vector<1x128xf32>
    %122 = vector.broadcast %121 : vector<1x128xf32> to vector<16x128xf32>
    %123 = arith.addf %120, %122 : vector<16x128xf32>
    %124 = tpu.iota {dimensions = array<i32: 1>} : vector<16x128xi32>
    %c32_i32 = arith.constant 32 : i32
    %125 = vector.broadcast %c32_i32 : i32 to vector<16x128xi32>
    %126 = arith.cmpi eq, %124, %125 : vector<16x128xi32>
    %cst_62 = arith.constant 1.000000e+00 : f32
    %127 = vector.broadcast %cst_62 : f32 to vector<16x128xf32>
    %128 = arith.select %126, %127, %123 : vector<16x128xi1>, vector<16x128xf32>
    %129 = arith.truncf %128 : vector<16x128xf32> to vector<16x128xbf16>
    %c0_63 = arith.constant 0 : index
    %c0_64 = arith.constant 0 : index
    %130 = vector.load %arg21[%c0_63, %c0_64] : memref<16x128xbf16, #tpu.memory_space<vmem>>, vector<16x128xbf16>
    tpu.vector_store %arg21[%c0_63, %c0_64], %129 {strides = array<i32>} : memref<16x128xbf16, #tpu.memory_space<vmem>>, vector<16x128xbf16>,
    %cst_65 = arith.constant 0.000000e+00 : f32
    %131 = vector.broadcast %cst_65 : f32 to vector<16x128xf32>
    %c0_66 = arith.constant 0 : index
    %c0_67 = arith.constant 0 : index
    %132 = vector.load %arg22[%c0_66, %c0_67] : memref<16x128xf32, #tpu.memory_space<vmem>>, vector<16x128xf32>
    tpu.vector_store %arg22[%c0_66, %c0_67], %131 {strides = array<i32>} : memref<16x128xf32, #tpu.memory_space<vmem>>, vector<16x128xf32>,
    %c0_i32_68 = arith.constant 0 : i32
    %c1_i32_69 = arith.constant 1 : i32
    %133 = arith.muli %c0_i32_68, %c1_i32_69 : i32
    %c0_i32_70 = arith.constant 0 : i32
    %134 = arith.addi %c0_i32_70, %133 : i32
    %c16_i32_71 = arith.constant 16 : i32
    %135 = arith.muli %134, %c16_i32_71 : i32
    %136 = tpu.assume_multiple %135, 16 : i32
    %137 = arith.index_cast %136 : i32 to index
    %c0_72 = arith.constant 0 : index
    %138 = vector.load %arg20[%137, %c0_72] : memref<16x8xbf16, #tpu.memory_space<vmem>>, vector<16x8xbf16>
    %c0_73 = arith.constant 0 : index
    %c0_74 = arith.constant 0 : index
    %139 = vector.load %arg20[%c0_73, %c0_74] : memref<16x8xbf16, #tpu.memory_space<vmem>>, vector<16x8xbf16>
    %cst_75 = arith.constant dense<0.000000e+00> : vector<16x16xf32>
    %140 = tpu.matmul %138, %139, %cst_75 {dimension_numbers = #tpu.dot_dimension_numbers<[1], [1], [0], [0], [0, 0, 1, 0], [], []>} : vector<16x8xbf16>, vector<16x8xbf16>, vector<16x16xf32> -> vector<16x16xf32>
    %cst_76 = arith.constant dense<0xFF800000> : vector<16xf32>
    %141 = vector.multi_reduction <maximumf>, %140, %cst_76 [1] : vector<16x16xf32> to vector<16xf32>
    %142 = vector.shape_cast %141 : vector<16xf32> to vector<16x1xf32>
    %143 = vector.broadcast %142 : vector<16x1xf32> to vector<16x16xf32>
    %144 = arith.subf %140, %143 : vector<16x16xf32>
    %145 = math.exp %144 : vector<16x16xf32>
    %cst_77 = arith.constant dense<0.000000e+00> : vector<16xf32>
    %146 = vector.multi_reduction <add>, %145, %cst_77 [1] : vector<16x16xf32> to vector<16xf32>
    %147 = vector.shape_cast %146 : vector<16xf32> to vector<16x1xf32>
    %148 = arith.truncf %145 : vector<16x16xf32> to vector<16x16xbf16>
    %cst_78 = arith.constant 1.000000e+00 : f32
    %149 = vector.broadcast %cst_78 : f32 to vector<16x1xf32>
    %150 = arith.divf %149, %147 : vector<16x1xf32>
    %151 = arith.index_cast %136 : i32 to index
    %c0_79 = arith.constant 0 : index
    %152 = vector.load %arg21[%151, %c0_79] : memref<16x128xbf16, #tpu.memory_space<vmem>>, vector<16x128xbf16>
    %153 = arith.extf %152 : vector<16x128xbf16> to vector<16x128xf32>
    %154 = vector.broadcast %150 : vector<16x1xf32> to vector<16x128xf32>
    %155 = arith.mulf %153, %154 : vector<16x128xf32>
    %156 = arith.truncf %155 : vector<16x128xf32> to vector<16x128xbf16>
    %c0_80 = arith.constant 0 : index
    %c0_81 = arith.constant 0 : index
    %157 = vector.load %arg22[%c0_80, %c0_81] : memref<16x128xf32, #tpu.memory_space<vmem>>, vector<16x128xf32>
    %cst_82 = arith.constant dense<0.000000e+00> : vector<16x128xf32>
    %158 = tpu.matmul %148, %156, %cst_82 {dimension_numbers = #tpu.dot_dimension_numbers<[0], [0], [1], [1], [0, 1, 1, 1], [], []>} : vector<16x16xbf16>, vector<16x128xbf16>, vector<16x128xf32> -> vector<16x128xf32>
    %159 = arith.addf %157, %158 : vector<16x128xf32>
    %c0_83 = arith.constant 0 : index
    %c0_84 = arith.constant 0 : index
    %160 = vector.load %arg22[%c0_83, %c0_84] : memref<16x128xf32, #tpu.memory_space<vmem>>, vector<16x128xf32>
    tpu.vector_store %arg22[%c0_83, %c0_84], %159 {strides = array<i32>} : memref<16x128xf32, #tpu.memory_space<vmem>>, vector<16x128xf32>,
    %c1_i32_85 = arith.constant 1 : i32
    %c0_86 = arith.constant 0 : index
    %c0_87 = arith.constant 0 : index
    %161 = vector.load %arg22[%c0_86, %c0_87] : memref<16x128xf32, #tpu.memory_space<vmem>>, vector<16x128xf32>
    %162 = vector.extract_strided_slice %161 {offsets = [0, 32], sizes = [16, 1], strides = [1, 1]} : vector<16x128xf32> to vector<16x1xf32>
    %cst_88 = arith.constant 9.99999971E-10 : f32
    %163 = vector.broadcast %cst_88 : f32 to vector<16x1xf32>
    %164 = arith.addf %163, %162 : vector<16x1xf32>
    %cst_89 = arith.constant 1.000000e+00 : f32
    %165 = vector.broadcast %cst_89 : f32 to vector<16x1xf32>
    %166 = arith.divf %165, %164 : vector<16x1xf32>
    %167 = vector.broadcast %166 : vector<16x1xf32> to vector<16x128xf32>
    %168 = arith.mulf %161, %167 : vector<16x128xf32>
    %c0_90 = arith.constant 0 : index
    %c0_91 = arith.constant 0 : index
    %169 = vector.load %arg19[%c0_90, %c0_91] : memref<16x128xf32, #tpu.memory_space<vmem>>, vector<16x128xf32>
    %170 = arith.subf %169, %168 : vector<16x128xf32>
    %171 = arith.truncf %170 : vector<16x128xf32> to vector<16x128xbf16>
    %c0_92 = arith.constant 0 : index
    %c0_93 = arith.constant 0 : index
    %172 = vector.load %arg11[%c0_92, %c0_93] : memref<128x128xbf16, #tpu.memory_space<vmem>>, vector<128x128xbf16>
    %cst_94 = arith.constant dense<0.000000e+00> : vector<16x128xf32>
    %173 = tpu.matmul %171, %172, %cst_94 {dimension_numbers = #tpu.dot_dimension_numbers<[1], [0], [0], [1], [0, 0, 1, 1], [], []>} : vector<16x128xbf16>, vector<128x128xbf16>, vector<16x128xf32> -> vector<16x128xf32>
    %c0_95 = arith.constant 0 : index
    %c0_96 = arith.constant 0 : index
    %174 = vector.load %arg12[%c0_95, %c0_96] : memref<1x128xf32, #tpu.memory_space<vmem>>, vector<1x128xf32>
    %175 = vector.broadcast %174 : vector<1x128xf32> to vector<16x128xf32>
    %176 = arith.addf %173, %175 : vector<16x128xf32>
    %cst_97 = arith.constant 0.000000e+00 : f32
    %177 = vector.broadcast %cst_97 : f32 to vector<16x128xf32>
    %178 = arith.maximumf %176, %177 : vector<16x128xf32>
    %179 = arith.addf %169, %178 : vector<16x128xf32>
    %c0_98 = arith.constant 0 : index
    %c0_99 = arith.constant 0 : index
    %180 = vector.load %arg19[%c0_98, %c0_99] : memref<16x128xf32, #tpu.memory_space<vmem>>, vector<16x128xf32>
    tpu.vector_store %arg19[%c0_98, %c0_99], %179 {strides = array<i32>} : memref<16x128xf32, #tpu.memory_space<vmem>>, vector<16x128xf32>,
    %c0_100 = arith.constant 0 : index
    %c0_101 = arith.constant 0 : index
    %181 = vector.load %arg19[%c0_100, %c0_101] : memref<16x128xf32, #tpu.memory_space<vmem>>, vector<16x128xf32>
    %182 = arith.truncf %181 : vector<16x128xf32> to vector<16x128xbf16>
    %c0_102 = arith.constant 0 : index
    %c0_103 = arith.constant 0 : index
    %183 = vector.load %arg13[%c0_102, %c0_103] : memref<128x8xbf16, #tpu.memory_space<vmem>>, vector<128x8xbf16>
    %cst_104 = arith.constant dense<0.000000e+00> : vector<16x8xf32>
    %184 = tpu.matmul %182, %183, %cst_104 {dimension_numbers = #tpu.dot_dimension_numbers<[1], [0], [0], [1], [0, 0, 1, 1], [], []>} : vector<16x128xbf16>, vector<128x8xbf16>, vector<16x8xf32> -> vector<16x8xf32>
    %185 = arith.truncf %184 : vector<16x8xf32> to vector<16x8xbf16>
    %c0_105 = arith.constant 0 : index
    %c0_106 = arith.constant 0 : index
    %186 = vector.load %arg20[%c0_105, %c0_106] : memref<16x8xbf16, #tpu.memory_space<vmem>>, vector<16x8xbf16>
    tpu.vector_store %arg20[%c0_105, %c0_106], %185 {strides = array<i32>} : memref<16x8xbf16, #tpu.memory_space<vmem>>, vector<16x8xbf16>,
    %c0_107 = arith.constant 0 : index
    %c0_108 = arith.constant 0 : index
    %187 = vector.load %arg14[%c0_107, %c0_108] : memref<128x128xbf16, #tpu.memory_space<vmem>>, vector<128x128xbf16>
    %cst_109 = arith.constant dense<0.000000e+00> : vector<16x128xf32>
    %188 = tpu.matmul %182, %187, %cst_109 {dimension_numbers = #tpu.dot_dimension_numbers<[1], [0], [0], [1], [0, 0, 1, 1], [], []>} : vector<16x128xbf16>, vector<128x128xbf16>, vector<16x128xf32> -> vector<16x128xf32>
    %c0_110 = arith.constant 0 : index
    %c0_111 = arith.constant 0 : index
    %189 = vector.load %arg15[%c0_110, %c0_111] : memref<1x128xf32, #tpu.memory_space<vmem>>, vector<1x128xf32>
    %190 = vector.broadcast %189 : vector<1x128xf32> to vector<16x128xf32>
    %191 = arith.addf %188, %190 : vector<16x128xf32>
    %192 = tpu.iota {dimensions = array<i32: 1>} : vector<16x128xi32>
    %c32_i32_112 = arith.constant 32 : i32
    %193 = vector.broadcast %c32_i32_112 : i32 to vector<16x128xi32>
    %194 = arith.cmpi eq, %192, %193 : vector<16x128xi32>
    %cst_113 = arith.constant 1.000000e+00 : f32
    %195 = vector.broadcast %cst_113 : f32 to vector<16x128xf32>
    %196 = arith.select %194, %195, %191 : vector<16x128xi1>, vector<16x128xf32>
    %197 = arith.truncf %196 : vector<16x128xf32> to vector<16x128xbf16>
    %c0_114 = arith.constant 0 : index
    %c0_115 = arith.constant 0 : index
    %198 = vector.load %arg21[%c0_114, %c0_115] : memref<16x128xbf16, #tpu.memory_space<vmem>>, vector<16x128xbf16>
    tpu.vector_store %arg21[%c0_114, %c0_115], %197 {strides = array<i32>} : memref<16x128xbf16, #tpu.memory_space<vmem>>, vector<16x128xbf16>,
    %cst_116 = arith.constant 0.000000e+00 : f32
    %199 = vector.broadcast %cst_116 : f32 to vector<16x128xf32>
    %c0_117 = arith.constant 0 : index
    %c0_118 = arith.constant 0 : index
    %200 = vector.load %arg22[%c0_117, %c0_118] : memref<16x128xf32, #tpu.memory_space<vmem>>, vector<16x128xf32>
    tpu.vector_store %arg22[%c0_117, %c0_118], %199 {strides = array<i32>} : memref<16x128xf32, #tpu.memory_space<vmem>>, vector<16x128xf32>,
    %c0_i32_119 = arith.constant 0 : i32
    %c1_i32_120 = arith.constant 1 : i32
    %201 = arith.muli %c0_i32_119, %c1_i32_120 : i32
    %c0_i32_121 = arith.constant 0 : i32
    %202 = arith.addi %c0_i32_121, %201 : i32
    %c16_i32_122 = arith.constant 16 : i32
    %203 = arith.muli %202, %c16_i32_122 : i32
    %204 = tpu.assume_multiple %203, 16 : i32
    %205 = arith.index_cast %204 : i32 to index
    %c0_123 = arith.constant 0 : index
    %206 = vector.load %arg20[%205, %c0_123] : memref<16x8xbf16, #tpu.memory_space<vmem>>, vector<16x8xbf16>
    %c0_124 = arith.constant 0 : index
    %c0_125 = arith.constant 0 : index
    %207 = vector.load %arg20[%c0_124, %c0_125] : memref<16x8xbf16, #tpu.memory_space<vmem>>, vector<16x8xbf16>
    %cst_126 = arith.constant dense<0.000000e+00> : vector<16x16xf32>
    %208 = tpu.matmul %206, %207, %cst_126 {dimension_numbers = #tpu.dot_dimension_numbers<[1], [1], [0], [0], [0, 0, 1, 0], [], []>} : vector<16x8xbf16>, vector<16x8xbf16>, vector<16x16xf32> -> vector<16x16xf32>
    %cst_127 = arith.constant dense<0xFF800000> : vector<16xf32>
    %209 = vector.multi_reduction <maximumf>, %208, %cst_127 [1] : vector<16x16xf32> to vector<16xf32>
    %210 = vector.shape_cast %209 : vector<16xf32> to vector<16x1xf32>
    %211 = vector.broadcast %210 : vector<16x1xf32> to vector<16x16xf32>
    %212 = arith.subf %208, %211 : vector<16x16xf32>
    %213 = math.exp %212 : vector<16x16xf32>
    %cst_128 = arith.constant dense<0.000000e+00> : vector<16xf32>
    %214 = vector.multi_reduction <add>, %213, %cst_128 [1] : vector<16x16xf32> to vector<16xf32>
    %215 = vector.shape_cast %214 : vector<16xf32> to vector<16x1xf32>
    %216 = arith.truncf %213 : vector<16x16xf32> to vector<16x16xbf16>
    %cst_129 = arith.constant 1.000000e+00 : f32
    %217 = vector.broadcast %cst_129 : f32 to vector<16x1xf32>
    %218 = arith.divf %217, %215 : vector<16x1xf32>
    %219 = arith.index_cast %204 : i32 to index
    %c0_130 = arith.constant 0 : index
    %220 = vector.load %arg21[%219, %c0_130] : memref<16x128xbf16, #tpu.memory_space<vmem>>, vector<16x128xbf16>
    %221 = arith.extf %220 : vector<16x128xbf16> to vector<16x128xf32>
    %222 = vector.broadcast %218 : vector<16x1xf32> to vector<16x128xf32>
    %223 = arith.mulf %221, %222 : vector<16x128xf32>
    %224 = arith.truncf %223 : vector<16x128xf32> to vector<16x128xbf16>
    %c0_131 = arith.constant 0 : index
    %c0_132 = arith.constant 0 : index
    %225 = vector.load %arg22[%c0_131, %c0_132] : memref<16x128xf32, #tpu.memory_space<vmem>>, vector<16x128xf32>
    %cst_133 = arith.constant dense<0.000000e+00> : vector<16x128xf32>
    %226 = tpu.matmul %216, %224, %cst_133 {dimension_numbers = #tpu.dot_dimension_numbers<[0], [0], [1], [1], [0, 1, 1, 1], [], []>} : vector<16x16xbf16>, vector<16x128xbf16>, vector<16x128xf32> -> vector<16x128xf32>
    %227 = arith.addf %225, %226 : vector<16x128xf32>
    %c0_134 = arith.constant 0 : index
    %c0_135 = arith.constant 0 : index
    %228 = vector.load %arg22[%c0_134, %c0_135] : memref<16x128xf32, #tpu.memory_space<vmem>>, vector<16x128xf32>
    tpu.vector_store %arg22[%c0_134, %c0_135], %227 {strides = array<i32>} : memref<16x128xf32, #tpu.memory_space<vmem>>, vector<16x128xf32>,
    %c1_i32_136 = arith.constant 1 : i32
    %c0_137 = arith.constant 0 : index
    %c0_138 = arith.constant 0 : index
    %229 = vector.load %arg22[%c0_137, %c0_138] : memref<16x128xf32, #tpu.memory_space<vmem>>, vector<16x128xf32>
    %230 = vector.extract_strided_slice %229 {offsets = [0, 32], sizes = [16, 1], strides = [1, 1]} : vector<16x128xf32> to vector<16x1xf32>
    %cst_139 = arith.constant 9.99999971E-10 : f32
    %231 = vector.broadcast %cst_139 : f32 to vector<16x1xf32>
    %232 = arith.addf %231, %230 : vector<16x1xf32>
    %cst_140 = arith.constant 1.000000e+00 : f32
    %233 = vector.broadcast %cst_140 : f32 to vector<16x1xf32>
    %234 = arith.divf %233, %232 : vector<16x1xf32>
    %235 = vector.broadcast %234 : vector<16x1xf32> to vector<16x128xf32>
    %236 = arith.mulf %229, %235 : vector<16x128xf32>
    %c0_141 = arith.constant 0 : index
    %c0_142 = arith.constant 0 : index
    %237 = vector.load %arg19[%c0_141, %c0_142] : memref<16x128xf32, #tpu.memory_space<vmem>>, vector<16x128xf32>
    %238 = arith.subf %237, %236 : vector<16x128xf32>
    %239 = arith.truncf %238 : vector<16x128xf32> to vector<16x128xbf16>
    %c0_143 = arith.constant 0 : index
    %c0_144 = arith.constant 0 : index
    %240 = vector.load %arg16[%c0_143, %c0_144] : memref<128x128xbf16, #tpu.memory_space<vmem>>, vector<128x128xbf16>
    %cst_145 = arith.constant dense<0.000000e+00> : vector<16x128xf32>
    %241 = tpu.matmul %239, %240, %cst_145 {dimension_numbers = #tpu.dot_dimension_numbers<[1], [0], [0], [1], [0, 0, 1, 1], [], []>} : vector<16x128xbf16>, vector<128x128xbf16>, vector<16x128xf32> -> vector<16x128xf32>
    %c0_146 = arith.constant 0 : index
    %c0_147 = arith.constant 0 : index
    %242 = vector.load %arg17[%c0_146, %c0_147] : memref<1x128xf32, #tpu.memory_space<vmem>>, vector<1x128xf32>
    %243 = vector.broadcast %242 : vector<1x128xf32> to vector<16x128xf32>
    %244 = arith.addf %241, %243 : vector<16x128xf32>
    %cst_148 = arith.constant 0.000000e+00 : f32
    %245 = vector.broadcast %cst_148 : f32 to vector<16x128xf32>
    %246 = arith.maximumf %244, %245 : vector<16x128xf32>
    %247 = arith.addf %237, %246 : vector<16x128xf32>
    %c0_149 = arith.constant 0 : index
    %c0_150 = arith.constant 0 : index
    %248 = vector.load %arg19[%c0_149, %c0_150] : memref<16x128xf32, #tpu.memory_space<vmem>>, vector<16x128xf32>
    tpu.vector_store %arg19[%c0_149, %c0_150], %247 {strides = array<i32>} : memref<16x128xf32, #tpu.memory_space<vmem>>, vector<16x128xf32>,
    %c0_151 = arith.constant 0 : index
    %c0_152 = arith.constant 0 : index
    %249 = vector.load %arg19[%c0_151, %c0_152] : memref<16x128xf32, #tpu.memory_space<vmem>>, vector<16x128xf32>
    %250 = tpu.transpose %249, [1, 0] : vector<16x128xf32> -> vector<128x16xf32>
    %251 = vector.extract_strided_slice %250 {offsets = [0, 0], sizes = [32, 16], strides = [1, 1]} : vector<128x16xf32> to vector<32x16xf32>
    %c0_153 = arith.constant 0 : index
    %c0_154 = arith.constant 0 : index
    %c0_155 = arith.constant 0 : index
    %252 = vector.load %arg18[%c0_153, %c0_154, %c0_155] : memref<1x32x16xf32, #tpu.memory_space<vmem>>, vector<1x32x16xf32>
    %253 = vector.shape_cast %252 : vector<1x32x16xf32> to vector<32x16xf32>
    %254 = vector.shape_cast %251 : vector<32x16xf32> to vector<1x32x16xf32>
    tpu.vector_store %arg18[%c0_153, %c0_154, %c0_155], %254 {strides = array<i32>} : memref<1x32x16xf32, #tpu.memory_space<vmem>>, vector<1x32x16xf32>,
    return
  }
  func.func @transform_0(%arg0: i32) -> (i32, i32, i32) {
    %c0_i32 = arith.constant 0 : i32
    %c0_i32_0 = arith.constant 0 : i32
    %c0_i32_1 = arith.constant 0 : i32
    return %arg0, %c0_i32, %c0_i32_0 : i32, i32, i32
  }
  func.func @transform_1(%arg0: i32) -> (i32, i32, i32) {
    %c0_i32 = arith.constant 0 : i32
    %c0_i32_0 = arith.constant 0 : i32
    %c0_i32_1 = arith.constant 0 : i32
    return %arg0, %c0_i32, %c0_i32_0 : i32, i32, i32
  }
  func.func @transform_2(%arg0: i32) -> (i32, i32, i32) {
    %c0_i32 = arith.constant 0 : i32
    %c0_i32_0 = arith.constant 0 : i32
    %c0_i32_1 = arith.constant 0 : i32
    return %arg0, %c0_i32, %c0_i32_0 : i32, i32, i32
  }
  func.func @transform_3(%arg0: i32) -> (i32, i32, i32) {
    %c0_i32 = arith.constant 0 : i32
    %c0_i32_0 = arith.constant 0 : i32
    %c0_i32_1 = arith.constant 0 : i32
    return %arg0, %c0_i32, %c0_i32_0 : i32, i32, i32
  }
  func.func @transform_4(%arg0: i32) -> (i32, i32) {
    %c0_i32 = arith.constant 0 : i32
    %c0_i32_0 = arith.constant 0 : i32
    %c0_i32_1 = arith.constant 0 : i32
    return %c0_i32, %c0_i32_0 : i32, i32
  }
  func.func @transform_5(%arg0: i32) -> (i32, i32) {
    %c0_i32 = arith.constant 0 : i32
    %c0_i32_0 = arith.constant 0 : i32
    %c0_i32_1 = arith.constant 0 : i32
    return %c0_i32, %c0_i32_0 : i32, i32
  }
  func.func @transform_6(%arg0: i32) -> (i32, i32) {
    %c0_i32 = arith.constant 0 : i32
    %c0_i32_0 = arith.constant 0 : i32
    %c0_i32_1 = arith.constant 0 : i32
    return %c0_i32, %c0_i32_0 : i32, i32
  }
  func.func @transform_7(%arg0: i32) -> (i32, i32) {
    %c0_i32 = arith.constant 0 : i32
    %c0_i32_0 = arith.constant 0 : i32
    %c0_i32_1 = arith.constant 0 : i32
    return %c0_i32, %c0_i32_0 : i32, i32
  }
  func.func @transform_8(%arg0: i32) -> (i32, i32) {
    %c0_i32 = arith.constant 0 : i32
    %c0_i32_0 = arith.constant 0 : i32
    %c0_i32_1 = arith.constant 0 : i32
    return %c0_i32, %c0_i32_0 : i32, i32
  }
  func.func @transform_9(%arg0: i32) -> (i32, i32) {
    %c0_i32 = arith.constant 0 : i32
    %c0_i32_0 = arith.constant 0 : i32
    %c0_i32_1 = arith.constant 0 : i32
    return %c0_i32, %c0_i32_0 : i32, i32
  }
  func.func @transform_10(%arg0: i32) -> (i32, i32) {
    %c0_i32 = arith.constant 0 : i32
    %c0_i32_0 = arith.constant 0 : i32
    %c0_i32_1 = arith.constant 0 : i32
    return %c0_i32, %c0_i32_0 : i32, i32
  }
  func.func @transform_11(%arg0: i32) -> (i32, i32) {
    %c0_i32 = arith.constant 0 : i32
    %c0_i32_0 = arith.constant 0 : i32
    %c0_i32_1 = arith.constant 0 : i32
    return %c0_i32, %c0_i32_0 : i32, i32
  }
  func.func @transform_12(%arg0: i32) -> (i32, i32) {
    %c0_i32 = arith.constant 0 : i32
    %c0_i32_0 = arith.constant 0 : i32
    %c0_i32_1 = arith.constant 0 : i32
    return %c0_i32, %c0_i32_0 : i32, i32
  }
  func.func @transform_13(%arg0: i32) -> (i32, i32) {
    %c0_i32 = arith.constant 0 : i32
    %c0_i32_0 = arith.constant 0 : i32
    %c0_i32_1 = arith.constant 0 : i32
    return %c0_i32, %c0_i32_0 : i32, i32
  }
  func.func @transform_14(%arg0: i32) -> (i32, i32) {
    %c0_i32 = arith.constant 0 : i32
    %c0_i32_0 = arith.constant 0 : i32
    %c0_i32_1 = arith.constant 0 : i32
    return %c0_i32, %c0_i32_0 : i32, i32
  }
  func.func @transform_15(%arg0: i32) -> (i32, i32) {
    %c0_i32 = arith.constant 0 : i32
    %c0_i32_0 = arith.constant 0 : i32
    %c0_i32_1 = arith.constant 0 : i32
    return %c0_i32, %c0_i32_0 : i32, i32
  }
  func.func @transform_16(%arg0: i32) -> (i32, i32) {
    %c0_i32 = arith.constant 0 : i32
    %c0_i32_0 = arith.constant 0 : i32
    %c0_i32_1 = arith.constant 0 : i32
    return %c0_i32, %c0_i32_0 : i32, i32
  }
  func.func @transform_17(%arg0: i32) -> (i32, i32, i32) {
    %c0_i32 = arith.constant 0 : i32
    %c0_i32_0 = arith.constant 0 : i32
    %c0_i32_1 = arith.constant 0 : i32
    return %arg0, %c0_i32, %c0_i32_0 : i32, i32, i32
  }
}

</mosaic_0001>

<llo_original>
// kernel: tpu_custom_call.1
$region0: #{tpu_custom_call.1}
  #allocation0 [shape = 'u32[]', space=smem, size = 0x4, offset = 0x4, fixed_abs, tag = 'smem constant byte address 0x4 - core index']
  #allocation1 [shape = 'u32[144,128]{1,0:T(1,128)}', space=vmem, size = 0x12000, scoped, tag = 'internal scratch']
  #allocation2 [shape = 'f32[16,128]{1,0:T(8,128)}', space=vmem, size = 0x2000, scoped, tag = 'scratch operand']
  #allocation3 [shape = 'bf16[16,8]{1,0:T(16,128)(2,1)}', space=vmem, size = 0x1000, scoped, tag = 'scratch operand']
  #allocation4 [shape = 'bf16[16,128]{1,0:T(16,128)(2,1)}', space=vmem, size = 0x1000, scoped, tag = 'scratch operand']
  #allocation5 [shape = 'f32[16,128]{1,0:T(8,128)}', space=vmem, size = 0x2000, scoped, tag = 'scratch operand']
  %s0 = inlined_call_operand.hbm [shape: f32[2,8,16], index: 0, kind: input, shape index: {}]
  %s1 = inlined_call_operand.hbm [shape: f32[2,8,8], index: 1, kind: input, shape index: {}]
  %s2 = inlined_call_operand.hbm [shape: f32[2,8,16], index: 2, kind: input, shape index: {}]
  %s3 = inlined_call_operand.hbm [shape: f32[2,8,8], index: 3, kind: input, shape index: {}]
  %s4 = inlined_call_operand.hbm [shape: bf16[8,128], index: 4, kind: input, shape index: {}]
  %s5 = inlined_call_operand.hbm [shape: bf16[8,128], index: 5, kind: input, shape index: {}]
  %s6 = inlined_call_operand.hbm [shape: f32[1,128], index: 6, kind: input, shape index: {}]
  %s7 = inlined_call_operand.hbm [shape: bf16[128,8], index: 7, kind: input, shape index: {}]
  %s8 = inlined_call_operand.hbm [shape: bf16[128,128], index: 8, kind: input, shape index: {}]
  %s9 = inlined_call_operand.hbm [shape: f32[1,128], index: 9, kind: input, shape index: {}]
  %s10 = inlined_call_operand.hbm [shape: bf16[128,128], index: 10, kind: input, shape index: {}]
  %s11 = inlined_call_operand.hbm [shape: f32[1,128], index: 11, kind: input, shape index: {}]
  %s12 = inlined_call_operand.hbm [shape: bf16[128,8], index: 12, kind: input, shape index: {}]
  %s13 = inlined_call_operand.hbm [shape: bf16[128,128], index: 13, kind: input, shape index: {}]
  %s14 = inlined_call_operand.hbm [shape: f32[1,128], index: 14, kind: input, shape index: {}]
  %s15 = inlined_call_operand.hbm [shape: bf16[128,128], index: 15, kind: input, shape index: {}]
  %s16 = inlined_call_operand.hbm [shape: f32[1,128], index: 16, kind: input, shape index: {}]
  %s17 = inlined_call_operand.hbm [shape: f32[2,32,16], index: 17, kind: output, shape index: {}]
  %s18 = sld [smem:[#allocation0]]
  $region169: #{tpu_custom_call.1} parent=0
    _
  %s20 = ssub.s32 1, %s18
  %s21 = scalar_select 0, %s20, %s18
  $region1: #{tpu_custom_call.1} parent=0
    #allocation6 [shape = 'u8[8192]{0}', space=vmem, size = 0x2000, scoped, tag = 'input window, operand 0']
    #allocation7 [shape = 's32[2]{0}', space=sflag, size = 0x8, scoped, tag = 'scoped memory for tpu_custom_call.1']
    #allocation8 [shape = 's32[2]{0}', space=sflag, size = 0x8, scoped, tag = 'scoped memory for tpu_custom_call.1']
    #allocation9 [shape = 'u8[8192]{0}', space=vmem, size = 0x2000, scoped, tag = 'input window, operand 1']
    #allocation10 [shape = 's32[2]{0}', space=sflag, size = 0x8, scoped, tag = 'scoped memory for tpu_custom_call.1']
    #allocation11 [shape = 'u8[8192]{0}', space=vmem, size = 0x2000, scoped, tag = 'input window, operand 2']
    #allocation12 [shape = 'u8[8192]{0}', space=vmem, size = 0x2000, scoped, tag = 'input window, operand 3']
    #allocation13 [shape = 's32[2]{0}', space=sflag, size = 0x8, scoped, tag = 'scoped memory for tpu_custom_call.1']
    #allocation14 [shape = 'u8[2048]{0}', space=vmem, size = 0x800, scoped, tag = 'input window, operand 4, single buffered']
    #allocation15 [shape = 'u8[2048]{0}', space=vmem, size = 0x800, scoped, tag = 'input window, operand 5, single buffered']
    #allocation16 [shape = 's32[1]{0}', space=sflag, size = 0x4, scoped, tag = 'scoped memory for tpu_custom_call.1']
    #allocation17 [shape = 'u8[512]{0}', space=vmem, size = 0x400, scoped, tag = 'input window, operand 6, single buffered']
    #allocation18 [shape = 'u8[32768]{0}', space=vmem, size = 0x8000, scoped, tag = 'input window, operand 7, single buffered']
    #allocation19 [shape = 's32[1]{0}', space=sflag, size = 0x4, scoped, tag = 'scoped memory for tpu_custom_call.1']
    #allocation20 [shape = 'u8[32768]{0}', space=vmem, size = 0x8000, scoped, tag = 'input window, operand 8, single buffered']
    #allocation21 [shape = 'u8[512]{0}', space=vmem, size = 0x400, scoped, tag = 'input window, operand 9, single buffered']
    #allocation22 [shape = 's32[1]{0}', space=sflag, size = 0x4, scoped, tag = 'scoped memory for tpu_custom_call.1']
    #allocation23 [shape = 'u8[32768]{0}', space=vmem, size = 0x8000, scoped, tag = 'input window, operand 10, single buffered']
    #allocation24 [shape = 'u8[512]{0}', space=vmem, size = 0x400, scoped, tag = 'input window, operand 11, single buffered']
    #allocation25 [shape = 's32[1]{0}', space=sflag, size = 0x4, scoped, tag = 'scoped memory for tpu_custom_call.1']
    #allocation26 [shape = 'u8[32768]{0}', space=vmem, size = 0x8000, scoped, tag = 'input window, operand 12, single buffered']
    #allocation27 [shape = 'u8[32768]{0}', space=vmem, size = 0x8000, scoped, tag = 'input window, operand 13, single buffered']
    #allocation28 [shape = 's32[1]{0}', space=sflag, size = 0x4, scoped, tag = 'scoped memory for tpu_custom_call.1']
    #allocation29 [shape = 'u8[512]{0}', space=vmem, size = 0x400, scoped, tag = 'input window, operand 14, single buffered']
    #allocation30 [shape = 'u8[32768]{0}', space=vmem, size = 0x8000, scoped, tag = 'input window, operand 15, single buffered']
    #allocation31 [shape = 's32[1]{0}', space=sflag, size = 0x4, scoped, tag = 'scoped memory for tpu_custom_call.1']
    #allocation32 [shape = 'u8[512]{0}', space=vmem, size = 0x400, scoped, tag = 'input window, operand 16, single buffered']
    #allocation33 [shape = 'u8[32768]{0}', space=vmem, size = 0x8000, scoped, tag = 'output window, operand 0']
    %22 = vsyncpa [#allocation7], 0
    %s23 = scalar_lea.sflag [#allocation7], 1
    %24 = vsyncpa %s23, 0
    %25 = vsyncpa [#allocation10], 0
    %s26 = scalar_lea.sflag [#allocation10], 1
    %27 = vsyncpa %s26, 0
    %28 = vsyncpa [#allocation13], 0
    %s29 = scalar_lea.sflag [#allocation13], 1
    %30 = vsyncpa %s29, 0
    %31 = vsyncpa [#allocation16], 0
    %32 = vsyncpa [#allocation19], 0
    %33 = vsyncpa [#allocation22], 0
    %34 = vsyncpa [#allocation25], 0
    %35 = vsyncpa [#allocation28], 0
    %36 = vsyncpa [#allocation31], 0
    %37 = vsyncpa [#allocation8], 0
    %s38 = scalar_lea.sflag [#allocation8], 1
    %39 = vsyncpa %s38, 0
    loop: start=0, step=1, limit=4
    $region2: #{tpu_custom_call.1} parent=1 // loop_pre_header
      _
    $region3: #{tpu_custom_call.1} parent=1 // loop_header
      %s41 = sphi 0, %s45
      %p42 = scmp.ge.s32.totalorder %s41, 4
      %s51 = sphi 0, %s53
      %s54 = sphi 0, %s51
      %s55 = sphi 0, %s54
      %s71 = sphi 0, %s55
      %s77 = sphi 0, %s79
      %s80 = sphi 0, %s77
      %s81 = sphi 0, %s80
      %s97 = sphi 0, %s81
      %s103 = sphi 0, %s105
      %s106 = sphi 0, %s103
      %s107 = sphi 0, %s106
      %s123 = sphi 0, %s107
      %s129 = sphi 0, %s131
      %s132 = sphi 0, %s129
      %s133 = sphi 0, %s132
      %s149 = sphi 0, %s133
      %s153 = sphi 0, %s153
      %s155 = sphi 0, %s153
      %s156 = sphi 0, %s155
      %s170 = sphi 0, %s156
      %s174 = sphi 0, %s174
      %s176 = sphi 0, %s174
      %s177 = sphi 0, %s176
      %s191 = sphi 0, %s177
      %s195 = sphi 0, %s195
      %s197 = sphi 0, %s195
      %s198 = sphi 0, %s197
      %s212 = sphi 0, %s198
      %s216 = sphi 0, %s216
      %s218 = sphi 0, %s216
      %s219 = sphi 0, %s218
      %s233 = sphi 0, %s219
      %s237 = sphi 0, %s237
      %s239 = sphi 0, %s237
      %s240 = sphi 0, %s239
      %s254 = sphi 0, %s240
      %s258 = sphi 0, %s258
      %s260 = sphi 0, %s258
      %s261 = sphi 0, %s260
      %s275 = sphi 0, %s261
      %s279 = sphi 0, %s279
      %s281 = sphi 0, %s279
      %s282 = sphi 0, %s281
      %s296 = sphi 0, %s282
      %s300 = sphi 0, %s300
      %s302 = sphi 0, %s300
      %s303 = sphi 0, %s302
      %s317 = sphi 0, %s303
      %s321 = sphi 0, %s321
      %s323 = sphi 0, %s321
      %s324 = sphi 0, %s323
      %s338 = sphi 0, %s324
      %s342 = sphi 0, %s342
      %s344 = sphi 0, %s342
      %s345 = sphi 0, %s344
      %s359 = sphi 0, %s345
      %s363 = sphi 0, %s363
      %s365 = sphi 0, %s363
      %s366 = sphi 0, %s365
      %s380 = sphi 0, %s366
      %s384 = sphi 0, %s384
      %s386 = sphi 0, %s384
      %s387 = sphi 0, %s386
      %s401 = sphi 0, %s387
      %s405 = sphi 0, %s405
      %s407 = sphi 0, %s405
      %s408 = sphi 0, %s407
      %s422 = sphi 0, %s408
      %s428 = sphi 0, %s430
      %s431 = sphi 0, %s428
      %s432 = sphi 0, %s431
      %s448 = sphi 0, %s432
    $region4: #{tpu_custom_call.1} parent=1 // loop_header_branch
      %44 = sbr.rel (%p42) target = $region8
    $region5: #{tpu_custom_call.1} parent=1 // loop_body
      %s46 = ssub.s32 %s41, 1
      %s47 = ssub.s32 %s41, 2
      %s48 = sadd.s32 %s41, 1
      %s49 = ssub.s32 %s41, %s48
      %p50 = scmp.eq.s32.totalorder %s49, 0
      %s52 = sadd.s32 %s51, 1
      %s53 = scalar_select %p50, %s51, %s52
      %p56 = pneg %p50
      %p57 = scmp.eq.s32.totalorder %s41, 1
      %p58 = por %p56, %p57
      %p59 = scmp.ne.s32.totalorder %s51, %s54
      %p60 = scmp.eq.s32.totalorder %s41, 0
      %p61 = por %p59, %p60
      %p62 = scmp.ne.s32.totalorder %s51, %s54
      %p63 = scmp.eq.s32.totalorder %s46, 1
      %p64 = por %p62, %p63
      %p65 = scmp.ne.s32.totalorder %s54, %s55
      %p66 = scmp.eq.s32.totalorder %s46, 0
      %p67 = por %p65, %p66
      %p68 = scmp.ne.s32.totalorder %s54, %s55
      %p69 = scmp.eq.s32.totalorder %s47, 1
      %p70 = por %p68, %p69
      %p72 = scmp.ne.s32.totalorder %s55, %s71
      %p73 = scmp.eq.s32.totalorder %s47, 0
      %p74 = por %p72, %p73
      %s75 = ssub.s32 %s41, %s48
      %p76 = scmp.eq.s32.totalorder %s75, 0
      %s78 = sadd.s32 %s77, 1
      %s79 = scalar_select %p76, %s77, %s78
      %p82 = pneg %p76
      %p83 = scmp.eq.s32.totalorder %s41, 1
      %p84 = por %p82, %p83
      %p85 = scmp.ne.s32.totalorder %s77, %s80
      %p86 = scmp.eq.s32.totalorder %s41, 0
      %p87 = por %p85, %p86
      %p88 = scmp.ne.s32.totalorder %s77, %s80
      %p89 = scmp.eq.s32.totalorder %s46, 1
      %p90 = por %p88, %p89
      %p91 = scmp.ne.s32.totalorder %s80, %s81
      %p92 = scmp.eq.s32.totalorder %s46, 0
      %p93 = por %p91, %p92
      %p94 = scmp.ne.s32.totalorder %s80, %s81
      %p95 = scmp.eq.s32.totalorder %s47, 1
      %p96 = por %p94, %p95
      %p98 = scmp.ne.s32.totalorder %s81, %s97
      %p99 = scmp.eq.s32.totalorder %s47, 0
      %p100 = por %p98, %p99
      %s101 = ssub.s32 %s41, %s48
      %p102 = scmp.eq.s32.totalorder %s101, 0
      %s104 = sadd.s32 %s103, 1
      %s105 = scalar_select %p102, %s103, %s104
      %p108 = pneg %p102
      %p109 = scmp.eq.s32.totalorder %s41, 1
      %p110 = por %p108, %p109
      %p111 = scmp.ne.s32.totalorder %s103, %s106
      %p112 = scmp.eq.s32.totalorder %s41, 0
      %p113 = por %p111, %p112
      %p114 = scmp.ne.s32.totalorder %s103, %s106
      %p115 = scmp.eq.s32.totalorder %s46, 1
      %p116 = por %p114, %p115
      %p117 = scmp.ne.s32.totalorder %s106, %s107
      %p118 = scmp.eq.s32.totalorder %s46, 0
      %p119 = por %p117, %p118
      %p120 = scmp.ne.s32.totalorder %s106, %s107
      %p121 = scmp.eq.s32.totalorder %s47, 1
      %p122 = por %p120, %p121
      %p124 = scmp.ne.s32.totalorder %s107, %s123
      %p125 = scmp.eq.s32.totalorder %s47, 0
      %p126 = por %p124, %p125
      %s127 = ssub.s32 %s41, %s48
      %p128 = scmp.eq.s32.totalorder %s127, 0
      %s130 = sadd.s32 %s129, 1
      %s131 = scalar_select %p128, %s129, %s130
      %p134 = pneg %p128
      %p135 = scmp.eq.s32.totalorder %s41, 1
      %p136 = por %p134, %p135
      %p137 = scmp.ne.s32.totalorder %s129, %s132
      %p138 = scmp.eq.s32.totalorder %s41, 0
      %p139 = por %p137, %p138
      %p140 = scmp.ne.s32.totalorder %s129, %s132
      %p141 = scmp.eq.s32.totalorder %s46, 1
      %p142 = por %p140, %p141
      %p143 = scmp.ne.s32.totalorder %s132, %s133
      %p144 = scmp.eq.s32.totalorder %s46, 0
      %p145 = por %p143, %p144
      %p146 = scmp.ne.s32.totalorder %s132, %s133
      %p147 = scmp.eq.s32.totalorder %s47, 1
      %p148 = por %p146, %p147
      %p150 = scmp.ne.s32.totalorder %s133, %s149
      %p151 = scmp.eq.s32.totalorder %s47, 0
      %p152 = por %p150, %p151
      %s154 = sadd.s32 %s153, 1
      %p157 = scmp.eq.s32.totalorder %s41, 1
      %p158 = scmp.ne.s32.totalorder %s153, %s155
      %p159 = scmp.eq.s32.totalorder %s41, 0
      %p160 = por %p158, %p159
      %p161 = scmp.ne.s32.totalorder %s153, %s155
      %p162 = scmp.eq.s32.totalorder %s46, 1
      %p163 = por %p161, %p162
      %p164 = scmp.ne.s32.totalorder %s155, %s156
      %p165 = scmp.eq.s32.totalorder %s46, 0
      %p166 = por %p164, %p165
      %p167 = scmp.ne.s32.totalorder %s155, %s156
      %p168 = scmp.eq.s32.totalorder %s47, 1
      %p169 = por %p167, %p168
      %p171 = scmp.ne.s32.totalorder %s156, %s170
      %p172 = scmp.eq.s32.totalorder %s47, 0
      %p173 = por %p171, %p172
      %s175 = sadd.s32 %s174, 1
      %p178 = scmp.eq.s32.totalorder %s41, 1
      %p179 = scmp.ne.s32.totalorder %s174, %s176
      %p180 = scmp.eq.s32.totalorder %s41, 0
      %p181 = por %p179, %p180
      %p182 = scmp.ne.s32.totalorder %s174, %s176
      %p183 = scmp.eq.s32.totalorder %s46, 1
      %p184 = por %p182, %p183
      %p185 = scmp.ne.s32.totalorder %s176, %s177
      %p186 = scmp.eq.s32.totalorder %s46, 0
      %p187 = por %p185, %p186
      %p188 = scmp.ne.s32.totalorder %s176, %s177
      %p189 = scmp.eq.s32.totalorder %s47, 1
      %p190 = por %p188, %p189
      %p192 = scmp.ne.s32.totalorder %s177, %s191
      %p193 = scmp.eq.s32.totalorder %s47, 0
      %p194 = por %p192, %p193
      %s196 = sadd.s32 %s195, 1
      %p199 = scmp.eq.s32.totalorder %s41, 1
      %p200 = scmp.ne.s32.totalorder %s195, %s197
      %p201 = scmp.eq.s32.totalorder %s41, 0
      %p202 = por %p200, %p201
      %p203 = scmp.ne.s32.totalorder %s195, %s197
      %p204 = scmp.eq.s32.totalorder %s46, 1
      %p205 = por %p203, %p204
      %p206 = scmp.ne.s32.totalorder %s197, %s198
      %p207 = scmp.eq.s32.totalorder %s46, 0
      %p208 = por %p206, %p207
      %p209 = scmp.ne.s32.totalorder %s197, %s198
      %p210 = scmp.eq.s32.totalorder %s47, 1
      %p211 = por %p209, %p210
      %p213 = scmp.ne.s32.totalorder %s198, %s212
      %p214 = scmp.eq.s32.totalorder %s47, 0
      %p215 = por %p213, %p214
      %s217 = sadd.s32 %s216, 1
      %p220 = scmp.eq.s32.totalorder %s41, 1
      %p221 = scmp.ne.s32.totalorder %s216, %s218
      %p222 = scmp.eq.s32.totalorder %s41, 0
      %p223 = por %p221, %p222
      %p224 = scmp.ne.s32.totalorder %s216, %s218
      %p225 = scmp.eq.s32.totalorder %s46, 1
      %p226 = por %p224, %p225
      %p227 = scmp.ne.s32.totalorder %s218, %s219
      %p228 = scmp.eq.s32.totalorder %s46, 0
      %p229 = por %p227, %p228
      %p230 = scmp.ne.s32.totalorder %s218, %s219
      %p231 = scmp.eq.s32.totalorder %s47, 1
      %p232 = por %p230, %p231
      %p234 = scmp.ne.s32.totalorder %s219, %s233
      %p235 = scmp.eq.s32.totalorder %s47, 0
      %p236 = por %p234, %p235
      %s238 = sadd.s32 %s237, 1
      %p241 = scmp.eq.s32.totalorder %s41, 1
      %p242 = scmp.ne.s32.totalorder %s237, %s239
      %p243 = scmp.eq.s32.totalorder %s41, 0
      %p244 = por %p242, %p243
      %p245 = scmp.ne.s32.totalorder %s237, %s239
      %p246 = scmp.eq.s32.totalorder %s46, 1
      %p247 = por %p245, %p246
      %p248 = scmp.ne.s32.totalorder %s239, %s240
      %p249 = scmp.eq.s32.totalorder %s46, 0
      %p250 = por %p248, %p249
      %p251 = scmp.ne.s32.totalorder %s239, %s240
      %p252 = scmp.eq.s32.totalorder %s47, 1
      %p253 = por %p251, %p252
      %p255 = scmp.ne.s32.totalorder %s240, %s254
      %p256 = scmp.eq.s32.totalorder %s47, 0
      %p257 = por %p255, %p256
      %s259 = sadd.s32 %s258, 1
      %p262 = scmp.eq.s32.totalorder %s41, 1
      %p263 = scmp.ne.s32.totalorder %s258, %s260
      %p264 = scmp.eq.s32.totalorder %s41, 0
      %p265 = por %p263, %p264
      %p266 = scmp.ne.s32.totalorder %s258, %s260
      %p267 = scmp.eq.s32.totalorder %s46, 1
      %p268 = por %p266, %p267
      %p269 = scmp.ne.s32.totalorder %s260, %s261
      %p270 = scmp.eq.s32.totalorder %s46, 0
      %p271 = por %p269, %p270
      %p272 = scmp.ne.s32.totalorder %s260, %s261
      %p273 = scmp.eq.s32.totalorder %s47, 1
      %p274 = por %p272, %p273
      %p276 = scmp.ne.s32.totalorder %s261, %s275
      %p277 = scmp.eq.s32.totalorder %s47, 0
      %p278 = por %p276, %p277
      %s280 = sadd.s32 %s279, 1
      %p283 = scmp.eq.s32.totalorder %s41, 1
      %p284 = scmp.ne.s32.totalorder %s279, %s281
      %p285 = scmp.eq.s32.totalorder %s41, 0
      %p286 = por %p284, %p285
      %p287 = scmp.ne.s32.totalorder %s279, %s281
      %p288 = scmp.eq.s32.totalorder %s46, 1
      %p289 = por %p287, %p288
      %p290 = scmp.ne.s32.totalorder %s281, %s282
      %p291 = scmp.eq.s32.totalorder %s46, 0
      %p292 = por %p290, %p291
      %p293 = scmp.ne.s32.totalorder %s281, %s282
      %p294 = scmp.eq.s32.totalorder %s47, 1
      %p295 = por %p293, %p294
      %p297 = scmp.ne.s32.totalorder %s282, %s296
      %p298 = scmp.eq.s32.totalorder %s47, 0
      %p299 = por %p297, %p298
      %s301 = sadd.s32 %s300, 1
      %p304 = scmp.eq.s32.totalorder %s41, 1
      %p305 = scmp.ne.s32.totalorder %s300, %s302
      %p306 = scmp.eq.s32.totalorder %s41, 0
      %p307 = por %p305, %p306
      %p308 = scmp.ne.s32.totalorder %s300, %s302
      %p309 = scmp.eq.s32.totalorder %s46, 1
      %p310 = por %p308, %p309
      %p311 = scmp.ne.s32.totalorder %s302, %s303
      %p312 = scmp.eq.s32.totalorder %s46, 0
      %p313 = por %p311, %p312
      %p314 = scmp.ne.s32.totalorder %s302, %s303
      %p315 = scmp.eq.s32.totalorder %s47, 1
      %p316 = por %p314, %p315
      %p318 = scmp.ne.s32.totalorder %s303, %s317
      %p319 = scmp.eq.s32.totalorder %s47, 0
      %p320 = por %p318, %p319
      %s322 = sadd.s32 %s321, 1
      %p325 = scmp.eq.s32.totalorder %s41, 1
      %p326 = scmp.ne.s32.totalorder %s321, %s323
      %p327 = scmp.eq.s32.totalorder %s41, 0
      %p328 = por %p326, %p327
      %p329 = scmp.ne.s32.totalorder %s321, %s323
      %p330 = scmp.eq.s32.totalorder %s46, 1
      %p331 = por %p329, %p330
      %p332 = scmp.ne.s32.totalorder %s323, %s324
      %p333 = scmp.eq.s32.totalorder %s46, 0
      %p334 = por %p332, %p333
      %p335 = scmp.ne.s32.totalorder %s323, %s324
      %p336 = scmp.eq.s32.totalorder %s47, 1
      %p337 = por %p335, %p336
      %p339 = scmp.ne.s32.totalorder %s324, %s338
      %p340 = scmp.eq.s32.totalorder %s47, 0
      %p341 = por %p339, %p340
      %s343 = sadd.s32 %s342, 1
      %p346 = scmp.eq.s32.totalorder %s41, 1
      %p347 = scmp.ne.s32.totalorder %s342, %s344
      %p348 = scmp.eq.s32.totalorder %s41, 0
      %p349 = por %p347, %p348
      %p350 = scmp.ne.s32.totalorder %s342, %s344
      %p351 = scmp.eq.s32.totalorder %s46, 1
      %p352 = por %p350, %p351
      %p353 = scmp.ne.s32.totalorder %s344, %s345
      %p354 = scmp.eq.s32.totalorder %s46, 0
      %p355 = por %p353, %p354
      %p356 = scmp.ne.s32.totalorder %s344, %s345
      %p357 = scmp.eq.s32.totalorder %s47, 1
      %p358 = por %p356, %p357
      %p360 = scmp.ne.s32.totalorder %s345, %s359
      %p361 = scmp.eq.s32.totalorder %s47, 0
      %p362 = por %p360, %p361
      %s364 = sadd.s32 %s363, 1
      %p367 = scmp.eq.s32.totalorder %s41, 1
      %p368 = scmp.ne.s32.totalorder %s363, %s365
      %p369 = scmp.eq.s32.totalorder %s41, 0
      %p370 = por %p368, %p369
      %p371 = scmp.ne.s32.totalorder %s363, %s365
      %p372 = scmp.eq.s32.totalorder %s46, 1
      %p373 = por %p371, %p372
      %p374 = scmp.ne.s32.totalorder %s365, %s366
      %p375 = scmp.eq.s32.totalorder %s46, 0
      %p376 = por %p374, %p375
      %p377 = scmp.ne.s32.totalorder %s365, %s366
      %p378 = scmp.eq.s32.totalorder %s47, 1
      %p379 = por %p377, %p378
      %p381 = scmp.ne.s32.totalorder %s366, %s380
      %p382 = scmp.eq.s32.totalorder %s47, 0
      %p383 = por %p381, %p382
      %s385 = sadd.s32 %s384, 1
      %p388 = scmp.eq.s32.totalorder %s41, 1
      %p389 = scmp.ne.s32.totalorder %s384, %s386
      %p390 = scmp.eq.s32.totalorder %s41, 0
      %p391 = por %p389, %p390
      %p392 = scmp.ne.s32.totalorder %s384, %s386
      %p393 = scmp.eq.s32.totalorder %s46, 1
      %p394 = por %p392, %p393
      %p395 = scmp.ne.s32.totalorder %s386, %s387
      %p396 = scmp.eq.s32.totalorder %s46, 0
      %p397 = por %p395, %p396
      %p398 = scmp.ne.s32.totalorder %s386, %s387
      %p399 = scmp.eq.s32.totalorder %s47, 1
      %p400 = por %p398, %p399
      %p402 = scmp.ne.s32.totalorder %s387, %s401
      %p403 = scmp.eq.s32.totalorder %s47, 0
      %p404 = por %p402, %p403
      %s406 = sadd.s32 %s405, 1
      %p409 = scmp.eq.s32.totalorder %s41, 1
      %p410 = scmp.ne.s32.totalorder %s405, %s407
      %p411 = scmp.eq.s32.totalorder %s41, 0
      %p412 = por %p410, %p411
      %p413 = scmp.ne.s32.totalorder %s405, %s407
      %p414 = scmp.eq.s32.totalorder %s46, 1
      %p415 = por %p413, %p414
      %p416 = scmp.ne.s32.totalorder %s407, %s408
      %p417 = scmp.eq.s32.totalorder %s46, 0
      %p418 = por %p416, %p417
      %p419 = scmp.ne.s32.totalorder %s407, %s408
      %p420 = scmp.eq.s32.totalorder %s47, 1
      %p421 = por %p419, %p420
      %p423 = scmp.ne.s32.totalorder %s408, %s422
      %p424 = scmp.eq.s32.totalorder %s47, 0
      %p425 = por %p423, %p424
      %s426 = ssub.s32 %s41, %s48
      %p427 = scmp.eq.s32.totalorder %s426, 0
      %s429 = sadd.s32 %s428, 1
      %s430 = scalar_select %p427, %s428, %s429
      %p433 = pneg %p427
      %p434 = scmp.eq.s32.totalorder %s41, 1
      %p435 = por %p433, %p434
      %p436 = scmp.ne.s32.totalorder %s428, %s431
      %p437 = scmp.eq.s32.totalorder %s41, 0
      %p438 = por %p436, %p437
      %p439 = scmp.ne.s32.totalorder %s428, %s431
      %p440 = scmp.eq.s32.totalorder %s46, 1
      %p441 = por %p439, %p440
      %p442 = scmp.ne.s32.totalorder %s431, %s432
      %p443 = scmp.eq.s32.totalorder %s46, 0
      %p444 = por %p442, %p443
      %p445 = scmp.ne.s32.totalorder %s431, %s432
      %p446 = scmp.eq.s32.totalorder %s47, 1
      %p447 = por %p445, %p446
      %p449 = scmp.ne.s32.totalorder %s432, %s448
      %p450 = scmp.eq.s32.totalorder %s47, 0
      %p451 = por %p449, %p450
      %p452 = scmp.le.s32.totalorder 1, %s41
      %p453 = scmp.lt.s32.totalorder %s41, 3
      %p454 = pnand %p452, %p453
      %p455 = pneg %p454
      // Predicated region
      $region9: #{tpu_custom_call.1} parent=5 // pred_check
        _
      $region10: #{tpu_custom_call.1} parent=5 // pred_check_branch
        %457 = sbr.rel (%p454) target = $region12
      $region11: #{tpu_custom_call.1} parent=5 // pred_region
        %s458 = ssub.s32 %s41, 1
        // Predicated region
        $region13: #{tpu_custom_call.1} parent=11 // pred_check
          %p459 = pneg %p166
        $region14: #{tpu_custom_call.1} parent=11 // pred_check_branch
          %461 = sbr.rel (%p459) target = $region16
        $region15: #{tpu_custom_call.1} parent=11 // pred_region
          %s463 = ssub.s32 64, 64
          %464 = vsyncadd [#allocation13], %s463
          %s466 = sshll.u32 [#allocation14], 4
          %s467 = int_to_ptr.vmem [resolvable:$true] %s466
          %469 = dma.hbm_to_vmem [thread:$0]  %s4, 64, %s467, [#allocation13]
        $region16: #{tpu_custom_call.1} parent=11 // pred_fallthru
          _
        // Predicated region
        $region17: #{tpu_custom_call.1} parent=11 // pred_check
          %p470 = pneg %p187
        $region18: #{tpu_custom_call.1} parent=11 // pred_check_branch
          %472 = sbr.rel (%p470) target = $region20
        $region19: #{tpu_custom_call.1} parent=11 // pred_region
          %s474 = ssub.s32 64, 64
          %475 = vsyncadd [#allocation16], %s474
          %s477 = sshll.u32 [#allocation15], 4
          %s478 = int_to_ptr.vmem [resolvable:$true] %s477
          %480 = dma.hbm_to_vmem [thread:$0]  %s5, 64, %s478, [#allocation16]
        $region20: #{tpu_custom_call.1} parent=11 // pred_fallthru
          _
        // Predicated region
        $region21: #{tpu_custom_call.1} parent=11 // pred_check
          %p481 = pneg %p208
        $region22: #{tpu_custom_call.1} parent=11 // pred_check_branch
          %483 = sbr.rel (%p481) target = $region24
        $region23: #{tpu_custom_call.1} parent=11 // pred_region
          %s485 = ssub.s32 16, 16
          %486 = vsyncadd [#allocation16], %s485
          %s488 = sshll.u32 [#allocation17], 4
          %s489 = int_to_ptr.vmem [resolvable:$true] %s488
          %491 = dma.hbm_to_vmem [thread:$0]  %s6, 16, %s489, [#allocation16]
        $region24: #{tpu_custom_call.1} parent=11 // pred_fallthru
          _
        // Predicated region
        $region25: #{tpu_custom_call.1} parent=11 // pred_check
          %p492 = pneg %p229
        $region26: #{tpu_custom_call.1} parent=11 // pred_check_branch
          %494 = sbr.rel (%p492) target = $region28
        $region27: #{tpu_custom_call.1} parent=11 // pred_region
          %s496 = ssub.s32 1024, 1024
          %497 = vsyncadd [#allocation19], %s496
          %s498 = sshll.u32 [#allocation18], 4
          %s499 = int_to_ptr.vmem [resolvable:$true] %s498
          %504 = dma.hbm_to_vmem [thread:$0]  %s7, 1024, %s499, [#allocation19], 64, 64, 4
        $region28: #{tpu_custom_call.1} parent=11 // pred_fallthru
          _
        // Predicated region
        $region29: #{tpu_custom_call.1} parent=11 // pred_check
          %p505 = pneg %p250
        $region30: #{tpu_custom_call.1} parent=11 // pred_check_branch
          %507 = sbr.rel (%p505) target = $region32
        $region31: #{tpu_custom_call.1} parent=11 // pred_region
          %s509 = ssub.s32 1024, 1024
          %510 = vsyncadd [#allocation19], %s509
          %s511 = sshll.u32 [#allocation20], 4
          %s512 = int_to_ptr.vmem [resolvable:$true] %s511
          %517 = dma.hbm_to_vmem [thread:$0]  %s8, 1024, %s512, [#allocation19], 64, 64, 4
        $region32: #{tpu_custom_call.1} parent=11 // pred_fallthru
          _
        // Predicated region
        $region33: #{tpu_custom_call.1} parent=11 // pred_check
          %p518 = pneg %p271
        $region34: #{tpu_custom_call.1} parent=11 // pred_check_branch
          %520 = sbr.rel (%p518) target = $region36
        $region35: #{tpu_custom_call.1} parent=11 // pred_region
          %s522 = ssub.s32 16, 16
          %523 = vsyncadd [#allocation22], %s522
          %s525 = sshll.u32 [#allocation21], 4
          %s526 = int_to_ptr.vmem [resolvable:$true] %s525
          %528 = dma.hbm_to_vmem [thread:$0]  %s9, 16, %s526, [#allocation22]
        $region36: #{tpu_custom_call.1} parent=11 // pred_fallthru
          _
        // Predicated region
        $region37: #{tpu_custom_call.1} parent=11 // pred_check
          %p529 = pneg %p292
        $region38: #{tpu_custom_call.1} parent=11 // pred_check_branch
          %531 = sbr.rel (%p529) target = $region40
        $region39: #{tpu_custom_call.1} parent=11 // pred_region
          %s533 = ssub.s32 1024, 1024
          %534 = vsyncadd [#allocation22], %s533
          %s535 = sshll.u32 [#allocation23], 4
          %s536 = int_to_ptr.vmem [resolvable:$true] %s535
          %541 = dma.hbm_to_vmem [thread:$0]  %s10, 1024, %s536, [#allocation22], 64, 64, 4
        $region40: #{tpu_custom_call.1} parent=11 // pred_fallthru
          _
        // Predicated region
        $region41: #{tpu_custom_call.1} parent=11 // pred_check
          %p542 = pneg %p313
        $region42: #{tpu_custom_call.1} parent=11 // pred_check_branch
          %544 = sbr.rel (%p542) target = $region44
        $region43: #{tpu_custom_call.1} parent=11 // pred_region
          %s546 = ssub.s32 16, 16
          %547 = vsyncadd [#allocation25], %s546
          %s549 = sshll.u32 [#allocation24], 4
          %s550 = int_to_ptr.vmem [resolvable:$true] %s549
          %552 = dma.hbm_to_vmem [thread:$0]  %s11, 16, %s550, [#allocation25]
        $region44: #{tpu_custom_call.1} parent=11 // pred_fallthru
          _
        // Predicated region
        $region45: #{tpu_custom_call.1} parent=11 // pred_check
          %p553 = pneg %p334
        $region46: #{tpu_custom_call.1} parent=11 // pred_check_branch
          %555 = sbr.rel (%p553) target = $region48
        $region47: #{tpu_custom_call.1} parent=11 // pred_region
          %s557 = ssub.s32 1024, 1024
          %558 = vsyncadd [#allocation25], %s557
          %s559 = sshll.u32 [#allocation26], 4
          %s560 = int_to_ptr.vmem [resolvable:$true] %s559
          %565 = dma.hbm_to_vmem [thread:$0]  %s12, 1024, %s560, [#allocation25], 64, 64, 4
        $region48: #{tpu_custom_call.1} parent=11 // pred_fallthru
          _
        // Predicated region
        $region49: #{tpu_custom_call.1} parent=11 // pred_check
          %p566 = pneg %p355
        $region50: #{tpu_custom_call.1} parent=11 // pred_check_branch
          %568 = sbr.rel (%p566) target = $region52
        $region51: #{tpu_custom_call.1} parent=11 // pred_region
          %s570 = ssub.s32 1024, 1024
          %571 = vsyncadd [#allocation28], %s570
          %s572 = sshll.u32 [#allocation27], 4
          %s573 = int_to_ptr.vmem [resolvable:$true] %s572
          %578 = dma.hbm_to_vmem [thread:$0]  %s13, 1024, %s573, [#allocation28], 64, 64, 4
        $region52: #{tpu_custom_call.1} parent=11 // pred_fallthru
          _
        // Predicated region
        $region53: #{tpu_custom_call.1} parent=11 // pred_check
          %p579 = pneg %p376
        $region54: #{tpu_custom_call.1} parent=11 // pred_check_branch
          %581 = sbr.rel (%p579) target = $region56
        $region55: #{tpu_custom_call.1} parent=11 // pred_region
          %s583 = ssub.s32 16, 16
          %584 = vsyncadd [#allocation28], %s583
          %s586 = sshll.u32 [#allocation29], 4
          %s587 = int_to_ptr.vmem [resolvable:$true] %s586
          %589 = dma.hbm_to_vmem [thread:$0]  %s14, 16, %s587, [#allocation28]
        $region56: #{tpu_custom_call.1} parent=11 // pred_fallthru
          _
        // Predicated region
        $region57: #{tpu_custom_call.1} parent=11 // pred_check
          %p590 = pneg %p397
        $region58: #{tpu_custom_call.1} parent=11 // pred_check_branch
          %592 = sbr.rel (%p590) target = $region60
        $region59: #{tpu_custom_call.1} parent=11 // pred_region
          %s594 = ssub.s32 1024, 1024
          %595 = vsyncadd [#allocation31], %s594
          %s596 = sshll.u32 [#allocation30], 4
          %s597 = int_to_ptr.vmem [resolvable:$true] %s596
          %602 = dma.hbm_to_vmem [thread:$0]  %s15, 1024, %s597, [#allocation31], 64, 64, 4
        $region60: #{tpu_custom_call.1} parent=11 // pred_fallthru
          _
        // Predicated region
        $region61: #{tpu_custom_call.1} parent=11 // pred_check
          %p603 = pneg %p418
        $region62: #{tpu_custom_call.1} parent=11 // pred_check_branch
          %605 = sbr.rel (%p603) target = $region64
        $region63: #{tpu_custom_call.1} parent=11 // pred_region
          %s607 = ssub.s32 16, 16
          %608 = vsyncadd [#allocation31], %s607
          %s610 = sshll.u32 [#allocation32], 4
          %s611 = int_to_ptr.vmem [resolvable:$true] %s610
          %613 = dma.hbm_to_vmem [thread:$0]  %s16, 16, %s611, [#allocation31]
        $region64: #{tpu_custom_call.1} parent=11 // pred_fallthru
          _
      $region12: #{tpu_custom_call.1} parent=5 // pred_fallthru
        _
      %p614 = scmp.lt.s32.totalorder %s41, 2
      // Predicated region
      $region65: #{tpu_custom_call.1} parent=5 // pred_check
        %p615 = pneg %p614
      $region66: #{tpu_custom_call.1} parent=5 // pred_check_branch
        %617 = sbr.rel (%p615) target = $region68
      $region67: #{tpu_custom_call.1} parent=5 // pred_region
        // Predicated region
        $region69: #{tpu_custom_call.1} parent=67 // pred_check
          %p618 = pneg %p61
        $region70: #{tpu_custom_call.1} parent=67 // pred_check_branch
          %620 = sbr.rel (%p618) target = $region72
        $region71: #{tpu_custom_call.1} parent=67 // pred_region
          %s621 = sand.u32 %s51, 1
          %s622 = scalar_lea.sflag [#allocation7], %s621
          %s623 = sand.u32 %s51, 1
          %s624 = smul.addr %s623, 8
          %s625 = scalar_lea.vmem [#allocation6], %s624
          %s627 = ssub.s32 128, 128
          %628 = vsyncadd %s622, %s627
          %s629 = smul.addr %s41, 128
          %s630 = scalar_lea.hbm %s0, %s629
          %s632 = sshll.u32 %s625, 4
          %s633 = int_to_ptr.vmem [resolvable:$true] %s632
          %635 = dma.hbm_to_vmem [thread:$0]  %s630, 128, %s633, %s622
        $region72: #{tpu_custom_call.1} parent=67 // pred_fallthru
          _
        // Predicated region
        $region73: #{tpu_custom_call.1} parent=67 // pred_check
          %p636 = pneg %p87
        $region74: #{tpu_custom_call.1} parent=67 // pred_check_branch
          %638 = sbr.rel (%p636) target = $region76
        $region75: #{tpu_custom_call.1} parent=67 // pred_region
          %s639 = sand.u32 %s41, 1
          %s640 = scalar_lea.sflag [#allocation10], %s639
          %s641 = sand.u32 %s77, 1
          %s642 = smul.addr %s641, 8
          %s643 = scalar_lea.vmem [#allocation9], %s642
          %s645 = ssub.s32 128, 128
          %646 = vsyncadd %s640, %s645
          %s647 = smul.addr %s41, 128
          %s648 = scalar_lea.hbm %s1, %s647
          %s650 = sshll.u32 %s643, 4
          %s651 = int_to_ptr.vmem [resolvable:$true] %s650
          %653 = dma.hbm_to_vmem [thread:$0]  %s648, 128, %s651, %s640
        $region76: #{tpu_custom_call.1} parent=67 // pred_fallthru
          _
        // Predicated region
        $region77: #{tpu_custom_call.1} parent=67 // pred_check
          %p654 = pneg %p113
        $region78: #{tpu_custom_call.1} parent=67 // pred_check_branch
          %656 = sbr.rel (%p654) target = $region80
        $region79: #{tpu_custom_call.1} parent=67 // pred_region
          %s657 = sand.u32 %s41, 1
          %s658 = scalar_lea.sflag [#allocation10], %s657
          %s659 = sand.u32 %s103, 1
          %s660 = smul.addr %s659, 8
          %s661 = scalar_lea.vmem [#allocation11], %s660
          %s663 = ssub.s32 128, 128
          %664 = vsyncadd %s658, %s663
          %s665 = smul.addr %s41, 128
          %s666 = scalar_lea.hbm %s2, %s665
          %s668 = sshll.u32 %s661, 4
          %s669 = int_to_ptr.vmem [resolvable:$true] %s668
          %671 = dma.hbm_to_vmem [thread:$0]  %s666, 128, %s669, %s658
        $region80: #{tpu_custom_call.1} parent=67 // pred_fallthru
          _
        // Predicated region
        $region81: #{tpu_custom_call.1} parent=67 // pred_check
          %p672 = pneg %p139
        $region82: #{tpu_custom_call.1} parent=67 // pred_check_branch
          %674 = sbr.rel (%p672) target = $region84
        $region83: #{tpu_custom_call.1} parent=67 // pred_region
          %s675 = sand.u32 %s41, 1
          %s676 = scalar_lea.sflag [#allocation13], %s675
          %s677 = sand.u32 %s129, 1
          %s678 = smul.addr %s677, 8
          %s679 = scalar_lea.vmem [#allocation12], %s678
          %s681 = ssub.s32 128, 128
          %682 = vsyncadd %s676, %s681
          %s683 = smul.addr %s41, 128
          %s684 = scalar_lea.hbm %s3, %s683
          %s686 = sshll.u32 %s679, 4
          %s687 = int_to_ptr.vmem [resolvable:$true] %s686
          %689 = dma.hbm_to_vmem [thread:$0]  %s684, 128, %s687, %s676
        $region84: #{tpu_custom_call.1} parent=67 // pred_fallthru
          _
      $region68: #{tpu_custom_call.1} parent=5 // pred_fallthru
        _
      %p690 = scmp.le.s32.totalorder 1, %s41
      %p691 = scmp.lt.s32.totalorder %s41, 3
      %p692 = pnand %p690, %p691
      %p693 = pneg %p692
      // Predicated region
      $region85: #{tpu_custom_call.1} parent=5 // pred_check
        _
      $region86: #{tpu_custom_call.1} parent=5 // pred_check_branch
        %695 = sbr.rel (%p692) target = $region88
      $region87: #{tpu_custom_call.1} parent=5 // pred_region
        %s696 = ssub.s32 %s41, 1
        %s697 = sand.u32 %s54, 1
        %s698 = scalar_lea.sflag [#allocation7], %s697
        %s699 = sand.u32 %s54, 1
        %s700 = smul.addr %s699, 8
        %s701 = scalar_lea.vmem [#allocation6], %s700
        // Predicated region
        $region89: #{tpu_custom_call.1} parent=87 // pred_check
          %p702 = pneg %p67
        $region90: #{tpu_custom_call.1} parent=87 // pred_check_branch
          %704 = sbr.rel (%p702) target = $region92
        $region91: #{tpu_custom_call.1} parent=87 // pred_region
          %705 = dma.done %s698, 128
        $region92: #{tpu_custom_call.1} parent=87 // pred_fallthru
          _
        %s706 = sand.u32 %s46, 1
        %s707 = scalar_lea.sflag [#allocation10], %s706
        %s708 = sand.u32 %s80, 1
        %s709 = smul.addr %s708, 8
        %s710 = scalar_lea.vmem [#allocation9], %s709
        // Predicated region
        $region93: #{tpu_custom_call.1} parent=87 // pred_check
          %p711 = pneg %p93
        $region94: #{tpu_custom_call.1} parent=87 // pred_check_branch
          %713 = sbr.rel (%p711) target = $region96
        $region95: #{tpu_custom_call.1} parent=87 // pred_region
          %714 = dma.done %s707, 128
        $region96: #{tpu_custom_call.1} parent=87 // pred_fallthru
          _
        %s715 = sand.u32 %s46, 1
        %s716 = scalar_lea.sflag [#allocation10], %s715
        %s717 = sand.u32 %s106, 1
        %s718 = smul.addr %s717, 8
        %s719 = scalar_lea.vmem [#allocation11], %s718
        // Predicated region
        $region97: #{tpu_custom_call.1} parent=87 // pred_check
          %p720 = pneg %p119
        $region98: #{tpu_custom_call.1} parent=87 // pred_check_branch
          %722 = sbr.rel (%p720) target = $region100
        $region99: #{tpu_custom_call.1} parent=87 // pred_region
          %723 = dma.done %s716, 128
        $region100: #{tpu_custom_call.1} parent=87 // pred_fallthru
          _
        %s724 = sand.u32 %s46, 1
        %s725 = scalar_lea.sflag [#allocation13], %s724
        %s726 = sand.u32 %s132, 1
        %s727 = smul.addr %s726, 8
        %s728 = scalar_lea.vmem [#allocation12], %s727
        // Predicated region
        $region101: #{tpu_custom_call.1} parent=87 // pred_check
          %p729 = pneg %p145
        $region102: #{tpu_custom_call.1} parent=87 // pred_check_branch
          %731 = sbr.rel (%p729) target = $region104
        $region103: #{tpu_custom_call.1} parent=87 // pred_region
          %732 = dma.done %s725, 128
        $region104: #{tpu_custom_call.1} parent=87 // pred_fallthru
          _
        // Predicated region
        $region105: #{tpu_custom_call.1} parent=87 // pred_check
          %p733 = pneg %p166
        $region106: #{tpu_custom_call.1} parent=87 // pred_check_branch
          %735 = sbr.rel (%p733) target = $region108
        $region107: #{tpu_custom_call.1} parent=87 // pred_region
          %736 = dma.done [#allocation13], 64
        $region108: #{tpu_custom_call.1} parent=87 // pred_fallthru
          _
        // Predicated region
        $region109: #{tpu_custom_call.1} parent=87 // pred_check
          %p737 = pneg %p187
        $region110: #{tpu_custom_call.1} parent=87 // pred_check_branch
          %739 = sbr.rel (%p737) target = $region112
        $region111: #{tpu_custom_call.1} parent=87 // pred_region
          %740 = dma.done [#allocation16], 64
        $region112: #{tpu_custom_call.1} parent=87 // pred_fallthru
          _
        // Predicated region
        $region113: #{tpu_custom_call.1} parent=87 // pred_check
          %p741 = pneg %p208
        $region114: #{tpu_custom_call.1} parent=87 // pred_check_branch
          %743 = sbr.rel (%p741) target = $region116
        $region115: #{tpu_custom_call.1} parent=87 // pred_region
          %744 = dma.done [#allocation16], 16
        $region116: #{tpu_custom_call.1} parent=87 // pred_fallthru
          _
        // Predicated region
        $region117: #{tpu_custom_call.1} parent=87 // pred_check
          %p745 = pneg %p229
        $region118: #{tpu_custom_call.1} parent=87 // pred_check_branch
          %747 = sbr.rel (%p745) target = $region120
        $region119: #{tpu_custom_call.1} parent=87 // pred_region
          %748 = dma.done [#allocation19], 1024
        $region120: #{tpu_custom_call.1} parent=87 // pred_fallthru
          _
        // Predicated region
        $region121: #{tpu_custom_call.1} parent=87 // pred_check
          %p749 = pneg %p250
        $region122: #{tpu_custom_call.1} parent=87 // pred_check_branch
          %751 = sbr.rel (%p749) target = $region124
        $region123: #{tpu_custom_call.1} parent=87 // pred_region
          %752 = dma.done [#allocation19], 1024
        $region124: #{tpu_custom_call.1} parent=87 // pred_fallthru
          _
        // Predicated region
        $region125: #{tpu_custom_call.1} parent=87 // pred_check
          %p753 = pneg %p271
        $region126: #{tpu_custom_call.1} parent=87 // pred_check_branch
          %755 = sbr.rel (%p753) target = $region128
        $region127: #{tpu_custom_call.1} parent=87 // pred_region
          %756 = dma.done [#allocation22], 16
        $region128: #{tpu_custom_call.1} parent=87 // pred_fallthru
          _
        // Predicated region
        $region129: #{tpu_custom_call.1} parent=87 // pred_check
          %p757 = pneg %p292
        $region130: #{tpu_custom_call.1} parent=87 // pred_check_branch
          %759 = sbr.rel (%p757) target = $region132
        $region131: #{tpu_custom_call.1} parent=87 // pred_region
          %760 = dma.done [#allocation22], 1024
        $region132: #{tpu_custom_call.1} parent=87 // pred_fallthru
          _
        // Predicated region
        $region133: #{tpu_custom_call.1} parent=87 // pred_check
          %p761 = pneg %p313
        $region134: #{tpu_custom_call.1} parent=87 // pred_check_branch
          %763 = sbr.rel (%p761) target = $region136
        $region135: #{tpu_custom_call.1} parent=87 // pred_region
          %764 = dma.done [#allocation25], 16
        $region136: #{tpu_custom_call.1} parent=87 // pred_fallthru
          _
        // Predicated region
        $region137: #{tpu_custom_call.1} parent=87 // pred_check
          %p765 = pneg %p334
        $region138: #{tpu_custom_call.1} parent=87 // pred_check_branch
          %767 = sbr.rel (%p765) target = $region140
        $region139: #{tpu_custom_call.1} parent=87 // pred_region
          %768 = dma.done [#allocation25], 1024
        $region140: #{tpu_custom_call.1} parent=87 // pred_fallthru
          _
        // Predicated region
        $region141: #{tpu_custom_call.1} parent=87 // pred_check
          %p769 = pneg %p355
        $region142: #{tpu_custom_call.1} parent=87 // pred_check_branch
          %771 = sbr.rel (%p769) target = $region144
        $region143: #{tpu_custom_call.1} parent=87 // pred_region
          %772 = dma.done [#allocation28], 1024
        $region144: #{tpu_custom_call.1} parent=87 // pred_fallthru
          _
        // Predicated region
        $region145: #{tpu_custom_call.1} parent=87 // pred_check
          %p773 = pneg %p376
        $region146: #{tpu_custom_call.1} parent=87 // pred_check_branch
          %775 = sbr.rel (%p773) target = $region148
        $region147: #{tpu_custom_call.1} parent=87 // pred_region
          %776 = dma.done [#allocation28], 16
        $region148: #{tpu_custom_call.1} parent=87 // pred_fallthru
          _
        // Predicated region
        $region149: #{tpu_custom_call.1} parent=87 // pred_check
          %p777 = pneg %p397
        $region150: #{tpu_custom_call.1} parent=87 // pred_check_branch
          %779 = sbr.rel (%p777) target = $region152
        $region151: #{tpu_custom_call.1} parent=87 // pred_region
          %780 = dma.done [#allocation31], 1024
        $region152: #{tpu_custom_call.1} parent=87 // pred_fallthru
          _
        // Predicated region
        $region153: #{tpu_custom_call.1} parent=87 // pred_check
          %p781 = pneg %p418
        $region154: #{tpu_custom_call.1} parent=87 // pred_check_branch
          %783 = sbr.rel (%p781) target = $region156
        $region155: #{tpu_custom_call.1} parent=87 // pred_region
          %784 = dma.done [#allocation31], 16
        $region156: #{tpu_custom_call.1} parent=87 // pred_fallthru
          _
        %s785 = sand.u32 %s54, 1
        %s786 = scalar_lea.sflag [#allocation7], %s785
        %s787 = sand.u32 %s54, 1
        %s788 = smul.addr %s787, 8
        %s789 = scalar_lea.vmem [#allocation6], %s788
        %p790 = pneg %p67
        %p791 = pneg %p64
        %s792 = sand.u32 %s46, 1
        %s793 = scalar_lea.sflag [#allocation10], %s792
        %s794 = sand.u32 %s80, 1
        %s795 = smul.addr %s794, 8
        %s796 = scalar_lea.vmem [#allocation9], %s795
        %p797 = pneg %p93
        %p798 = pneg %p90
        %s799 = sand.u32 %s46, 1
        %s800 = scalar_lea.sflag [#allocation10], %s799
        %s801 = sand.u32 %s106, 1
        %s802 = smul.addr %s801, 8
        %s803 = scalar_lea.vmem [#allocation11], %s802
        %p804 = pneg %p119
        %p805 = pneg %p116
        %s806 = sand.u32 %s46, 1
        %s807 = scalar_lea.sflag [#allocation13], %s806
        %s808 = sand.u32 %s132, 1
        %s809 = smul.addr %s808, 8
        %s810 = scalar_lea.vmem [#allocation12], %s809
        %p811 = pneg %p145
        %p812 = pneg %p142
        %p813 = pneg %p166
        %p814 = pneg %p163
        %p815 = pneg %p187
        %p816 = pneg %p184
        %p817 = pneg %p208
        %p818 = pneg %p205
        %p819 = pneg %p229
        %p820 = pneg %p226
        %p821 = pneg %p250
        %p822 = pneg %p247
        %p823 = pneg %p271
        %p824 = pneg %p268
        %p825 = pneg %p292
        %p826 = pneg %p289
        %p827 = pneg %p313
        %p828 = pneg %p310
        %p829 = pneg %p334
        %p830 = pneg %p331
        %p831 = pneg %p355
        %p832 = pneg %p352
        %p833 = pneg %p376
        %p834 = pneg %p373
        %p835 = pneg %p397
        %p836 = pneg %p394
        %p837 = pneg %p418
        %p838 = pneg %p415
        %p839 = pneg %p444
        %p840 = pneg %p441
        %s841 = sand.u32 %s431, 1
        %s842 = scalar_lea.sflag [#allocation8], %s841
        %s843 = sand.u32 %s431, 1
        %s844 = smul.addr %s843, 32
        %s845 = scalar_lea.vmem [#allocation33], %s844
        %v847 = vld [vmem:[%s710] sm:$0xff]
        %v848 = vmul.f32 %v847, %v847
        %vm849 = vcmask 64512
        %v850 = vsel %vm849, %v848, 0.0
        %v851 = vrot.slane %v850, 4
        %v852 = vadd.f32 %v850, %v851
        %v853 = vrot.slane %v852, 2
        %v854 = vadd.f32 %v852, %v853
        %v855 = vrot.slane %v854, 1
        %v856 = vadd.f32 %v854, %v855
        %v857 = vld [vmem:[%s728] sm:$0xff]
        %v858 = vpack.c.bf16 %v857, %v857
        %v859 = vld [vmem:[%s701] sm:$0xff]
        %v860 = vld [vmem:[%s719] sm:$0xff]
        %861 = vxpose.xlu0.b32.start [1/16] %v859, 128
        %862 = vxpose.xlu0.b32.cont [2/16] 0.0, 128
        %863 = vxpose.xlu0.b32.cont [3/16] 0.0, 128
        %864 = vxpose.xlu0.b32.cont [4/16] 0.0, 128
        %865 = vxpose.xlu0.b32.cont [5/16] 0.0, 128
        %866 = vxpose.xlu0.b32.cont [6/16] 0.0, 128
        %867 = vxpose.xlu0.b32.cont [7/16] 0.0, 128
        %868 = vxpose.xlu0.b32.cont [8/16] 0.0, 128
        %869 = vxpose.xlu0.b32.cont [9/16] 0.0, 128
        %870 = vxpose.xlu0.b32.cont [10/16] 0.0, 128
        %871 = vxpose.xlu0.b32.cont [11/16] 0.0, 128
        %872 = vxpose.xlu0.b32.cont [12/16] 0.0, 128
        %873 = vxpose.xlu0.b32.cont [13/16] 0.0, 128
        %874 = vxpose.xlu0.b32.cont [14/16] 0.0, 128
        %875 = vxpose.xlu0.b32.cont [15/16] 0.0, 128
        %876 = vxpose.xlu0.b32.end [16/16] 0.0, 128
        %v877 = vpop.trf.xlu0
        %v878 = vpop.trf.xlu0
        %v879 = vpop.trf.xlu0
        %v880 = vpop.trf.xlu0
        %v881 = vpop.trf.xlu0
        %v882 = vpop.trf.xlu0
        %v883 = vpop.trf.xlu0
        %v884 = vpop.trf.xlu0
        %v885 = vpop.trf.xlu0
        %v886 = vpop.trf.xlu0
        %v887 = vpop.trf.xlu0
        %v888 = vpop.trf.xlu0
        %v889 = vpop.trf.xlu0
        %v890 = vpop.trf.xlu0
        %v891 = vpop.trf.xlu0
        %v892 = vpop.trf.xlu0
        %v894 = vsel %vm849, %v877, 0
        %v897 = vsel %vm849, %v878, 0
        %899 = vmatprep.subr.mxu0 0.0
        %900 = vmatpush1.msra.mxu0 %v847
        %901 = vmatprep.subr.mxu0 0.0
        %902 = vmatpush1.msra.mxu0 0.0
        %903 = vmatprep.subr.mxu0 0.0
        %904 = vmatpush1.msra.mxu0 0.0
        %905 = vmatprep.subr.mxu0 0.0
        %906 = vmatpush1.msra.mxu0 0.0
        %907 = vmatprep.subr.mxu0 0.0
        %908 = vmatpush1.msra.mxu0 0.0
        %909 = vmatprep.subr.mxu0 0.0
        %910 = vmatpush1.msra.mxu0 0.0
        %911 = vmatprep.subr.mxu0 0.0
        %912 = vmatpush1.msra.mxu0 0.0
        %913 = vmatprep.subr.mxu0 0.0
        %914 = vmatpush1.msra.mxu0 0.0
        %915 = vmatprep.subr.mxu0 0.0
        %916 = vmatpush1.msra.mxu0 0.0
        %917 = vmatprep.subr.mxu0 0.0
        %918 = vmatpush1.msra.mxu0 0.0
        %919 = vmatprep.subr.mxu0 0.0
        %920 = vmatpush1.msra.mxu0 0.0
        %921 = vmatprep.subr.mxu0 0.0
        %922 = vmatpush1.msra.mxu0 0.0
        %923 = vmatprep.subr.mxu0 0.0
        %924 = vmatpush1.msra.mxu0 0.0
        %925 = vmatprep.subr.mxu0 0.0
        %926 = vmatpush1.msra.mxu0 0.0
        %927 = vmatprep.subr.mxu0 0.0
        %928 = vmatpush1.msra.mxu0 0.0
        %929 = vmatprep.subr.mxu0 0.0
        %930 = vmatpush1.msra.mxu0 0.0
        %931 = vmatprep.subr.mxu0 0.0
        %932 = vmatpush1.msra.mxu0 0.0
        %933 = vmatprep.subr.mxu0 0.0
        %934 = vmatpush1.msra.mxu0 0.0
        %935 = vmatprep.subr.mxu0 0.0
        %936 = vmatpush1.msra.mxu0 0.0
        %937 = vmatprep.subr.mxu0 0.0
        %938 = vmatpush1.msra.mxu0 0.0
        %939 = vmatprep.subr.mxu0 0.0
        %940 = vmatpush1.msra.mxu0 0.0
        %941 = vmatprep.subr.mxu0 0.0
        %942 = vmatpush1.msra.mxu0 0.0
        %943 = vmatprep.subr.mxu0 0.0
        %944 = vmatpush1.msra.mxu0 0.0
        %945 = vmatprep.subr.mxu0 0.0
        %946 = vmatpush1.msra.mxu0 0.0
        %947 = vmatprep.subr.mxu0 0.0
        %948 = vmatpush1.msra.mxu0 0.0
        %949 = vmatprep.subr.mxu0 0.0
        %950 = vmatpush1.msra.mxu0 0.0
        %951 = vmatprep.subr.mxu0 0.0
        %952 = vmatpush1.msra.mxu0 0.0
        %953 = vmatprep.subr.mxu0 0.0
        %954 = vmatpush1.msra.mxu0 0.0
        %955 = vmatprep.subr.mxu0 0.0
        %956 = vmatpush1.msra.mxu0 0.0
        %957 = vmatprep.subr.mxu0 0.0
        %958 = vmatpush1.msra.mxu0 0.0
        %959 = vmatprep.subr.mxu0 0.0
        %960 = vmatpush1.msra.mxu0 0.0
        %961 = vmatprep.subr.mxu0 0.0
        %962 = vmatpush1.msra.mxu0 0.0
        %963 = vmatprep.mubr.f32.mxu0 0.0
        %964 = vmatmul.mubr.f32.gmra.mrb[0].mxu0 %v894
        %v965 = vpop.f32.mrb[0].mxu0
        %v966 = vadd.f32 0.0, %v965
        %v967 = vpop.f32.mrb[0].mxu0
        %968 = vmatprep.mubr.f32.mxu0 0.0
        %969 = vmatmul.mubr.f32.gmra.mrb[0].mxu0 %v897
        %v970 = vpop.f32.mrb[0].mxu0
        %v971 = vadd.f32 0.0, %v970
        %v972 = vpop.f32.mrb[0].mxu0
        %973 = vdwg.mxu0
        %v974 = vmul.f32 %v859, %v859
        %975 = vxpose.xlu0.b32.start [1/16] %v974, 128
        %976 = vxpose.xlu0.b32.cont [2/16] 0.0, 128
        %977 = vxpose.xlu0.b32.cont [3/16] 0.0, 128
        %978 = vxpose.xlu0.b32.cont [4/16] 0.0, 128
        %979 = vxpose.xlu0.b32.cont [5/16] 0.0, 128
        %980 = vxpose.xlu0.b32.cont [6/16] 0.0, 128
        %981 = vxpose.xlu0.b32.cont [7/16] 0.0, 128
        %982 = vxpose.xlu0.b32.cont [8/16] 0.0, 128
        %983 = vxpose.xlu0.b32.cont [9/16] 0.0, 128
        %984 = vxpose.xlu0.b32.cont [10/16] 0.0, 128
        %985 = vxpose.xlu0.b32.cont [11/16] 0.0, 128
        %986 = vxpose.xlu0.b32.cont [12/16] 0.0, 128
        %987 = vxpose.xlu0.b32.cont [13/16] 0.0, 128
        %988 = vxpose.xlu0.b32.cont [14/16] 0.0, 128
        %989 = vxpose.xlu0.b32.cont [15/16] 0.0, 128
        %990 = vxpose.xlu0.b32.end [16/16] 0.0, 128
        %v991 = vpop.trf.xlu0
        %v992 = vpop.trf.xlu0
        %v993 = vpop.trf.xlu0
        %v994 = vpop.trf.xlu0
        %v995 = vpop.trf.xlu0
        %v996 = vpop.trf.xlu0
        %v997 = vpop.trf.xlu0
        %v998 = vpop.trf.xlu0
        %v999 = vpop.trf.xlu0
        %v1000 = vpop.trf.xlu0
        %v1001 = vpop.trf.xlu0
        %v1002 = vpop.trf.xlu0
        %v1003 = vpop.trf.xlu0
        %v1004 = vpop.trf.xlu0
        %v1005 = vpop.trf.xlu0
        %v1006 = vpop.trf.xlu0
        %v1008 = vsel %vm849, %v991, 0
        %v1011 = vsel %vm849, %v992, 0
        %1013 = vmatprep.subr.mxu0 0.0
        %1014 = vmatpush1.msra.mxu0 1.0
        %1015 = vmatprep.subr.mxu0 0.0
        %1016 = vmatpush1.msra.mxu0 0.0
        %1017 = vmatprep.subr.mxu0 0.0
        %1018 = vmatpush1.msra.mxu0 0.0
        %1019 = vmatprep.subr.mxu0 0.0
        %1020 = vmatpush1.msra.mxu0 0.0
        %1021 = vmatprep.subr.mxu0 0.0
        %1022 = vmatpush1.msra.mxu0 0.0
        %1023 = vmatprep.subr.mxu0 0.0
        %1024 = vmatpush1.msra.mxu0 0.0
        %1025 = vmatprep.subr.mxu0 0.0
        %1026 = vmatpush1.msra.mxu0 0.0
        %1027 = vmatprep.subr.mxu0 0.0
        %1028 = vmatpush1.msra.mxu0 0.0
        %1029 = vmatprep.subr.mxu0 0.0
        %1030 = vmatpush1.msra.mxu0 0.0
        %1031 = vmatprep.subr.mxu0 0.0
        %1032 = vmatpush1.msra.mxu0 0.0
        %1033 = vmatprep.subr.mxu0 0.0
        %1034 = vmatpush1.msra.mxu0 0.0
        %1035 = vmatprep.subr.mxu0 0.0
        %1036 = vmatpush1.msra.mxu0 0.0
        %1037 = vmatprep.subr.mxu0 0.0
        %1038 = vmatpush1.msra.mxu0 0.0
        %1039 = vmatprep.subr.mxu0 0.0
        %1040 = vmatpush1.msra.mxu0 0.0
        %1041 = vmatprep.subr.mxu0 0.0
        %1042 = vmatpush1.msra.mxu0 0.0
        %1043 = vmatprep.subr.mxu0 0.0
        %1044 = vmatpush1.msra.mxu0 0.0
        %1045 = vmatprep.subr.mxu0 0.0
        %1046 = vmatpush1.msra.mxu0 0.0
        %1047 = vmatprep.subr.mxu0 0.0
        %1048 = vmatpush1.msra.mxu0 0.0
        %1049 = vmatprep.subr.mxu0 0.0
        %1050 = vmatpush1.msra.mxu0 0.0
        %1051 = vmatprep.subr.mxu0 0.0
        %1052 = vmatpush1.msra.mxu0 0.0
        %1053 = vmatprep.subr.mxu0 0.0
        %1054 = vmatpush1.msra.mxu0 0.0
        %1055 = vmatprep.subr.mxu0 0.0
        %1056 = vmatpush1.msra.mxu0 0.0
        %1057 = vmatprep.subr.mxu0 0.0
        %1058 = vmatpush1.msra.mxu0 0.0
        %1059 = vmatprep.subr.mxu0 0.0
        %1060 = vmatpush1.msra.mxu0 0.0
        %1061 = vmatprep.subr.mxu0 0.0
        %1062 = vmatpush1.msra.mxu0 0.0
        %1063 = vmatprep.subr.mxu0 0.0
        %1064 = vmatpush1.msra.mxu0 0.0
        %1065 = vmatprep.subr.mxu0 0.0
        %1066 = vmatpush1.msra.mxu0 0.0
        %1067 = vmatprep.subr.mxu0 0.0
        %1068 = vmatpush1.msra.mxu0 0.0
        %1069 = vmatprep.subr.mxu0 0.0
        %1070 = vmatpush1.msra.mxu0 0.0
        %1071 = vmatprep.subr.mxu0 0.0
        %1072 = vmatpush1.msra.mxu0 0.0
        %1073 = vmatprep.subr.mxu0 0.0
        %1074 = vmatpush1.msra.mxu0 0.0
        %1075 = vmatprep.subr.mxu0 0.0
        %1076 = vmatpush1.msra.mxu0 0.0
        %1077 = vmatprep.mubr.f32.mxu0 0.0
        %1078 = vmatmul.mubr.f32.gmra.mrb[0].mxu0 %v1008
        %v1079 = vpop.f32.mrb[0].mxu0
        %v1080 = vadd.f32 0.0, %v1079
        %v1081 = vpop.f32.mrb[0].mxu0
        %1082 = vmatprep.mubr.f32.mxu0 0.0
        %1083 = vmatmul.mubr.f32.gmra.mrb[0].mxu0 %v1011
        %v1084 = vpop.f32.mrb[0].mxu0
        %v1085 = vadd.f32 0.0, %v1084
        %v1086 = vpop.f32.mrb[0].mxu0
        %1087 = vdwg.mxu0
        %1089 = vset.pattern.permute.xlu0 0
        %1090 = vperm.xlu0 %1089, %v1080
        %v1091 = vpop.permute.xlu0 %1090
        %1094 = vset.pattern.permute.xlu0 0
        %1095 = vperm.xlu0 %1094, %v1085
        %v1096 = vpop.permute.xlu0 %1095
        %v1098 = vadd.f32 %v1091, %v856
        %v1099 = vadd.f32 %v1096, %v856
        %v1100 = vmul.f32 %v966, 2.0
        %v1101 = vmul.f32 %v971, 2.0
        %v1102 = vsub.f32 %v1098, %v1100
        %v1103 = vsub.f32 %v1099, %v1101
        %v1104 = vlaneseq
        %v1105 = vand.u32 %v1104, 127
        %v1106 = vsel %vm849, %v1102, inf
        %1107 = vmin.xlane.f32.xlu0 %v1106
        %v1108 = vpop.xlane.xlu0 %1107
        %v1109 = vsel %vm849, %v1103, inf
        %1110 = vmin.xlane.f32.xlu0 %v1109
        %v1111 = vpop.xlane.xlu0 %1110
        %vm1112 = vcmp.le.f32.partialorder %v1102, %v1108
        %vm1113 = vcmp.le.f32.partialorder %v1103, %v1111
        %v1114 = vsel %vm1112, %v1105, 8
        %v1115 = vsel %vm1113, %v1105, 8
        %v1116 = vsel %vm849, %v1114, 2147483647
        %v1117 = vand.u32 %v1116, 65535
        %v1118 = vshra.s32 %v1116, 16
        %v1119 = vcvt.s32.f32 %v1117
        %v1120 = vcvt.s32.f32 %v1118
        %1121 = vmin.xlane.f32.xlu0 %v1120
        %v1122 = vpop.xlane.xlu0 %1121
        %vm1123 = vcmp.eq.f32.partialorder %v1120, %v1122
        %v1124 = vsel %vm1123, %v1119, inf
        %1125 = vmin.xlane.f32.xlu0 %v1124
        %v1126 = vpop.xlane.xlu0 %1125
        %v1127 = vcvt.f32.s32 %v1126
        %v1128 = vcvt.f32.s32 %v1122
        %v1129 = vshll.u32 %v1128, 16
        %v1130 = vadd.s32 %v1129, %v1127
        %v1131 = vsel %vm849, %v1115, 2147483647
        %v1132 = vand.u32 %v1131, 65535
        %v1133 = vshra.s32 %v1131, 16
        %v1134 = vcvt.s32.f32 %v1132
        %v1135 = vcvt.s32.f32 %v1133
        %1136 = vmin.xlane.f32.xlu0 %v1135
        %v1137 = vpop.xlane.xlu0 %1136
        %vm1138 = vcmp.eq.f32.partialorder %v1135, %v1137
        %v1139 = vsel %vm1138, %v1134, inf
        %1140 = vmin.xlane.f32.xlu0 %v1139
        %v1141 = vpop.xlane.xlu0 %1140
        %v1142 = vcvt.f32.s32 %v1141
        %v1143 = vcvt.f32.s32 %v1137
        %v1144 = vshll.u32 %v1143, 16
        %v1145 = vadd.s32 %v1144, %v1142
        %vm1146 = vcmp.eq.s32.totalorder %v1105, %v1130
        %vm1147 = vcmp.eq.s32.totalorder %v1105, %v1145
        %v1148 = vadd.f32 %v1108, 1e-08
        %v1149 = vadd.f32 %v1111, 1e-08
        %v1150 = vrcp.pop %v1148
        %v1151 = vmul.f32 1.0, %v1150
        %v1152 = vrcp.pop %v1149
        %v1153 = vmul.f32 1.0, %v1152
        %v1154 = vsel %vm1146, %v1151, 0.0
        %v1155 = vsel %vm1147, %v1153, 0.0
        %v1156 = vadd.f32 %v1154, 0.0
        %v1157 = vadd.f32 %v1155, 0.0
        %v1158 = vadd.f32 %v1151, 0.0
        %v1159 = vadd.f32 %v1153, 0.0
        %v1160 = vsel %vm1146, inf, %v1102
        %v1161 = vsel %vm1147, inf, %v1103
        %v1162 = vsel %vm849, %v1160, inf
        %1163 = vmin.xlane.f32.xlu0 %v1162
        %v1164 = vpop.xlane.xlu0 %1163
        %v1165 = vsel %vm849, %v1161, inf
        %1166 = vmin.xlane.f32.xlu0 %v1165
        %v1167 = vpop.xlane.xlu0 %1166
        %vm1168 = vcmp.le.f32.partialorder %v1160, %v1164
        %vm1169 = vcmp.le.f32.partialorder %v1161, %v1167
        %v1170 = vsel %vm1168, %v1105, 8
        %v1171 = vsel %vm1169, %v1105, 8
        %v1172 = vsel %vm849, %v1170, 2147483647
        %v1173 = vand.u32 %v1172, 65535
        %v1174 = vshra.s32 %v1172, 16
        %v1175 = vcvt.s32.f32 %v1173
        %v1176 = vcvt.s32.f32 %v1174
        %1177 = vmin.xlane.f32.xlu0 %v1176
        %v1178 = vpop.xlane.xlu0 %1177
        %vm1179 = vcmp.eq.f32.partialorder %v1176, %v1178
        %v1180 = vsel %vm1179, %v1175, inf
        %1181 = vmin.xlane.f32.xlu0 %v1180
        %v1182 = vpop.xlane.xlu0 %1181
        %v1183 = vcvt.f32.s32 %v1182
        %v1184 = vcvt.f32.s32 %v1178
        %v1185 = vshll.u32 %v1184, 16
        %v1186 = vadd.s32 %v1185, %v1183
        %v1187 = vsel %vm849, %v1171, 2147483647
        %v1188 = vand.u32 %v1187, 65535
        %v1189 = vshra.s32 %v1187, 16
        %v1190 = vcvt.s32.f32 %v1188
        %v1191 = vcvt.s32.f32 %v1189
        %1192 = vmin.xlane.f32.xlu0 %v1191
        %v1193 = vpop.xlane.xlu0 %1192
        %vm1194 = vcmp.eq.f32.partialorder %v1191, %v1193
        %v1195 = vsel %vm1194, %v1190, inf
        %1196 = vmin.xlane.f32.xlu0 %v1195
        %v1197 = vpop.xlane.xlu0 %1196
        %v1198 = vcvt.f32.s32 %v1197
        %v1199 = vcvt.f32.s32 %v1193
        %v1200 = vshll.u32 %v1199, 16
        %v1201 = vadd.s32 %v1200, %v1198
        %vm1202 = vcmp.eq.s32.totalorder %v1105, %v1186
        %vm1203 = vcmp.eq.s32.totalorder %v1105, %v1201
        %v1204 = vadd.f32 %v1164, 1e-08
        %v1205 = vadd.f32 %v1167, 1e-08
        %v1206 = vrcp.pop %v1204
        %v1207 = vmul.f32 1.0, %v1206
        %v1208 = vrcp.pop %v1205
        %v1209 = vmul.f32 1.0, %v1208
        %v1210 = vsel %vm1202, %v1207, 0.0
        %v1211 = vsel %vm1203, %v1209, 0.0
        %v1212 = vadd.f32 %v1156, %v1210
        %v1213 = vadd.f32 %v1157, %v1211
        %v1214 = vadd.f32 %v1158, %v1207
        %v1215 = vadd.f32 %v1159, %v1209
        %v1216 = vsel %vm1202, inf, %v1160
        %v1217 = vsel %vm1203, inf, %v1161
        %v1218 = vsel %vm849, %v1216, inf
        %1219 = vmin.xlane.f32.xlu0 %v1218
        %v1220 = vpop.xlane.xlu0 %1219
        %v1221 = vsel %vm849, %v1217, inf
        %1222 = vmin.xlane.f32.xlu0 %v1221
        %v1223 = vpop.xlane.xlu0 %1222
        %vm1224 = vcmp.le.f32.partialorder %v1216, %v1220
        %vm1225 = vcmp.le.f32.partialorder %v1217, %v1223
        %v1226 = vsel %vm1224, %v1105, 8
        %v1227 = vsel %vm1225, %v1105, 8
        %v1228 = vsel %vm849, %v1226, 2147483647
        %v1229 = vand.u32 %v1228, 65535
        %v1230 = vshra.s32 %v1228, 16
        %v1231 = vcvt.s32.f32 %v1229
        %v1232 = vcvt.s32.f32 %v1230
        %1233 = vmin.xlane.f32.xlu0 %v1232
        %v1234 = vpop.xlane.xlu0 %1233
        %vm1235 = vcmp.eq.f32.partialorder %v1232, %v1234
        %v1236 = vsel %vm1235, %v1231, inf
        %1237 = vmin.xlane.f32.xlu0 %v1236
        %v1238 = vpop.xlane.xlu0 %1237
        %v1239 = vcvt.f32.s32 %v1238
        %v1240 = vcvt.f32.s32 %v1234
        %v1241 = vshll.u32 %v1240, 16
        %v1242 = vadd.s32 %v1241, %v1239
        %v1243 = vsel %vm849, %v1227, 2147483647
        %v1244 = vand.u32 %v1243, 65535
        %v1245 = vshra.s32 %v1243, 16
        %v1246 = vcvt.s32.f32 %v1244
        %v1247 = vcvt.s32.f32 %v1245
        %1248 = vmin.xlane.f32.xlu0 %v1247
        %v1249 = vpop.xlane.xlu0 %1248
        %vm1250 = vcmp.eq.f32.partialorder %v1247, %v1249
        %v1251 = vsel %vm1250, %v1246, inf
        %1252 = vmin.xlane.f32.xlu0 %v1251
        %v1253 = vpop.xlane.xlu0 %1252
        %v1254 = vcvt.f32.s32 %v1253
        %v1255 = vcvt.f32.s32 %v1249
        %v1256 = vshll.u32 %v1255, 16
        %v1257 = vadd.s32 %v1256, %v1254
        %vm1258 = vcmp.eq.s32.totalorder %v1105, %v1242
        %vm1259 = vcmp.eq.s32.totalorder %v1105, %v1257
        %v1260 = vadd.f32 %v1220, 1e-08
        %v1261 = vadd.f32 %v1223, 1e-08
        %v1262 = vrcp.pop %v1260
        %v1263 = vmul.f32 1.0, %v1262
        %v1264 = vrcp.pop %v1261
        %v1265 = vmul.f32 1.0, %v1264
        %v1266 = vsel %vm1258, %v1263, 0.0
        %v1267 = vsel %vm1259, %v1265, 0.0
        %v1268 = vadd.f32 %v1212, %v1266
        %v1269 = vadd.f32 %v1213, %v1267
        %v1270 = vadd.f32 %v1214, %v1263
        %v1271 = vadd.f32 %v1215, %v1265
        %v1272 = vrcp.pop %v1270
        %v1273 = vmul.f32 1.0, %v1272
        %v1274 = vrcp.pop %v1271
        %v1275 = vmul.f32 1.0, %v1274
        %v1276 = vmul.f32 %v1268, %v1273
        %v1277 = vmul.f32 %v1269, %v1275
        %v1278 = vpack.c.bf16 %v1277, %v1276
        %v1280 = vsel %vm849, %v1278, 0
        %v1283 = vsel %vm849, %v858, 0
        %1285 = vmatprep.subr.bf16.mxu0 0
        %1286 = vmatpush1.bf16.xpose.msra.mxu0 %v1283
        %1287 = vmatprep.subr.bf16.mxu0 0
        %1288 = vmatpush1.bf16.xpose.msra.mxu0 0
        %1289 = vmatprep.subr.bf16.mxu0 0
        %1290 = vmatpush1.bf16.xpose.msra.mxu0 0
        %1291 = vmatprep.subr.bf16.mxu0 0
        %1292 = vmatpush1.bf16.xpose.msra.mxu0 0
        %1293 = vmatprep.subr.bf16.mxu0 0
        %1294 = vmatpush1.bf16.xpose.msra.mxu0 0
        %1295 = vmatprep.subr.bf16.mxu0 0
        %1296 = vmatpush1.bf16.xpose.msra.mxu0 0
        %1297 = vmatprep.subr.bf16.mxu0 0
        %1298 = vmatpush1.bf16.xpose.msra.mxu0 0
        %1299 = vmatprep.subr.bf16.mxu0 0
        %1300 = vmatpush1.bf16.xpose.msra.mxu0 0
        %1301 = vmatprep.subr.bf16.mxu0 0
        %1302 = vmatpush1.bf16.xpose.msra.mxu0 0
        %1303 = vmatprep.subr.bf16.mxu0 0
        %1304 = vmatpush1.bf16.xpose.msra.mxu0 0
        %1305 = vmatprep.subr.bf16.mxu0 0
        %1306 = vmatpush1.bf16.xpose.msra.mxu0 0
        %1307 = vmatprep.subr.bf16.mxu0 0
        %1308 = vmatpush1.bf16.xpose.msra.mxu0 0
        %1309 = vmatprep.subr.bf16.mxu0 0
        %1310 = vmatpush1.bf16.xpose.msra.mxu0 0
        %1311 = vmatprep.subr.bf16.mxu0 0
        %1312 = vmatpush1.bf16.xpose.msra.mxu0 0
        %1313 = vmatprep.subr.bf16.mxu0 0
        %1314 = vmatpush1.bf16.xpose.msra.mxu0 0
        %1315 = vmatprep.subr.bf16.mxu0 0
        %1316 = vmatpush1.bf16.xpose.msra.mxu0 0
        %1317 = vmatprep.mubr.bf16.mxu0 0
        %1318 = vmatmul.mubr.bf16.gmra.mrb[0].mxu0 %v1280
        %v1319 = vpop.f32.mrb[0].mxu0
        %v1320 = vadd.f32 0.0, %v1319
        %v1321 = vpop.f32.mrb[0].mxu0
        %v1322 = vpop.f32.mrb[0].mxu0
        %v1323 = vadd.f32 0.0, %v1322
        %v1324 = vpop.f32.mrb[0].mxu0
        %1325 = vdwg.mxu0
        %v1326 = vpack.c.bf16 %v860, %v860
        %v1327 = vld [vmem:[#allocation14] sm:$0xf]
        %v1328 = vpack.c.bf16 %v1323, %v1320
        %v1329 = vld [vmem:[#allocation15] sm:$0xf]
        %v1331 = vsel %vm849, %v1328, 0
        %vm1333 = vcmask 1043456
        %v1335 = vsel %vm1333, %v1329, 0
        %1337 = vmatprep.subr.bf16.mxu0 0
        %1338 = vmatpush1.bf16.msra.mxu0 %v1335
        %1339 = vmatprep.subr.bf16.mxu0 0
        %1340 = vmatpush1.bf16.msra.mxu0 0
        %1341 = vmatprep.subr.bf16.mxu0 0
        %1342 = vmatpush1.bf16.msra.mxu0 0
        %1343 = vmatprep.subr.bf16.mxu0 0
        %1344 = vmatpush1.bf16.msra.mxu0 0
        %1345 = vmatprep.subr.bf16.mxu0 0
        %1346 = vmatpush1.bf16.msra.mxu0 0
        %1347 = vmatprep.subr.bf16.mxu0 0
        %1348 = vmatpush1.bf16.msra.mxu0 0
        %1349 = vmatprep.subr.bf16.mxu0 0
        %1350 = vmatpush1.bf16.msra.mxu0 0
        %1351 = vmatprep.subr.bf16.mxu0 0
        %1352 = vmatpush1.bf16.msra.mxu0 0
        %1353 = vmatprep.subr.bf16.mxu0 0
        %1354 = vmatpush1.bf16.msra.mxu0 0
        %1355 = vmatprep.subr.bf16.mxu0 0
        %1356 = vmatpush1.bf16.msra.mxu0 0
        %1357 = vmatprep.subr.bf16.mxu0 0
        %1358 = vmatpush1.bf16.msra.mxu0 0
        %1359 = vmatprep.subr.bf16.mxu0 0
        %1360 = vmatpush1.bf16.msra.mxu0 0
        %1361 = vmatprep.subr.bf16.mxu0 0
        %1362 = vmatpush1.bf16.msra.mxu0 0
        %1363 = vmatprep.subr.bf16.mxu0 0
        %1364 = vmatpush1.bf16.msra.mxu0 0
        %1365 = vmatprep.subr.bf16.mxu0 0
        %1366 = vmatpush1.bf16.msra.mxu0 0
        %1367 = vmatprep.subr.bf16.mxu0 0
        %1368 = vmatpush1.bf16.msra.mxu0 0
        %1369 = vmatprep.mubr.bf16.mxu0 0
        %1370 = vmatmul.mubr.bf16.gmra.mrb[0].mxu0 %v1331
        %v1371 = vpop.f32.mrb[0].mxu0
        %v1372 = vadd.f32 0.0, %v1371
        %v1373 = vpop.f32.mrb[0].mxu0
        %v1374 = vpop.f32.mrb[0].mxu0
        %v1375 = vadd.f32 0.0, %v1374
        %v1376 = vpop.f32.mrb[0].mxu0
        %1377 = vdwg.mxu0
        %1378 = vxpose.xlu0.c.b16.start [1/8] %v1326, 128
        %1379 = vxpose.xlu0.c.b16.cont [2/8] 0, 128
        %1380 = vxpose.xlu0.c.b16.cont [3/8] 0, 128
        %1381 = vxpose.xlu0.c.b16.cont [4/8] 0, 128
        %1382 = vxpose.xlu0.c.b16.cont [5/8] 0, 128
        %1383 = vxpose.xlu0.c.b16.cont [6/8] 0, 128
        %1384 = vxpose.xlu0.c.b16.cont [7/8] 0, 128
        %1385 = vxpose.xlu0.c.b16.end [8/8] 0, 128
        %v1386 = vpop.trf.xlu0
        %v1387 = vpop.trf.xlu0
        %v1388 = vpop.trf.xlu0
        %v1389 = vpop.trf.xlu0
        %v1390 = vpop.trf.xlu0
        %v1391 = vpop.trf.xlu0
        %v1392 = vpop.trf.xlu0
        %v1393 = vpop.trf.xlu0
        %v1395 = vsel %vm849, %v1386, 0
        %v1398 = vsel %vm1333, %v1327, 0
        %1400 = vmatprep.subr.bf16.mxu0 0
        %1401 = vmatpush1.bf16.msra.mxu0 %v1398
        %1402 = vmatprep.subr.bf16.mxu0 0
        %1403 = vmatpush1.bf16.msra.mxu0 0
        %1404 = vmatprep.subr.bf16.mxu0 0
        %1405 = vmatpush1.bf16.msra.mxu0 0
        %1406 = vmatprep.subr.bf16.mxu0 0
        %1407 = vmatpush1.bf16.msra.mxu0 0
        %1408 = vmatprep.subr.bf16.mxu0 0
        %1409 = vmatpush1.bf16.msra.mxu0 0
        %1410 = vmatprep.subr.bf16.mxu0 0
        %1411 = vmatpush1.bf16.msra.mxu0 0
        %1412 = vmatprep.subr.bf16.mxu0 0
        %1413 = vmatpush1.bf16.msra.mxu0 0
        %1414 = vmatprep.subr.bf16.mxu0 0
        %1415 = vmatpush1.bf16.msra.mxu0 0
        %1416 = vmatprep.subr.bf16.mxu0 0
        %1417 = vmatpush1.bf16.msra.mxu0 0
        %1418 = vmatprep.subr.bf16.mxu0 0
        %1419 = vmatpush1.bf16.msra.mxu0 0
        %1420 = vmatprep.subr.bf16.mxu0 0
        %1421 = vmatpush1.bf16.msra.mxu0 0
        %1422 = vmatprep.subr.bf16.mxu0 0
        %1423 = vmatpush1.bf16.msra.mxu0 0
        %1424 = vmatprep.subr.bf16.mxu0 0
        %1425 = vmatpush1.bf16.msra.mxu0 0
        %1426 = vmatprep.subr.bf16.mxu0 0
        %1427 = vmatpush1.bf16.msra.mxu0 0
        %1428 = vmatprep.subr.bf16.mxu0 0
        %1429 = vmatpush1.bf16.msra.mxu0 0
        %1430 = vmatprep.subr.bf16.mxu0 0
        %1431 = vmatpush1.bf16.msra.mxu0 0
        %1432 = vmatprep.mubr.bf16.mxu0 0
        %1433 = vmatmul.mubr.bf16.gmra.mrb[0].mxu0 %v1395
        %v1434 = vpop.f32.mrb[0].mxu0
        %v1435 = vadd.f32 %v1372, %v1434
        %v1436 = vpop.f32.mrb[0].mxu0
        %v1437 = vpop.f32.mrb[0].mxu0
        %v1438 = vadd.f32 %v1375, %v1437
        %v1439 = vpop.f32.mrb[0].mxu0
        %1440 = vdwg.mxu0
        %v1441 = vld [vmem:[#allocation17] sm:$0x1]
        %v1443 = vlaneseq
        %v1444 = vshrl.u32 %v1443, 7
        %v1445 = vsub.s32 0, %v1444
        %v1446 = vrot.slane %v1441, %v1445
        %v1448 = vadd.f32 %v1435, %v1446
        %v1449 = vadd.f32 %v1438, %v1446
        %v1450 = vmax.f32 %v1448, 0.0
        %v1451 = vmax.f32 %v1449, 0.0
        %1452 = vst [vmem:[#allocation2] sm:$0xff] %v1450
        %1453 = vst [vmem:[#allocation2 + $0x8] sm:$0xff] %v1451
        %v1454 = vld [vmem:[#allocation2] sm:$0xff]
        %v1455 = vld [vmem:[#allocation2 + $0x8] sm:$0xff]
        %v1456 = vpack.c.bf16 %v1455, %v1454
        %v1457 = vld [vmem:[#allocation18] sm:$0xf]
        %v1458 = vld [vmem:[#allocation18 + $0x4] sm:$0xf]
        %v1459 = vld [vmem:[#allocation18 + $0x8] sm:$0xf]
        %v1460 = vld [vmem:[#allocation18 + $0xc] sm:$0xf]
        %v1461 = vld [vmem:[#allocation18 + $0x10] sm:$0xf]
        %v1462 = vld [vmem:[#allocation18 + $0x14] sm:$0xf]
        %v1463 = vld [vmem:[#allocation18 + $0x18] sm:$0xf]
        %v1464 = vld [vmem:[#allocation18 + $0x1c] sm:$0xf]
        %v1465 = vld [vmem:[#allocation18 + $0x20] sm:$0xf]
        %v1466 = vld [vmem:[#allocation18 + $0x24] sm:$0xf]
        %v1467 = vld [vmem:[#allocation18 + $0x28] sm:$0xf]
        %v1468 = vld [vmem:[#allocation18 + $0x2c] sm:$0xf]
        %v1469 = vld [vmem:[#allocation18 + $0x30] sm:$0xf]
        %v1470 = vld [vmem:[#allocation18 + $0x34] sm:$0xf]
        %v1471 = vld [vmem:[#allocation18 + $0x38] sm:$0xf]
        %v1472 = vld [vmem:[#allocation18 + $0x3c] sm:$0xf]
        %v1489 = vunpack.c.l.b16 %v1457
        %v1490 = vunpack.c.l.b16 %v1458
        %v1491 = vunpack.c.l.b16 %v1459
        %v1492 = vunpack.c.l.b16 %v1460
        %v1493 = vunpack.c.l.b16 %v1461
        %v1494 = vunpack.c.l.b16 %v1462
        %v1495 = vunpack.c.l.b16 %v1463
        %v1496 = vunpack.c.l.b16 %v1464
        %v1497 = vunpack.c.l.b16 %v1465
        %v1498 = vunpack.c.l.b16 %v1466
        %v1499 = vunpack.c.l.b16 %v1467
        %v1500 = vunpack.c.l.b16 %v1468
        %v1501 = vunpack.c.l.b16 %v1469
        %v1502 = vunpack.c.l.b16 %v1470
        %v1503 = vunpack.c.l.b16 %v1471
        %v1504 = vunpack.c.l.b16 %v1472
        %v1505 = vpack.c.b16 %v1490, %v1489
        %v1506 = vpack.c.b16 %v1492, %v1491
        %v1507 = vpack.c.b16 %v1494, %v1493
        %v1508 = vpack.c.b16 %v1496, %v1495
        %v1509 = vpack.c.b16 %v1498, %v1497
        %v1510 = vpack.c.b16 %v1500, %v1499
        %v1511 = vpack.c.b16 %v1502, %v1501
        %v1512 = vpack.c.b16 %v1504, %v1503
        %1521 = vmatprep.subr.bf16.mxu0 0
        %1522 = vmatpush1.bf16.msra.mxu0 %v1505
        %1523 = vmatprep.subr.bf16.mxu0 0
        %1524 = vmatpush1.bf16.msra.mxu0 %v1506
        %1525 = vmatprep.subr.bf16.mxu0 0
        %1526 = vmatpush1.bf16.msra.mxu0 %v1507
        %1527 = vmatprep.subr.bf16.mxu0 0
        %1528 = vmatpush1.bf16.msra.mxu0 %v1508
        %1529 = vmatprep.subr.bf16.mxu0 0
        %1530 = vmatpush1.bf16.msra.mxu0 %v1509
        %1531 = vmatprep.subr.bf16.mxu0 0
        %1532 = vmatpush1.bf16.msra.mxu0 %v1510
        %1533 = vmatprep.subr.bf16.mxu0 0
        %1534 = vmatpush1.bf16.msra.mxu0 %v1511
        %1535 = vmatprep.subr.bf16.mxu0 0
        %1536 = vmatpush1.bf16.msra.mxu0 %v1512
        %1537 = vmatprep.subr.bf16.mxu0 0
        %1538 = vmatpush1.bf16.msra.mxu0 0
        %1539 = vmatprep.subr.bf16.mxu0 0
        %1540 = vmatpush1.bf16.msra.mxu0 0
        %1541 = vmatprep.subr.bf16.mxu0 0
        %1542 = vmatpush1.bf16.msra.mxu0 0
        %1543 = vmatprep.subr.bf16.mxu0 0
        %1544 = vmatpush1.bf16.msra.mxu0 0
        %1545 = vmatprep.subr.bf16.mxu0 0
        %1546 = vmatpush1.bf16.msra.mxu0 0
        %1547 = vmatprep.subr.bf16.mxu0 0
        %1548 = vmatpush1.bf16.msra.mxu0 0
        %1549 = vmatprep.subr.bf16.mxu0 0
        %1550 = vmatpush1.bf16.msra.mxu0 0
        %1551 = vmatprep.subr.bf16.mxu0 0
        %1552 = vmatpush1.bf16.msra.mxu0 0
        %1553 = vmatprep.mubr.bf16.mxu0 0
        %1554 = vmatmul.mubr.bf16.gmra.mrb[0].mxu0 %v1456
        %v1555 = vpop.f32.mrb[0].mxu0
        %v1556 = vadd.f32 0.0, %v1555
        %v1557 = vpop.f32.mrb[0].mxu0
        %v1558 = vpop.f32.mrb[0].mxu0
        %v1559 = vadd.f32 0.0, %v1558
        %v1560 = vpop.f32.mrb[0].mxu0
        %1561 = vdwg.mxu0
        %v1562 = vpack.c.bf16 %v1559, %v1556
        %1563 = vst.msk [vmem:[#allocation3] sm:$0xff] %vm849, %v1562
        %v1564 = vld [vmem:[#allocation20] sm:$0xf]
        %v1565 = vld [vmem:[#allocation20 + $0x4] sm:$0xf]
        %v1566 = vld [vmem:[#allocation20 + $0x8] sm:$0xf]
        %v1567 = vld [vmem:[#allocation20 + $0xc] sm:$0xf]
        %v1568 = vld [vmem:[#allocation20 + $0x10] sm:$0xf]
        %v1569 = vld [vmem:[#allocation20 + $0x14] sm:$0xf]
        %v1570 = vld [vmem:[#allocation20 + $0x18] sm:$0xf]
        %v1571 = vld [vmem:[#allocation20 + $0x1c] sm:$0xf]
        %v1572 = vld [vmem:[#allocation20 + $0x20] sm:$0xf]
        %v1573 = vld [vmem:[#allocation20 + $0x24] sm:$0xf]
        %v1574 = vld [vmem:[#allocation20 + $0x28] sm:$0xf]
        %v1575 = vld [vmem:[#allocation20 + $0x2c] sm:$0xf]
        %v1576 = vld [vmem:[#allocation20 + $0x30] sm:$0xf]
        %v1577 = vld [vmem:[#allocation20 + $0x34] sm:$0xf]
        %v1578 = vld [vmem:[#allocation20 + $0x38] sm:$0xf]
        %v1579 = vld [vmem:[#allocation20 + $0x3c] sm:$0xf]
        %v1580 = vld [vmem:[#allocation21] sm:$0x1]
        %v1582 = vlaneseq
        %v1583 = vshrl.u32 %v1582, 7
        %v1584 = vsub.s32 0, %v1583
        %v1585 = vrot.slane %v1580, %v1584
        %v1603 = vunpack.c.l.b16 %v1564
        %v1604 = vunpack.c.l.b16 %v1565
        %v1605 = vunpack.c.l.b16 %v1566
        %v1606 = vunpack.c.l.b16 %v1567
        %v1607 = vunpack.c.l.b16 %v1568
        %v1608 = vunpack.c.l.b16 %v1569
        %v1609 = vunpack.c.l.b16 %v1570
        %v1610 = vunpack.c.l.b16 %v1571
        %v1611 = vunpack.c.l.b16 %v1572
        %v1612 = vunpack.c.l.b16 %v1573
        %v1613 = vunpack.c.l.b16 %v1574
        %v1614 = vunpack.c.l.b16 %v1575
        %v1615 = vunpack.c.l.b16 %v1576
        %v1616 = vunpack.c.l.b16 %v1577
        %v1617 = vunpack.c.l.b16 %v1578
        %v1618 = vunpack.c.l.b16 %v1579
        %v1619 = vpack.c.b16 %v1604, %v1603
        %v1620 = vpack.c.b16 %v1606, %v1605
        %v1621 = vpack.c.b16 %v1608, %v1607
        %v1622 = vpack.c.b16 %v1610, %v1609
        %v1623 = vpack.c.b16 %v1612, %v1611
        %v1624 = vpack.c.b16 %v1614, %v1613
        %v1625 = vpack.c.b16 %v1616, %v1615
        %v1626 = vpack.c.b16 %v1618, %v1617
        %1635 = vmatprep.subr.bf16.mxu0 0
        %1636 = vmatpush1.bf16.msra.mxu0 %v1619
        %1637 = vmatprep.subr.bf16.mxu0 0
        %1638 = vmatpush1.bf16.msra.mxu0 %v1620
        %1639 = vmatprep.subr.bf16.mxu0 0
        %1640 = vmatpush1.bf16.msra.mxu0 %v1621
        %1641 = vmatprep.subr.bf16.mxu0 0
        %1642 = vmatpush1.bf16.msra.mxu0 %v1622
        %1643 = vmatprep.subr.bf16.mxu0 0
        %1644 = vmatpush1.bf16.msra.mxu0 %v1623
        %1645 = vmatprep.subr.bf16.mxu0 0
        %1646 = vmatpush1.bf16.msra.mxu0 %v1624
        %1647 = vmatprep.subr.bf16.mxu0 0
        %1648 = vmatpush1.bf16.msra.mxu0 %v1625
        %1649 = vmatprep.subr.bf16.mxu0 0
        %1650 = vmatpush1.bf16.msra.mxu0 %v1626
        %1651 = vmatprep.subr.bf16.mxu0 0
        %1652 = vmatpush1.bf16.msra.mxu0 0
        %1653 = vmatprep.subr.bf16.mxu0 0
        %1654 = vmatpush1.bf16.msra.mxu0 0
        %1655 = vmatprep.subr.bf16.mxu0 0
        %1656 = vmatpush1.bf16.msra.mxu0 0
        %1657 = vmatprep.subr.bf16.mxu0 0
        %1658 = vmatpush1.bf16.msra.mxu0 0
        %1659 = vmatprep.subr.bf16.mxu0 0
        %1660 = vmatpush1.bf16.msra.mxu0 0
        %1661 = vmatprep.subr.bf16.mxu0 0
        %1662 = vmatpush1.bf16.msra.mxu0 0
        %1663 = vmatprep.subr.bf16.mxu0 0
        %1664 = vmatpush1.bf16.msra.mxu0 0
        %1665 = vmatprep.subr.bf16.mxu0 0
        %1666 = vmatpush1.bf16.msra.mxu0 0
        %1667 = vmatprep.mubr.bf16.mxu0 0
        %1668 = vmatmul.mubr.bf16.gmra.mrb[0].mxu0 %v1456
        %v1669 = vpop.f32.mrb[0].mxu0
        %v1670 = vadd.f32 %v1585, %v1669
        %v1671 = vpop.f32.mrb[0].mxu0
        %v1672 = vpop.f32.mrb[0].mxu0
        %v1673 = vadd.f32 %v1585, %v1672
        %v1674 = vpop.f32.mrb[0].mxu0
        %1675 = vdwg.mxu0
        %vm1676 = vcmp.eq.s32.totalorder %v1105, 32
        %v1677 = vsel %vm1676, 1.0, %v1670
        %v1678 = vsel %vm1676, 1.0, %v1673
        %v1679 = vpack.c.bf16 %v1678, %v1677
        %1680 = vst [vmem:[#allocation4] sm:$0xff] %v1679
        %1681 = vst [vmem:[#allocation5] sm:$0xff] 0.0
        %1682 = vst [vmem:[#allocation5 + $0x8] sm:$0xff] 0.0
        %v1683 = vld [vmem:[#allocation3] sm:$0xff]
        %v1684 = vld [vmem:[#allocation3] sm:$0xff]
        %v1686 = vsel %vm849, %v1683, 0
        %v1689 = vsel %vm849, %v1684, 0
        %1691 = vmatprep.subr.bf16.mxu0 0
        %1692 = vmatpush1.bf16.xpose.msra.mxu0 %v1689
        %1693 = vmatprep.subr.bf16.mxu0 0
        %1694 = vmatpush1.bf16.xpose.msra.mxu0 0
        %1695 = vmatprep.subr.bf16.mxu0 0
        %1696 = vmatpush1.bf16.xpose.msra.mxu0 0
        %1697 = vmatprep.subr.bf16.mxu0 0
        %1698 = vmatpush1.bf16.xpose.msra.mxu0 0
        %1699 = vmatprep.subr.bf16.mxu0 0
        %1700 = vmatpush1.bf16.xpose.msra.mxu0 0
        %1701 = vmatprep.subr.bf16.mxu0 0
        %1702 = vmatpush1.bf16.xpose.msra.mxu0 0
        %1703 = vmatprep.subr.bf16.mxu0 0
        %1704 = vmatpush1.bf16.xpose.msra.mxu0 0
        %1705 = vmatprep.subr.bf16.mxu0 0
        %1706 = vmatpush1.bf16.xpose.msra.mxu0 0
        %1707 = vmatprep.subr.bf16.mxu0 0
        %1708 = vmatpush1.bf16.xpose.msra.mxu0 0
        %1709 = vmatprep.subr.bf16.mxu0 0
        %1710 = vmatpush1.bf16.xpose.msra.mxu0 0
        %1711 = vmatprep.subr.bf16.mxu0 0
        %1712 = vmatpush1.bf16.xpose.msra.mxu0 0
        %1713 = vmatprep.subr.bf16.mxu0 0
        %1714 = vmatpush1.bf16.xpose.msra.mxu0 0
        %1715 = vmatprep.subr.bf16.mxu0 0
        %1716 = vmatpush1.bf16.xpose.msra.mxu0 0
        %1717 = vmatprep.subr.bf16.mxu0 0
        %1718 = vmatpush1.bf16.xpose.msra.mxu0 0
        %1719 = vmatprep.subr.bf16.mxu0 0
        %1720 = vmatpush1.bf16.xpose.msra.mxu0 0
        %1721 = vmatprep.subr.bf16.mxu0 0
        %1722 = vmatpush1.bf16.xpose.msra.mxu0 0
        %1723 = vmatprep.mubr.bf16.mxu0 0
        %1724 = vmatmul.mubr.bf16.gmra.mrb[0].mxu0 %v1686
        %v1725 = vpop.f32.mrb[0].mxu0
        %v1726 = vadd.f32 0.0, %v1725
        %v1727 = vpop.f32.mrb[0].mxu0
        %v1728 = vpop.f32.mrb[0].mxu0
        %v1729 = vadd.f32 0.0, %v1728
        %v1730 = vpop.f32.mrb[0].mxu0
        %1731 = vdwg.mxu0
        %vm1732 = vcmask 130048
        %v1733 = vsel %vm1732, %v1726, -inf
        %1734 = vmax.xlane.f32.xlu0 %v1733
        %v1735 = vpop.xlane.xlu0 %1734
        %v1736 = vsel %vm1732, %v1729, -inf
        %1737 = vmax.xlane.f32.xlu0 %v1736
        %v1738 = vpop.xlane.xlu0 %1737
        %v1739 = vsub.f32 %v1726, %v1735
        %v1740 = vsub.f32 %v1729, %v1738
        %v1741 = vmul.f32 %v1739, 1.442695
        %v1742 = vpow.pop %v1741
        %v1743 = vmul.f32 %v1740, 1.442695
        %v1744 = vpow.pop %v1743
        %v1745 = vsel %vm1732, %v1742, 0.0
        %1746 = vadd.xlane.f32.xlu0 %v1745
        %v1747 = vpop.xlane.xlu0 %1746
        %v1748 = vsel %vm1732, %v1744, 0.0
        %1749 = vadd.xlane.f32.xlu0 %v1748
        %v1750 = vpop.xlane.xlu0 %1749
        %v1751 = vpack.c.bf16 %v1744, %v1742
        %v1752 = vrcp.pop %v1747
        %v1753 = vmul.f32 1.0, %v1752
        %v1754 = vrcp.pop %v1750
        %v1755 = vmul.f32 1.0, %v1754
        %v1756 = vld [vmem:[#allocation4] sm:$0xff]
        %v1757 = vunpack.c.l.bf16 %v1756
        %v1758 = vunpack.c.h.bf16 %v1756
        %v1759 = vmul.f32 %v1757, %v1753
        %v1760 = vmul.f32 %v1758, %v1755
        %v1761 = vpack.c.bf16 %v1760, %v1759
        %v1762 = vld [vmem:[#allocation5] sm:$0xff]
        %v1763 = vld [vmem:[#allocation5 + $0x8] sm:$0xff]
        %1764 = vxpose.xlu0.c.b16.start [1/8] %v1751, 128
        %1765 = vxpose.xlu0.c.b16.cont [2/8] 0, 128
        %1766 = vxpose.xlu0.c.b16.cont [3/8] 0, 128
        %1767 = vxpose.xlu0.c.b16.cont [4/8] 0, 128
        %1768 = vxpose.xlu0.c.b16.cont [5/8] 0, 128
        %1769 = vxpose.xlu0.c.b16.cont [6/8] 0, 128
        %1770 = vxpose.xlu0.c.b16.cont [7/8] 0, 128
        %1771 = vxpose.xlu0.c.b16.end [8/8] 0, 128
        %v1772 = vpop.trf.xlu0
        %v1773 = vpop.trf.xlu0
        %v1774 = vpop.trf.xlu0
        %v1775 = vpop.trf.xlu0
        %v1776 = vpop.trf.xlu0
        %v1777 = vpop.trf.xlu0
        %v1778 = vpop.trf.xlu0
        %v1779 = vpop.trf.xlu0
        %v1781 = vsel %vm1732, %v1772, 0
        %1783 = vmatprep.subr.bf16.mxu0 0
        %1784 = vmatpush1.bf16.msra.mxu0 %v1761
        %1785 = vmatprep.subr.bf16.mxu0 0
        %1786 = vmatpush1.bf16.msra.mxu0 0
        %1787 = vmatprep.subr.bf16.mxu0 0
        %1788 = vmatpush1.bf16.msra.mxu0 0
        %1789 = vmatprep.subr.bf16.mxu0 0
        %1790 = vmatpush1.bf16.msra.mxu0 0
        %1791 = vmatprep.subr.bf16.mxu0 0
        %1792 = vmatpush1.bf16.msra.mxu0 0
        %1793 = vmatprep.subr.bf16.mxu0 0
        %1794 = vmatpush1.bf16.msra.mxu0 0
        %1795 = vmatprep.subr.bf16.mxu0 0
        %1796 = vmatpush1.bf16.msra.mxu0 0
        %1797 = vmatprep.subr.bf16.mxu0 0
        %1798 = vmatpush1.bf16.msra.mxu0 0
        %1799 = vmatprep.subr.bf16.mxu0 0
        %1800 = vmatpush1.bf16.msra.mxu0 0
        %1801 = vmatprep.subr.bf16.mxu0 0
        %1802 = vmatpush1.bf16.msra.mxu0 0
        %1803 = vmatprep.subr.bf16.mxu0 0
        %1804 = vmatpush1.bf16.msra.mxu0 0
        %1805 = vmatprep.subr.bf16.mxu0 0
        %1806 = vmatpush1.bf16.msra.mxu0 0
        %1807 = vmatprep.subr.bf16.mxu0 0
        %1808 = vmatpush1.bf16.msra.mxu0 0
        %1809 = vmatprep.subr.bf16.mxu0 0
        %1810 = vmatpush1.bf16.msra.mxu0 0
        %1811 = vmatprep.subr.bf16.mxu0 0
        %1812 = vmatpush1.bf16.msra.mxu0 0
        %1813 = vmatprep.subr.bf16.mxu0 0
        %1814 = vmatpush1.bf16.msra.mxu0 0
        %1815 = vmatprep.mubr.bf16.mxu0 0
        %1816 = vmatmul.mubr.bf16.gmra.mrb[0].mxu0 %v1781
        %v1817 = vpop.f32.mrb[0].mxu0
        %v1818 = vadd.f32 0.0, %v1817
        %v1819 = vpop.f32.mrb[0].mxu0
        %v1820 = vpop.f32.mrb[0].mxu0
        %v1821 = vadd.f32 0.0, %v1820
        %v1822 = vpop.f32.mrb[0].mxu0
        %1823 = vdwg.mxu0
        %v1824 = vadd.f32 %v1762, %v1818
        %v1825 = vadd.f32 %v1763, %v1821
        %1826 = vst [vmem:[#allocation5] sm:$0xff] %v1824
        %1827 = vst [vmem:[#allocation5 + $0x8] sm:$0xff] %v1825
        %v1828 = vld [vmem:[#allocation5] sm:$0xff]
        %v1829 = vld [vmem:[#allocation5 + $0x8] sm:$0xff]
        %v1830 = vadd.f32 %v1828, 1e-09
        %v1831 = vadd.f32 %v1829, 1e-09
        %v1832 = vrcp.pop %v1830
        %v1833 = vmul.f32 1.0, %v1832
        %v1834 = vrcp.pop %v1831
        %v1835 = vmul.f32 1.0, %v1834
        %1837 = vset.pattern.permute.xlu0 32
        %1838 = vperm.xlu0 %1837, %v1833
        %v1839 = vpop.permute.xlu0 %1838
        %1842 = vset.pattern.permute.xlu0 32
        %1843 = vperm.xlu0 %1842, %v1835
        %v1844 = vpop.permute.xlu0 %1843
        %v1846 = vmul.f32 %v1828, %v1839
        %v1847 = vmul.f32 %v1829, %v1844
        %v1848 = vld [vmem:[#allocation2] sm:$0xff]
        %v1849 = vld [vmem:[#allocation2 + $0x8] sm:$0xff]
        %v1850 = vsub.f32 %v1848, %v1846
        %v1851 = vsub.f32 %v1849, %v1847
        %v1852 = vpack.c.bf16 %v1851, %v1850
        %v1853 = vld [vmem:[#allocation23] sm:$0xf]
        %v1854 = vld [vmem:[#allocation23 + $0x4] sm:$0xf]
        %v1855 = vld [vmem:[#allocation23 + $0x8] sm:$0xf]
        %v1856 = vld [vmem:[#allocation23 + $0xc] sm:$0xf]
        %v1857 = vld [vmem:[#allocation23 + $0x10] sm:$0xf]
        %v1858 = vld [vmem:[#allocation23 + $0x14] sm:$0xf]
        %v1859 = vld [vmem:[#allocation23 + $0x18] sm:$0xf]
        %v1860 = vld [vmem:[#allocation23 + $0x1c] sm:$0xf]
        %v1861 = vld [vmem:[#allocation23 + $0x20] sm:$0xf]
        %v1862 = vld [vmem:[#allocation23 + $0x24] sm:$0xf]
        %v1863 = vld [vmem:[#allocation23 + $0x28] sm:$0xf]
        %v1864 = vld [vmem:[#allocation23 + $0x2c] sm:$0xf]
        %v1865 = vld [vmem:[#allocation23 + $0x30] sm:$0xf]
        %v1866 = vld [vmem:[#allocation23 + $0x34] sm:$0xf]
        %v1867 = vld [vmem:[#allocation23 + $0x38] sm:$0xf]
        %v1868 = vld [vmem:[#allocation23 + $0x3c] sm:$0xf]
        %v1869 = vld [vmem:[#allocation24] sm:$0x1]
        %v1871 = vlaneseq
        %v1872 = vshrl.u32 %v1871, 7
        %v1873 = vsub.s32 0, %v1872
        %v1874 = vrot.slane %v1869, %v1873
        %v1892 = vunpack.c.l.b16 %v1853
        %v1893 = vunpack.c.l.b16 %v1854
        %v1894 = vunpack.c.l.b16 %v1855
        %v1895 = vunpack.c.l.b16 %v1856
        %v1896 = vunpack.c.l.b16 %v1857
        %v1897 = vunpack.c.l.b16 %v1858
        %v1898 = vunpack.c.l.b16 %v1859
        %v1899 = vunpack.c.l.b16 %v1860
        %v1900 = vunpack.c.l.b16 %v1861
        %v1901 = vunpack.c.l.b16 %v1862
        %v1902 = vunpack.c.l.b16 %v1863
        %v1903 = vunpack.c.l.b16 %v1864
        %v1904 = vunpack.c.l.b16 %v1865
        %v1905 = vunpack.c.l.b16 %v1866
        %v1906 = vunpack.c.l.b16 %v1867
        %v1907 = vunpack.c.l.b16 %v1868
        %v1908 = vpack.c.b16 %v1893, %v1892
        %v1909 = vpack.c.b16 %v1895, %v1894
        %v1910 = vpack.c.b16 %v1897, %v1896
        %v1911 = vpack.c.b16 %v1899, %v1898
        %v1912 = vpack.c.b16 %v1901, %v1900
        %v1913 = vpack.c.b16 %v1903, %v1902
        %v1914 = vpack.c.b16 %v1905, %v1904
        %v1915 = vpack.c.b16 %v1907, %v1906
        %1924 = vmatprep.subr.bf16.mxu0 0
        %1925 = vmatpush1.bf16.msra.mxu0 %v1908
        %1926 = vmatprep.subr.bf16.mxu0 0
        %1927 = vmatpush1.bf16.msra.mxu0 %v1909
        %1928 = vmatprep.subr.bf16.mxu0 0
        %1929 = vmatpush1.bf16.msra.mxu0 %v1910
        %1930 = vmatprep.subr.bf16.mxu0 0
        %1931 = vmatpush1.bf16.msra.mxu0 %v1911
        %1932 = vmatprep.subr.bf16.mxu0 0
        %1933 = vmatpush1.bf16.msra.mxu0 %v1912
        %1934 = vmatprep.subr.bf16.mxu0 0
        %1935 = vmatpush1.bf16.msra.mxu0 %v1913
        %1936 = vmatprep.subr.bf16.mxu0 0
        %1937 = vmatpush1.bf16.msra.mxu0 %v1914
        %1938 = vmatprep.subr.bf16.mxu0 0
        %1939 = vmatpush1.bf16.msra.mxu0 %v1915
        %1940 = vmatprep.subr.bf16.mxu0 0
        %1941 = vmatpush1.bf16.msra.mxu0 0
        %1942 = vmatprep.subr.bf16.mxu0 0
        %1943 = vmatpush1.bf16.msra.mxu0 0
        %1944 = vmatprep.subr.bf16.mxu0 0
        %1945 = vmatpush1.bf16.msra.mxu0 0
        %1946 = vmatprep.subr.bf16.mxu0 0
        %1947 = vmatpush1.bf16.msra.mxu0 0
        %1948 = vmatprep.subr.bf16.mxu0 0
        %1949 = vmatpush1.bf16.msra.mxu0 0
        %1950 = vmatprep.subr.bf16.mxu0 0
        %1951 = vmatpush1.bf16.msra.mxu0 0
        %1952 = vmatprep.subr.bf16.mxu0 0
        %1953 = vmatpush1.bf16.msra.mxu0 0
        %1954 = vmatprep.subr.bf16.mxu0 0
        %1955 = vmatpush1.bf16.msra.mxu0 0
        %1956 = vmatprep.mubr.bf16.mxu0 0
        %1957 = vmatmul.mubr.bf16.gmra.mrb[0].mxu0 %v1852
        %v1958 = vpop.f32.mrb[0].mxu0
        %v1959 = vadd.f32 %v1874, %v1958
        %v1960 = vpop.f32.mrb[0].mxu0
        %v1961 = vpop.f32.mrb[0].mxu0
        %v1962 = vadd.f32 %v1874, %v1961
        %v1963 = vpop.f32.mrb[0].mxu0
        %1964 = vdwg.mxu0
        %v1965 = vmax.f32 %v1959, 0.0
        %v1966 = vmax.f32 %v1962, 0.0
        %v1967 = vadd.f32 %v1848, %v1965
        %v1968 = vadd.f32 %v1849, %v1966
        %1969 = vst [vmem:[#allocation2] sm:$0xff] %v1967
        %1970 = vst [vmem:[#allocation2 + $0x8] sm:$0xff] %v1968
        %v1971 = vld [vmem:[#allocation2] sm:$0xff]
        %v1972 = vld [vmem:[#allocation2 + $0x8] sm:$0xff]
        %v1973 = vpack.c.bf16 %v1972, %v1971
        %v1974 = vld [vmem:[#allocation26] sm:$0xf]
        %v1975 = vld [vmem:[#allocation26 + $0x4] sm:$0xf]
        %v1976 = vld [vmem:[#allocation26 + $0x8] sm:$0xf]
        %v1977 = vld [vmem:[#allocation26 + $0xc] sm:$0xf]
        %v1978 = vld [vmem:[#allocation26 + $0x10] sm:$0xf]
        %v1979 = vld [vmem:[#allocation26 + $0x14] sm:$0xf]
        %v1980 = vld [vmem:[#allocation26 + $0x18] sm:$0xf]
        %v1981 = vld [vmem:[#allocation26 + $0x1c] sm:$0xf]
        %v1982 = vld [vmem:[#allocation26 + $0x20] sm:$0xf]
        %v1983 = vld [vmem:[#allocation26 + $0x24] sm:$0xf]
        %v1984 = vld [vmem:[#allocation26 + $0x28] sm:$0xf]
        %v1985 = vld [vmem:[#allocation26 + $0x2c] sm:$0xf]
        %v1986 = vld [vmem:[#allocation26 + $0x30] sm:$0xf]
        %v1987 = vld [vmem:[#allocation26 + $0x34] sm:$0xf]
        %v1988 = vld [vmem:[#allocation26 + $0x38] sm:$0xf]
        %v1989 = vld [vmem:[#allocation26 + $0x3c] sm:$0xf]
        %v2006 = vunpack.c.l.b16 %v1974
        %v2007 = vunpack.c.l.b16 %v1975
        %v2008 = vunpack.c.l.b16 %v1976
        %v2009 = vunpack.c.l.b16 %v1977
        %v2010 = vunpack.c.l.b16 %v1978
        %v2011 = vunpack.c.l.b16 %v1979
        %v2012 = vunpack.c.l.b16 %v1980
        %v2013 = vunpack.c.l.b16 %v1981
        %v2014 = vunpack.c.l.b16 %v1982
        %v2015 = vunpack.c.l.b16 %v1983
        %v2016 = vunpack.c.l.b16 %v1984
        %v2017 = vunpack.c.l.b16 %v1985
        %v2018 = vunpack.c.l.b16 %v1986
        %v2019 = vunpack.c.l.b16 %v1987
        %v2020 = vunpack.c.l.b16 %v1988
        %v2021 = vunpack.c.l.b16 %v1989
        %v2022 = vpack.c.b16 %v2007, %v2006
        %v2023 = vpack.c.b16 %v2009, %v2008
        %v2024 = vpack.c.b16 %v2011, %v2010
        %v2025 = vpack.c.b16 %v2013, %v2012
        %v2026 = vpack.c.b16 %v2015, %v2014
        %v2027 = vpack.c.b16 %v2017, %v2016
        %v2028 = vpack.c.b16 %v2019, %v2018
        %v2029 = vpack.c.b16 %v2021, %v2020
        %2038 = vmatprep.subr.bf16.mxu0 0
        %2039 = vmatpush1.bf16.msra.mxu0 %v2022
        %2040 = vmatprep.subr.bf16.mxu0 0
        %2041 = vmatpush1.bf16.msra.mxu0 %v2023
        %2042 = vmatprep.subr.bf16.mxu0 0
        %2043 = vmatpush1.bf16.msra.mxu0 %v2024
        %2044 = vmatprep.subr.bf16.mxu0 0
        %2045 = vmatpush1.bf16.msra.mxu0 %v2025
        %2046 = vmatprep.subr.bf16.mxu0 0
        %2047 = vmatpush1.bf16.msra.mxu0 %v2026
        %2048 = vmatprep.subr.bf16.mxu0 0
        %2049 = vmatpush1.bf16.msra.mxu0 %v2027
        %2050 = vmatprep.subr.bf16.mxu0 0
        %2051 = vmatpush1.bf16.msra.mxu0 %v2028
        %2052 = vmatprep.subr.bf16.mxu0 0
        %2053 = vmatpush1.bf16.msra.mxu0 %v2029
        %2054 = vmatprep.subr.bf16.mxu0 0
        %2055 = vmatpush1.bf16.msra.mxu0 0
        %2056 = vmatprep.subr.bf16.mxu0 0
        %2057 = vmatpush1.bf16.msra.mxu0 0
        %2058 = vmatprep.subr.bf16.mxu0 0
        %2059 = vmatpush1.bf16.msra.mxu0 0
        %2060 = vmatprep.subr.bf16.mxu0 0
        %2061 = vmatpush1.bf16.msra.mxu0 0
        %2062 = vmatprep.subr.bf16.mxu0 0
        %2063 = vmatpush1.bf16.msra.mxu0 0
        %2064 = vmatprep.subr.bf16.mxu0 0
        %2065 = vmatpush1.bf16.msra.mxu0 0
        %2066 = vmatprep.subr.bf16.mxu0 0
        %2067 = vmatpush1.bf16.msra.mxu0 0
        %2068 = vmatprep.subr.bf16.mxu0 0
        %2069 = vmatpush1.bf16.msra.mxu0 0
        %2070 = vmatprep.mubr.bf16.mxu0 0
        %2071 = vmatmul.mubr.bf16.gmra.mrb[0].mxu0 %v1973
        %v2072 = vpop.f32.mrb[0].mxu0
        %v2073 = vadd.f32 0.0, %v2072
        %v2074 = vpop.f32.mrb[0].mxu0
        %v2075 = vpop.f32.mrb[0].mxu0
        %v2076 = vadd.f32 0.0, %v2075
        %v2077 = vpop.f32.mrb[0].mxu0
        %2078 = vdwg.mxu0
        %v2079 = vpack.c.bf16 %v2076, %v2073
        %2080 = vst.msk [vmem:[#allocation3] sm:$0xff] %vm849, %v2079
        %v2081 = vld [vmem:[#allocation27] sm:$0xf]
        %v2082 = vld [vmem:[#allocation27 + $0x4] sm:$0xf]
        %v2083 = vld [vmem:[#allocation27 + $0x8] sm:$0xf]
        %v2084 = vld [vmem:[#allocation27 + $0xc] sm:$0xf]
        %v2085 = vld [vmem:[#allocation27 + $0x10] sm:$0xf]
        %v2086 = vld [vmem:[#allocation27 + $0x14] sm:$0xf]
        %v2087 = vld [vmem:[#allocation27 + $0x18] sm:$0xf]
        %v2088 = vld [vmem:[#allocation27 + $0x1c] sm:$0xf]
        %v2089 = vld [vmem:[#allocation27 + $0x20] sm:$0xf]
        %v2090 = vld [vmem:[#allocation27 + $0x24] sm:$0xf]
        %v2091 = vld [vmem:[#allocation27 + $0x28] sm:$0xf]
        %v2092 = vld [vmem:[#allocation27 + $0x2c] sm:$0xf]
        %v2093 = vld [vmem:[#allocation27 + $0x30] sm:$0xf]
        %v2094 = vld [vmem:[#allocation27 + $0x34] sm:$0xf]
        %v2095 = vld [vmem:[#allocation27 + $0x38] sm:$0xf]
        %v2096 = vld [vmem:[#allocation27 + $0x3c] sm:$0xf]
        %v2097 = vld [vmem:[#allocation29] sm:$0x1]
        %v2099 = vlaneseq
        %v2100 = vshrl.u32 %v2099, 7
        %v2101 = vsub.s32 0, %v2100
        %v2102 = vrot.slane %v2097, %v2101
        %v2120 = vunpack.c.l.b16 %v2081
        %v2121 = vunpack.c.l.b16 %v2082
        %v2122 = vunpack.c.l.b16 %v2083
        %v2123 = vunpack.c.l.b16 %v2084
        %v2124 = vunpack.c.l.b16 %v2085
        %v2125 = vunpack.c.l.b16 %v2086
        %v2126 = vunpack.c.l.b16 %v2087
        %v2127 = vunpack.c.l.b16 %v2088
        %v2128 = vunpack.c.l.b16 %v2089
        %v2129 = vunpack.c.l.b16 %v2090
        %v2130 = vunpack.c.l.b16 %v2091
        %v2131 = vunpack.c.l.b16 %v2092
        %v2132 = vunpack.c.l.b16 %v2093
        %v2133 = vunpack.c.l.b16 %v2094
        %v2134 = vunpack.c.l.b16 %v2095
        %v2135 = vunpack.c.l.b16 %v2096
        %v2136 = vpack.c.b16 %v2121, %v2120
        %v2137 = vpack.c.b16 %v2123, %v2122
        %v2138 = vpack.c.b16 %v2125, %v2124
        %v2139 = vpack.c.b16 %v2127, %v2126
        %v2140 = vpack.c.b16 %v2129, %v2128
        %v2141 = vpack.c.b16 %v2131, %v2130
        %v2142 = vpack.c.b16 %v2133, %v2132
        %v2143 = vpack.c.b16 %v2135, %v2134
        %2152 = vmatprep.subr.bf16.mxu0 0
        %2153 = vmatpush1.bf16.msra.mxu0 %v2136
        %2154 = vmatprep.subr.bf16.mxu0 0
        %2155 = vmatpush1.bf16.msra.mxu0 %v2137
        %2156 = vmatprep.subr.bf16.mxu0 0
        %2157 = vmatpush1.bf16.msra.mxu0 %v2138
        %2158 = vmatprep.subr.bf16.mxu0 0
        %2159 = vmatpush1.bf16.msra.mxu0 %v2139
        %2160 = vmatprep.subr.bf16.mxu0 0
        %2161 = vmatpush1.bf16.msra.mxu0 %v2140
        %2162 = vmatprep.subr.bf16.mxu0 0
        %2163 = vmatpush1.bf16.msra.mxu0 %v2141
        %2164 = vmatprep.subr.bf16.mxu0 0
        %2165 = vmatpush1.bf16.msra.mxu0 %v2142
        %2166 = vmatprep.subr.bf16.mxu0 0
        %2167 = vmatpush1.bf16.msra.mxu0 %v2143
        %2168 = vmatprep.subr.bf16.mxu0 0
        %2169 = vmatpush1.bf16.msra.mxu0 0
        %2170 = vmatprep.subr.bf16.mxu0 0
        %2171 = vmatpush1.bf16.msra.mxu0 0
        %2172 = vmatprep.subr.bf16.mxu0 0
        %2173 = vmatpush1.bf16.msra.mxu0 0
        %2174 = vmatprep.subr.bf16.mxu0 0
        %2175 = vmatpush1.bf16.msra.mxu0 0
        %2176 = vmatprep.subr.bf16.mxu0 0
        %2177 = vmatpush1.bf16.msra.mxu0 0
        %2178 = vmatprep.subr.bf16.mxu0 0
        %2179 = vmatpush1.bf16.msra.mxu0 0
        %2180 = vmatprep.subr.bf16.mxu0 0
        %2181 = vmatpush1.bf16.msra.mxu0 0
        %2182 = vmatprep.subr.bf16.mxu0 0
        %2183 = vmatpush1.bf16.msra.mxu0 0
        %2184 = vmatprep.mubr.bf16.mxu0 0
        %2185 = vmatmul.mubr.bf16.gmra.mrb[0].mxu0 %v1973
        %v2186 = vpop.f32.mrb[0].mxu0
        %v2187 = vadd.f32 %v2102, %v2186
        %v2188 = vpop.f32.mrb[0].mxu0
        %v2189 = vpop.f32.mrb[0].mxu0
        %v2190 = vadd.f32 %v2102, %v2189
        %v2191 = vpop.f32.mrb[0].mxu0
        %2192 = vdwg.mxu0
        %v2193 = vsel %vm1676, 1.0, %v2187
        %v2194 = vsel %vm1676, 1.0, %v2190
        %v2195 = vpack.c.bf16 %v2194, %v2193
        %2196 = vst [vmem:[#allocation4] sm:$0xff] %v2195
        %2197 = vst [vmem:[#allocation5] sm:$0xff] 0.0
        %2198 = vst [vmem:[#allocation5 + $0x8] sm:$0xff] 0.0
        %v2199 = vld [vmem:[#allocation3] sm:$0xff]
        %v2200 = vld [vmem:[#allocation3] sm:$0xff]
        %v2202 = vsel %vm849, %v2199, 0
        %v2205 = vsel %vm849, %v2200, 0
        %2207 = vmatprep.subr.bf16.mxu0 0
        %2208 = vmatpush1.bf16.xpose.msra.mxu0 %v2205
        %2209 = vmatprep.subr.bf16.mxu0 0
        %2210 = vmatpush1.bf16.xpose.msra.mxu0 0
        %2211 = vmatprep.subr.bf16.mxu0 0
        %2212 = vmatpush1.bf16.xpose.msra.mxu0 0
        %2213 = vmatprep.subr.bf16.mxu0 0
        %2214 = vmatpush1.bf16.xpose.msra.mxu0 0
        %2215 = vmatprep.subr.bf16.mxu0 0
        %2216 = vmatpush1.bf16.xpose.msra.mxu0 0
        %2217 = vmatprep.subr.bf16.mxu0 0
        %2218 = vmatpush1.bf16.xpose.msra.mxu0 0
        %2219 = vmatprep.subr.bf16.mxu0 0
        %2220 = vmatpush1.bf16.xpose.msra.mxu0 0
        %2221 = vmatprep.subr.bf16.mxu0 0
        %2222 = vmatpush1.bf16.xpose.msra.mxu0 0
        %2223 = vmatprep.subr.bf16.mxu0 0
        %2224 = vmatpush1.bf16.xpose.msra.mxu0 0
        %2225 = vmatprep.subr.bf16.mxu0 0
        %2226 = vmatpush1.bf16.xpose.msra.mxu0 0
        %2227 = vmatprep.subr.bf16.mxu0 0
        %2228 = vmatpush1.bf16.xpose.msra.mxu0 0
        %2229 = vmatprep.subr.bf16.mxu0 0
        %2230 = vmatpush1.bf16.xpose.msra.mxu0 0
        %2231 = vmatprep.subr.bf16.mxu0 0
        %2232 = vmatpush1.bf16.xpose.msra.mxu0 0
        %2233 = vmatprep.subr.bf16.mxu0 0
        %2234 = vmatpush1.bf16.xpose.msra.mxu0 0
        %2235 = vmatprep.subr.bf16.mxu0 0
        %2236 = vmatpush1.bf16.xpose.msra.mxu0 0
        %2237 = vmatprep.subr.bf16.mxu0 0
        %2238 = vmatpush1.bf16.xpose.msra.mxu0 0
        %2239 = vmatprep.mubr.bf16.mxu0 0
        %2240 = vmatmul.mubr.bf16.gmra.mrb[0].mxu0 %v2202
        %v2241 = vpop.f32.mrb[0].mxu0
        %v2242 = vadd.f32 0.0, %v2241
        %v2243 = vpop.f32.mrb[0].mxu0
        %v2244 = vpop.f32.mrb[0].mxu0
        %v2245 = vadd.f32 0.0, %v2244
        %v2246 = vpop.f32.mrb[0].mxu0
        %2247 = vdwg.mxu0
        %v2248 = vsel %vm1732, %v2242, -inf
        %2249 = vmax.xlane.f32.xlu0 %v2248
        %v2250 = vpop.xlane.xlu0 %2249
        %v2251 = vsel %vm1732, %v2245, -inf
        %2252 = vmax.xlane.f32.xlu0 %v2251
        %v2253 = vpop.xlane.xlu0 %2252
        %v2254 = vsub.f32 %v2242, %v2250
        %v2255 = vsub.f32 %v2245, %v2253
        %v2256 = vmul.f32 %v2254, 1.442695
        %v2257 = vpow.pop %v2256
        %v2258 = vmul.f32 %v2255, 1.442695
        %v2259 = vpow.pop %v2258
        %v2260 = vsel %vm1732, %v2257, 0.0
        %2261 = vadd.xlane.f32.xlu0 %v2260
        %v2262 = vpop.xlane.xlu0 %2261
        %v2263 = vsel %vm1732, %v2259, 0.0
        %2264 = vadd.xlane.f32.xlu0 %v2263
        %v2265 = vpop.xlane.xlu0 %2264
        %v2266 = vpack.c.bf16 %v2259, %v2257
        %v2267 = vrcp.pop %v2262
        %v2268 = vmul.f32 1.0, %v2267
        %v2269 = vrcp.pop %v2265
        %v2270 = vmul.f32 1.0, %v2269
        %v2271 = vld [vmem:[#allocation4] sm:$0xff]
        %v2272 = vunpack.c.l.bf16 %v2271
        %v2273 = vunpack.c.h.bf16 %v2271
        %v2274 = vmul.f32 %v2272, %v2268
        %v2275 = vmul.f32 %v2273, %v2270
        %v2276 = vpack.c.bf16 %v2275, %v2274
        %v2277 = vld [vmem:[#allocation5] sm:$0xff]
        %v2278 = vld [vmem:[#allocation5 + $0x8] sm:$0xff]
        %2279 = vxpose.xlu0.c.b16.start [1/8] %v2266, 128
        %2280 = vxpose.xlu0.c.b16.cont [2/8] 0, 128
        %2281 = vxpose.xlu0.c.b16.cont [3/8] 0, 128
        %2282 = vxpose.xlu0.c.b16.cont [4/8] 0, 128
        %2283 = vxpose.xlu0.c.b16.cont [5/8] 0, 128
        %2284 = vxpose.xlu0.c.b16.cont [6/8] 0, 128
        %2285 = vxpose.xlu0.c.b16.cont [7/8] 0, 128
        %2286 = vxpose.xlu0.c.b16.end [8/8] 0, 128
        %v2287 = vpop.trf.xlu0
        %v2288 = vpop.trf.xlu0
        %v2289 = vpop.trf.xlu0
        %v2290 = vpop.trf.xlu0
        %v2291 = vpop.trf.xlu0
        %v2292 = vpop.trf.xlu0
        %v2293 = vpop.trf.xlu0
        %v2294 = vpop.trf.xlu0
        %v2296 = vsel %vm1732, %v2287, 0
        %2298 = vmatprep.subr.bf16.mxu0 0
        %2299 = vmatpush1.bf16.msra.mxu0 %v2276
        %2300 = vmatprep.subr.bf16.mxu0 0
        %2301 = vmatpush1.bf16.msra.mxu0 0
        %2302 = vmatprep.subr.bf16.mxu0 0
        %2303 = vmatpush1.bf16.msra.mxu0 0
        %2304 = vmatprep.subr.bf16.mxu0 0
        %2305 = vmatpush1.bf16.msra.mxu0 0
        %2306 = vmatprep.subr.bf16.mxu0 0
        %2307 = vmatpush1.bf16.msra.mxu0 0
        %2308 = vmatprep.subr.bf16.mxu0 0
        %2309 = vmatpush1.bf16.msra.mxu0 0
        %2310 = vmatprep.subr.bf16.mxu0 0
        %2311 = vmatpush1.bf16.msra.mxu0 0
        %2312 = vmatprep.subr.bf16.mxu0 0
        %2313 = vmatpush1.bf16.msra.mxu0 0
        %2314 = vmatprep.subr.bf16.mxu0 0
        %2315 = vmatpush1.bf16.msra.mxu0 0
        %2316 = vmatprep.subr.bf16.mxu0 0
        %2317 = vmatpush1.bf16.msra.mxu0 0
        %2318 = vmatprep.subr.bf16.mxu0 0
        %2319 = vmatpush1.bf16.msra.mxu0 0
        %2320 = vmatprep.subr.bf16.mxu0 0
        %2321 = vmatpush1.bf16.msra.mxu0 0
        %2322 = vmatprep.subr.bf16.mxu0 0
        %2323 = vmatpush1.bf16.msra.mxu0 0
        %2324 = vmatprep.subr.bf16.mxu0 0
        %2325 = vmatpush1.bf16.msra.mxu0 0
        %2326 = vmatprep.subr.bf16.mxu0 0
        %2327 = vmatpush1.bf16.msra.mxu0 0
        %2328 = vmatprep.subr.bf16.mxu0 0
        %2329 = vmatpush1.bf16.msra.mxu0 0
        %2330 = vmatprep.mubr.bf16.mxu0 0
        %2331 = vmatmul.mubr.bf16.gmra.mrb[0].mxu0 %v2296
        %v2332 = vpop.f32.mrb[0].mxu0
        %v2333 = vadd.f32 0.0, %v2332
        %v2334 = vpop.f32.mrb[0].mxu0
        %v2335 = vpop.f32.mrb[0].mxu0
        %v2336 = vadd.f32 0.0, %v2335
        %v2337 = vpop.f32.mrb[0].mxu0
        %2338 = vdwg.mxu0
        %v2339 = vadd.f32 %v2277, %v2333
        %v2340 = vadd.f32 %v2278, %v2336
        %2341 = vst [vmem:[#allocation5] sm:$0xff] %v2339
        %2342 = vst [vmem:[#allocation5 + $0x8] sm:$0xff] %v2340
        %v2343 = vld [vmem:[#allocation5] sm:$0xff]
        %v2344 = vld [vmem:[#allocation5 + $0x8] sm:$0xff]
        %v2345 = vadd.f32 %v2343, 1e-09
        %v2346 = vadd.f32 %v2344, 1e-09
        %v2347 = vrcp.pop %v2345
        %v2348 = vmul.f32 1.0, %v2347
        %v2349 = vrcp.pop %v2346
        %v2350 = vmul.f32 1.0, %v2349
        %2352 = vset.pattern.permute.xlu0 32
        %2353 = vperm.xlu0 %2352, %v2348
        %v2354 = vpop.permute.xlu0 %2353
        %2357 = vset.pattern.permute.xlu0 32
        %2358 = vperm.xlu0 %2357, %v2350
        %v2359 = vpop.permute.xlu0 %2358
        %v2361 = vmul.f32 %v2343, %v2354
        %v2362 = vmul.f32 %v2344, %v2359
        %v2363 = vld [vmem:[#allocation2] sm:$0xff]
        %v2364 = vld [vmem:[#allocation2 + $0x8] sm:$0xff]
        %v2365 = vsub.f32 %v2363, %v2361
        %v2366 = vsub.f32 %v2364, %v2362
        %v2367 = vpack.c.bf16 %v2366, %v2365
        %v2368 = vld [vmem:[#allocation30] sm:$0xf]
        %v2369 = vld [vmem:[#allocation30 + $0x4] sm:$0xf]
        %v2370 = vld [vmem:[#allocation30 + $0x8] sm:$0xf]
        %v2371 = vld [vmem:[#allocation30 + $0xc] sm:$0xf]
        %v2372 = vld [vmem:[#allocation30 + $0x10] sm:$0xf]
        %v2373 = vld [vmem:[#allocation30 + $0x14] sm:$0xf]
        %v2374 = vld [vmem:[#allocation30 + $0x18] sm:$0xf]
        %v2375 = vld [vmem:[#allocation30 + $0x1c] sm:$0xf]
        %v2376 = vld [vmem:[#allocation30 + $0x20] sm:$0xf]
        %v2377 = vld [vmem:[#allocation30 + $0x24] sm:$0xf]
        %v2378 = vld [vmem:[#allocation30 + $0x28] sm:$0xf]
        %v2379 = vld [vmem:[#allocation30 + $0x2c] sm:$0xf]
        %v2380 = vld [vmem:[#allocation30 + $0x30] sm:$0xf]
        %v2381 = vld [vmem:[#allocation30 + $0x34] sm:$0xf]
        %v2382 = vld [vmem:[#allocation30 + $0x38] sm:$0xf]
        %v2383 = vld [vmem:[#allocation30 + $0x3c] sm:$0xf]
        %v2384 = vld [vmem:[#allocation32] sm:$0x1]
        %v2386 = vlaneseq
        %v2387 = vshrl.u32 %v2386, 7
        %v2388 = vsub.s32 0, %v2387
        %v2389 = vrot.slane %v2384, %v2388
        %v2407 = vunpack.c.l.b16 %v2368
        %v2408 = vunpack.c.l.b16 %v2369
        %v2409 = vunpack.c.l.b16 %v2370
        %v2410 = vunpack.c.l.b16 %v2371
        %v2411 = vunpack.c.l.b16 %v2372
        %v2412 = vunpack.c.l.b16 %v2373
        %v2413 = vunpack.c.l.b16 %v2374
        %v2414 = vunpack.c.l.b16 %v2375
        %v2415 = vunpack.c.l.b16 %v2376
        %v2416 = vunpack.c.l.b16 %v2377
        %v2417 = vunpack.c.l.b16 %v2378
        %v2418 = vunpack.c.l.b16 %v2379
        %v2419 = vunpack.c.l.b16 %v2380
        %v2420 = vunpack.c.l.b16 %v2381
        %v2421 = vunpack.c.l.b16 %v2382
        %v2422 = vunpack.c.l.b16 %v2383
        %v2423 = vpack.c.b16 %v2408, %v2407
        %v2424 = vpack.c.b16 %v2410, %v2409
        %v2425 = vpack.c.b16 %v2412, %v2411
        %v2426 = vpack.c.b16 %v2414, %v2413
        %v2427 = vpack.c.b16 %v2416, %v2415
        %v2428 = vpack.c.b16 %v2418, %v2417
        %v2429 = vpack.c.b16 %v2420, %v2419
        %v2430 = vpack.c.b16 %v2422, %v2421
        %2439 = vmatprep.subr.bf16.mxu0 0
        %2440 = vmatpush1.bf16.msra.mxu0 %v2423
        %2441 = vmatprep.subr.bf16.mxu0 0
        %2442 = vmatpush1.bf16.msra.mxu0 %v2424
        %2443 = vmatprep.subr.bf16.mxu0 0
        %2444 = vmatpush1.bf16.msra.mxu0 %v2425
        %2445 = vmatprep.subr.bf16.mxu0 0
        %2446 = vmatpush1.bf16.msra.mxu0 %v2426
        %2447 = vmatprep.subr.bf16.mxu0 0
        %2448 = vmatpush1.bf16.msra.mxu0 %v2427
        %2449 = vmatprep.subr.bf16.mxu0 0
        %2450 = vmatpush1.bf16.msra.mxu0 %v2428
        %2451 = vmatprep.subr.bf16.mxu0 0
        %2452 = vmatpush1.bf16.msra.mxu0 %v2429
        %2453 = vmatprep.subr.bf16.mxu0 0
        %2454 = vmatpush1.bf16.msra.mxu0 %v2430
        %2455 = vmatprep.subr.bf16.mxu0 0
        %2456 = vmatpush1.bf16.msra.mxu0 0
        %2457 = vmatprep.subr.bf16.mxu0 0
        %2458 = vmatpush1.bf16.msra.mxu0 0
        %2459 = vmatprep.subr.bf16.mxu0 0
        %2460 = vmatpush1.bf16.msra.mxu0 0
        %2461 = vmatprep.subr.bf16.mxu0 0
        %2462 = vmatpush1.bf16.msra.mxu0 0
        %2463 = vmatprep.subr.bf16.mxu0 0
        %2464 = vmatpush1.bf16.msra.mxu0 0
        %2465 = vmatprep.subr.bf16.mxu0 0
        %2466 = vmatpush1.bf16.msra.mxu0 0
        %2467 = vmatprep.subr.bf16.mxu0 0
        %2468 = vmatpush1.bf16.msra.mxu0 0
        %2469 = vmatprep.subr.bf16.mxu0 0
        %2470 = vmatpush1.bf16.msra.mxu0 0
        %2471 = vmatprep.mubr.bf16.mxu0 0
        %2472 = vmatmul.mubr.bf16.gmra.mrb[0].mxu0 %v2367
        %v2473 = vpop.f32.mrb[0].mxu0
        %v2474 = vadd.f32 %v2389, %v2473
        %v2475 = vpop.f32.mrb[0].mxu0
        %v2476 = vpop.f32.mrb[0].mxu0
        %v2477 = vadd.f32 %v2389, %v2476
        %v2478 = vpop.f32.mrb[0].mxu0
        %2479 = vdwg.mxu0
        %v2480 = vmax.f32 %v2474, 0.0
        %v2481 = vmax.f32 %v2477, 0.0
        %v2482 = vadd.f32 %v2363, %v2480
        %v2483 = vadd.f32 %v2364, %v2481
        %2484 = vst [vmem:[#allocation2] sm:$0xff] %v2482
        %2485 = vst [vmem:[#allocation2 + $0x8] sm:$0xff] %v2483
        %v2486 = vld [vmem:[#allocation2] sm:$0xff]
        %v2487 = vld [vmem:[#allocation2 + $0x8] sm:$0xff]
        %2488 = vxpose.xlu0.b32.start [1/16] %v2486, 128
        %2489 = vxpose.xlu0.b32.cont [2/16] %v2487, 128
        %2490 = vxpose.xlu0.b32.cont [3/16] 0.0, 128
        %2491 = vxpose.xlu0.b32.cont [4/16] 0.0, 128
        %2492 = vxpose.xlu0.b32.cont [5/16] 0.0, 128
        %2493 = vxpose.xlu0.b32.cont [6/16] 0.0, 128
        %2494 = vxpose.xlu0.b32.cont [7/16] 0.0, 128
        %2495 = vxpose.xlu0.b32.cont [8/16] 0.0, 128
        %2496 = vxpose.xlu0.b32.cont [9/16] 0.0, 128
        %2497 = vxpose.xlu0.b32.cont [10/16] 0.0, 128
        %2498 = vxpose.xlu0.b32.cont [11/16] 0.0, 128
        %2499 = vxpose.xlu0.b32.cont [12/16] 0.0, 128
        %2500 = vxpose.xlu0.b32.cont [13/16] 0.0, 128
        %2501 = vxpose.xlu0.b32.cont [14/16] 0.0, 128
        %2502 = vxpose.xlu0.b32.cont [15/16] 0.0, 128
        %2503 = vxpose.xlu0.b32.end [16/16] 0.0, 128
        %v2504 = vpop.trf.xlu0
        %v2505 = vpop.trf.xlu0
        %v2506 = vpop.trf.xlu0
        %v2507 = vpop.trf.xlu0
        %v2508 = vpop.trf.xlu0
        %v2509 = vpop.trf.xlu0
        %v2510 = vpop.trf.xlu0
        %v2511 = vpop.trf.xlu0
        %v2512 = vpop.trf.xlu0
        %v2513 = vpop.trf.xlu0
        %v2514 = vpop.trf.xlu0
        %v2515 = vpop.trf.xlu0
        %v2516 = vpop.trf.xlu0
        %v2517 = vpop.trf.xlu0
        %v2518 = vpop.trf.xlu0
        %v2519 = vpop.trf.xlu0
        %2520 = vst.msk [vmem:[%s845] sm:$0xff] %vm1732, %v2504
        %2521 = vst.msk [vmem:[%s845 + $0x8] sm:$0xff] %vm1732, %v2505
        %2522 = vst.msk [vmem:[%s845 + $0x10] sm:$0xff] %vm1732, %v2506
        %2523 = vst.msk [vmem:[%s845 + $0x18] sm:$0xff] %vm1732, %v2507
        %s2524 = sand.u32 %s431, 1
        %s2525 = scalar_lea.sflag [#allocation8], %s2524
        %s2526 = sand.u32 %s431, 1
        %s2527 = smul.addr %s2526, 32
        %s2528 = scalar_lea.vmem [#allocation33], %s2527
        // Predicated region
        $region157: #{tpu_custom_call.1} parent=87 // pred_check
          %p2529 = pneg %p441
        $region158: #{tpu_custom_call.1} parent=87 // pred_check_branch
          %2531 = sbr.rel (%p2529) target = $region160
        $region159: #{tpu_custom_call.1} parent=87 // pred_region
          %s2533 = ssub.s32 512, 512
          %2534 = vsyncadd %s2525, %s2533
          %s2535 = smul.addr %s46, 4
          %s2536 = smul.addr %s2535, 128
          %s2537 = scalar_lea.hbm %s17, %s2536
          %s2538 = sshll.u32 %s2528, 4
          %s2539 = int_to_ptr.vmem [resolvable:$true] %s2538
          %2544 = dma.vmem_to_hbm [thread:$0]  %s2539, 512, %s2537, %s2525, 128, 128, 8
        $region160: #{tpu_custom_call.1} parent=87 // pred_fallthru
          _
      $region88: #{tpu_custom_call.1} parent=5 // pred_fallthru
        _
      %p2545 = scmp.le.s32.totalorder 2, %s41
      // Predicated region
      $region161: #{tpu_custom_call.1} parent=5 // pred_check
        %p2546 = pneg %p2545
      $region162: #{tpu_custom_call.1} parent=5 // pred_check_branch
        %2548 = sbr.rel (%p2546) target = $region164
      $region163: #{tpu_custom_call.1} parent=5 // pred_region
        %s2549 = ssub.s32 %s41, 2
        // Predicated region
        $region165: #{tpu_custom_call.1} parent=163 // pred_check
          %p2550 = pneg %p447
        $region166: #{tpu_custom_call.1} parent=163 // pred_check_branch
          %2552 = sbr.rel (%p2550) target = $region168
        $region167: #{tpu_custom_call.1} parent=163 // pred_region
          %s2553 = sand.u32 %s432, 1
          %s2554 = scalar_lea.sflag [#allocation8], %s2553
          %s2555 = sand.u32 %s432, 1
          %s2556 = smul.addr %s2555, 32
          %s2557 = scalar_lea.vmem [#allocation33], %s2556
          %2558 = dma.done %s2554, 512
        $region168: #{tpu_custom_call.1} parent=163 // pred_fallthru
          _
      $region164: #{tpu_custom_call.1} parent=5 // pred_fallthru
        _
    $region6: #{tpu_custom_call.1} parent=1 // loop_footer
      %s45 = sadd.s32 1, %s41
    $region7: #{tpu_custom_call.1} parent=1 // loop_footer_branch
      %40 = sbr.rel target = $region3
    $region8: #{tpu_custom_call.1} parent=1 // loop_exit
      _
    %2559 = vsyncpa [#allocation7], 1
    %s2560 = scalar_lea.sflag [#allocation7], 1
    %2561 = vsyncpa %s2560, 1
    %2562 = vsyncpa [#allocation10], 1
    %s2563 = scalar_lea.sflag [#allocation10], 1
    %2564 = vsyncpa %s2563, 1
    %2565 = vsyncpa [#allocation13], 1
    %s2566 = scalar_lea.sflag [#allocation13], 1
    %2567 = vsyncpa %s2566, 1
    %2568 = vsyncpa [#allocation16], 1
    %2569 = vsyncpa [#allocation19], 1
    %2570 = vsyncpa [#allocation22], 1
    %2571 = vsyncpa [#allocation25], 1
    %2572 = vsyncpa [#allocation28], 1
    %2573 = vsyncpa [#allocation31], 1
    %2574 = vsyncpa [#allocation8], 1
    %s2575 = scalar_lea.sflag [#allocation8], 1
    %2576 = vsyncpa %s2575, 1

</llo_original>
